<compile_context>
chip_gen: v6e
topology: v6e:2x2x1
jax: 0.10.0
libtpu: 0.0.40
codegen_flags: <defaults>
</compile_context>

<pallas_src>
import functools

import jax
import jax.numpy as jnp
from jax import lax
from jax.experimental import pallas as pl
from jax.experimental.pallas import tpu as pltpu

_LN_EPS = 1e-6
_LANE = 128


def _round_up(x, m):
    return (x + m - 1) // m * m


def _down_ln_kernel(x_ref, w1_ref, g1_ref, b1_ref, w2_ref, g2_ref, b2_ref,
                    o_ref, hpad_ref, *, cmid, cout, mm_dtype):
    """One batch element per grid step.

    x_ref   : (Hp, Wp, Cin_p)      pooled NHWC input, channels padded to 128
    w1_ref  : (9, Cin_p, Cmid_p)   per-tap conv1 weights, tap = kh*3 + kw
    g1/b1   : (1, Cmid_p)          LayerNorm1 gamma/beta (zero padded)
    w2_ref  : (9, Cmid_p, Cout_p)  per-tap conv2 weights
    g2/b2   : (1, Cout_p)          LayerNorm2 gamma/beta (zero padded)
    o_ref   : (Hp*Wp, Cout_p)      lane-dense output block
    hpad_ref: (Hp+2, Wp+2, Cpad)   shared halo scratch (conv1 and conv2 input)
    """
    Hp, Wp, cin_p = x_ref.shape
    cmid_p = w1_ref.shape[2]
    cout_p = w2_ref.shape[2]
    cpad = hpad_ref.shape[2]
    nrows = Hp * Wp

    # Zero only the four 1-px halo border strips (interior is fully overwritten
    # below).  Full-lane stores; redone every step so each megacore-sharded
    # grid slice sees a clean halo in its own scratch.
    zrow = jnp.zeros((1, Wp + 2, cpad), jnp.float32)
    zcol = jnp.zeros((Hp + 2, 1, cpad), jnp.float32)
    hpad_ref[0:1, :, :] = zrow
    hpad_ref[Hp + 1:Hp + 2, :, :] = zrow
    hpad_ref[:, 0:1, :] = zcol
    hpad_ref[:, Wp + 1:Wp + 2, :] = zcol

    def conv3x3(w_ref, c_in_p, c_out_p):
        # 3x3 conv, pad 1, no bias: 9 tap-accumulating MXU matmuls (K=c_in_p),
        # windows read straight from the halo scratch (no im2col buffer).
        acc = jnp.zeros((nrows, c_out_p), jnp.float32)
        for kh in range(3):
            for kw in range(3):
                win = hpad_ref[kh:kh + Hp, kw:kw + Wp, :c_in_p]
                win = win.reshape(nrows, c_in_p).astype(mm_dtype)
                acc = acc + jnp.dot(win, w_ref[kh * 3 + kw],
                                    preferred_element_type=jnp.float32)
        return acc

    def ln_relu(z, g_ref, b_ref, n_true):
        # channels_first LayerNorm over the TRUE channel count.  Padded lanes
        # of z are exactly zero (zero weight columns), so plain lane sums give
        # the true-channel sums; one-pass stats + rsqrt on the EUP.
        inv_n = 1.0 / n_true
        s1 = jnp.sum(z, axis=-1, keepdims=True)
        s2 = jnp.sum(z * z, axis=-1, keepdims=True)
        mean = s1 * inv_n
        var = jnp.maximum(s2 * inv_n - mean * mean, 0.0)
        zn = (z - mean) * lax.rsqrt(var + _LN_EPS)
        # gamma/beta are zero in the padded lanes -> padded outputs stay 0.
        return jnp.maximum(zn * g_ref[...] + b_ref[...], 0.0)

    # ---- conv1 -> LN -> ReLU ------------------------------------------------
    hpad_ref[1:Hp + 1, 1:Wp + 1, :cin_p] = x_ref[...]
    h = ln_relu(conv3x3(w1_ref, cin_p, cmid_p), g1_ref, b1_ref, cmid)

    # ---- conv2 -> LN -> ReLU (reuse halo scratch; borders are still zero) ---
    hpad_ref[1:Hp + 1, 1:Wp + 1, :cmid_p] = h.reshape(Hp, Wp, cmid_p)
    out = ln_relu(conv3x3(w2_ref, cmid_p, cout_p), g2_ref, b2_ref, cout)
    o_ref[...] = out.astype(o_ref.dtype)


@functools.partial(jax.jit, static_argnames=("down", "use_bf16_matmul"))
def down_ln(x_nchw, w1, g1, b1, w2, g2, b2, down=2, use_bf16_matmul=False):
    """Down_ln forward: MaxPool2d(down) -> DoubleConv_ln.

    x_nchw: (N, Cin, H, W) float32, w*: OIHW conv weights, g*/b*: LN params.
    Returns (N, Cout, H//down, W//down).
    """
    N, Cin, H, W = x_nchw.shape
    Cmid = w1.shape[0]
    Cout = w2.shape[0]
    Hp, Wp = H // down, W // down

    Cin_p = _round_up(Cin, _LANE)
    Cmid_p = _round_up(Cmid, _LANE)
    Cout_p = _round_up(Cout, _LANE)
    Cpad = max(Cin_p, Cmid_p)
    mm_dtype = jnp.bfloat16 if use_bf16_matmul else jnp.float32

    # MaxPool2d(down) (floor mode) + NCHW->NHWC + channel zero-pad to a lane
    # multiple: one fused XLA pass over the pooled (down^2 smaller) tensor.
    pooled = jnp.max(
        x_nchw[:, :, :Hp * down, :Wp * down]
        .reshape(N, Cin, Hp, down, Wp, down), axis=(3, 5))
    x_nhwc = jnp.transpose(pooled, (0, 2, 3, 1)).astype(jnp.float32)
    x_nhwc = jnp.pad(x_nhwc, ((0, 0), (0, 0), (0, 0), (0, Cin_p - Cin)))

    # OIHW -> (tap=kh*3+kw, Cin, Cout), zero-padded to lane multiples (matches
    # the in-kernel tap ordering and matmul operand layout).
    w1_t = jnp.transpose(w1, (2, 3, 1, 0)).reshape(9, Cin, Cmid).astype(jnp.float32)
    w1_t = jnp.pad(w1_t, ((0, 0), (0, Cin_p - Cin), (0, Cmid_p - Cmid))).astype(mm_dtype)
    w2_t = jnp.transpose(w2, (2, 3, 1, 0)).reshape(9, Cmid, Cout).astype(jnp.float32)
    w2_t = jnp.pad(w2_t, ((0, 0), (0, Cmid_p - Cmid), (0, Cout_p - Cout))).astype(mm_dtype)

    g1p = jnp.pad(g1.astype(jnp.float32).reshape(1, Cmid), ((0, 0), (0, Cmid_p - Cmid)))
    b1p = jnp.pad(b1.astype(jnp.float32).reshape(1, Cmid), ((0, 0), (0, Cmid_p - Cmid)))
    g2p = jnp.pad(g2.astype(jnp.float32).reshape(1, Cout), ((0, 0), (0, Cout_p - Cout)))
    b2p = jnp.pad(b2.astype(jnp.float32).reshape(1, Cout), ((0, 0), (0, Cout_p - Cout)))

    kernel = functools.partial(_down_ln_kernel, cmid=Cmid, cout=Cout,
                               mm_dtype=mm_dtype)

    flops = 2 * N * Hp * Wp * 9 * (Cin_p * Cmid_p + Cmid_p * Cout_p)
    bytes_accessed = (
        x_nhwc.size * x_nhwc.dtype.itemsize
        + w1_t.size * w1_t.dtype.itemsize + w2_t.size * w2_t.dtype.itemsize
        + 4 * (g1p.size + b1p.size + g2p.size + b2p.size)
        + 4 * N * Hp * Wp * Cout_p)

    out3d = pl.pallas_call(
        kernel,
        out_shape=jax.ShapeDtypeStruct((N, Hp * Wp, Cout_p), jnp.float32),
        grid_spec=pltpu.PrefetchScalarGridSpec(
            num_scalar_prefetch=0,
            grid=(N,),
            in_specs=[
                pl.BlockSpec((None, Hp, Wp, Cin_p), lambda n: (n, 0, 0, 0)),
                pl.BlockSpec((9, Cin_p, Cmid_p), lambda n: (0, 0, 0)),
                pl.BlockSpec((1, Cmid_p), lambda n: (0, 0)),
                pl.BlockSpec((1, Cmid_p), lambda n: (0, 0)),
                pl.BlockSpec((9, Cmid_p, Cout_p), lambda n: (0, 0, 0)),
                pl.BlockSpec((1, Cout_p), lambda n: (0, 0)),
                pl.BlockSpec((1, Cout_p), lambda n: (0, 0)),
            ],
            out_specs=pl.BlockSpec((None, Hp * Wp, Cout_p), lambda n: (n, 0, 0)),
            scratch_shapes=[pltpu.VMEM((Hp + 2, Wp + 2, Cpad), jnp.float32)],
        ),
        compiler_params=pltpu.CompilerParams(
            dimension_semantics=("parallel",),
            vmem_limit_bytes=32 * 1024 * 1024,
        ),
        cost_estimate=pl.CostEstimate(
            flops=flops,
            transcendentals=2 * N * Hp * Wp,
            bytes_accessed=bytes_accessed),
    )(x_nhwc, w1_t, g1p, b1p, w2_t, g2p, b2p)

    out_nhwc = out3d.reshape(N, Hp, Wp, Cout_p)[..., :Cout]
    return jnp.transpose(out_nhwc, (0, 3, 1, 2)).astype(x_nchw.dtype)


def _reference(x, w1, g1, b1, w2, g2, b2, down=2, eps=_LN_EPS):
    """Pure-JAX reference matching PyTorch Down_ln semantics (NCHW / OIHW)."""
    N, Cin, H, W = x.shape
    Hp, Wp = H // down, W // down
    xpool = jnp.max(
        x[:, :, :Hp * down, :Wp * down].reshape(N, Cin, Hp, down, Wp, down),
        axis=(3, 5))

    def block(y, w, g, b):
        dn = lax.conv_dimension_numbers(y.shape, w.shape,
                                        ("NCHW", "OIHW", "NCHW"))
        z = lax.conv_general_dilated(y, w, (1, 1), ((1, 1), (1, 1)),
                                     dimension_numbers=dn,
                                     precision=lax.Precision.HIGHEST)
        u = jnp.mean(z, axis=1, keepdims=True)
        s = jnp.mean((z - u) ** 2, axis=1, keepdims=True)
        z = (z - u) / jnp.sqrt(s + eps)
        z = g[None, :, None, None] * z + b[None, :, None, None]
        return jnp.maximum(z, 0.0)

    return block(block(xpool, w1, g1, b1), w2, g2, b2)


if __name__ == "__main__":
    # Down_ln(in_channels=4, out_channels=8, down=2), input (2, 4, 16, 16).
    N, Cin, H, W = 2, 4, 16, 16
    Cmid = Cout = 8
    down = 2

    key = jax.random.PRNGKey(0)
    kx, kw1, kw2, kg1, kb1, kg2, kb2 = jax.random.split(key, 7)

    x = jax.random.normal(kx, (N, Cin, H, W), jnp.float32)

    # Conv weights (PyTorch OIHW), kaiming-ish scale.
    w1 = jax.random.normal(kw1, (Cmid, Cin, 3, 3), jnp.float32) * (2.0 / (Cin * 9)) ** 0.5
    w2 = jax.random.normal(kw2, (Cout, Cmid, 3, 3), jnp.float32) * (2.0 / (Cmid * 9)) ** 0.5

    # LayerNorm params (default init = ones/zeros; perturb to exercise them).
    g1 = 1.0 + 0.1 * jax.random.normal(kg1, (Cmid,), jnp.float32)
    b1 = 0.1 * jax.random.normal(kb1, (Cmid,), jnp.float32)
    g2 = 1.0 + 0.1 * jax.random.normal(kg2, (Cout,), jnp.float32)
    b2 = 0.1 * jax.random.normal(kb2, (Cout,), jnp.float32)

    out = down_ln(x, w1, g1, b1, w2, g2, b2, down=down)
    out = jax.block_until_ready(out)

    ref = _reference(x, w1, g1, b1, w2, g2, b2, down=down)
    assert out.shape == (N, Cout, H // down, W // down), out.shape
    max_err = float(jnp.max(jnp.abs(out - ref)))
    # f32 MXU path; the 2e-3 bound absorbs the one-pass LN stats + EUP rsqrt
    # vs. the reference's two-pass div-by-sqrt (observed error is far smaller).
    assert jnp.allclose(out, ref, rtol=2e-3, atol=2e-3), max_err

    print("KERNEL_OK")
</pallas_src>

<mosaic_0001>
module attributes {stable_mosaic.version = 11 : i64} {
  func.func @_down_ln_kernel(%arg0: i32, %arg1: memref<1x8x8x128xf32, #tpu.memory_space<vmem>>, %arg2: memref<9x128x128xf32, #tpu.memory_space<vmem>>, %arg3: memref<1x128xf32, #tpu.memory_space<vmem>>, %arg4: memref<1x128xf32, #tpu.memory_space<vmem>>, %arg5: memref<9x128x128xf32, #tpu.memory_space<vmem>>, %arg6: memref<1x128xf32, #tpu.memory_space<vmem>>, %arg7: memref<1x128xf32, #tpu.memory_space<vmem>>, %arg8: memref<1x64x128xf32, #tpu.memory_space<vmem>>, %arg9: memref<10x10x128xf32, #tpu.memory_space<vmem>>) attributes {dimension_semantics = [#tpu.dimension_semantics<parallel>], iteration_bounds = array<i64: 2>, scalar_prefetch = 0 : i64, scratch_operands = 1 : i64, tpu.core_type = #tpu.core_type<tc>, window_params = [{transform_indices = @transform_0, window_bounds = array<i64: 1, 8, 8, 128>}, {pipeline_mode = #tpu.pipeline_mode<synchronous>, transform_indices = @transform_1, window_bounds = array<i64: 9, 128, 128>}, {pipeline_mode = #tpu.pipeline_mode<synchronous>, transform_indices = @transform_2, window_bounds = array<i64: 1, 128>}, {pipeline_mode = #tpu.pipeline_mode<synchronous>, transform_indices = @transform_3, window_bounds = array<i64: 1, 128>}, {pipeline_mode = #tpu.pipeline_mode<synchronous>, transform_indices = @transform_4, window_bounds = array<i64: 9, 128, 128>}, {pipeline_mode = #tpu.pipeline_mode<synchronous>, transform_indices = @transform_5, window_bounds = array<i64: 1, 128>}, {pipeline_mode = #tpu.pipeline_mode<synchronous>, transform_indices = @transform_6, window_bounds = array<i64: 1, 128>}, {transform_indices = @transform_7, window_bounds = array<i64: 1, 64, 128>}]} {
    %cst = arith.constant 0.000000e+00 : f32
    %0 = vector.broadcast %cst : f32 to vector<1x10x128xf32>
    %cst_0 = arith.constant 0.000000e+00 : f32
    %1 = vector.broadcast %cst_0 : f32 to vector<10x1x128xf32>
    %c0 = arith.constant 0 : index
    %c0_1 = arith.constant 0 : index
    %c0_2 = arith.constant 0 : index
    %2 = vector.load %arg9[%c0, %c0_1, %c0_2] : memref<10x10x128xf32, #tpu.memory_space<vmem>>, vector<1x10x128xf32>
    tpu.vector_store %arg9[%c0, %c0_1, %c0_2], %0 {strides = array<i32>} : memref<10x10x128xf32, #tpu.memory_space<vmem>>, vector<1x10x128xf32>,
    %c9 = arith.constant 9 : index
    %c0_3 = arith.constant 0 : index
    %c0_4 = arith.constant 0 : index
    %3 = vector.load %arg9[%c9, %c0_3, %c0_4] : memref<10x10x128xf32, #tpu.memory_space<vmem>>, vector<1x10x128xf32>
    tpu.vector_store %arg9[%c9, %c0_3, %c0_4], %0 {strides = array<i32>} : memref<10x10x128xf32, #tpu.memory_space<vmem>>, vector<1x10x128xf32>,
    %c0_5 = arith.constant 0 : index
    %c0_6 = arith.constant 0 : index
    %c0_7 = arith.constant 0 : index
    %4 = vector.load %arg9[%c0_5, %c0_6, %c0_7] : memref<10x10x128xf32, #tpu.memory_space<vmem>>, vector<10x1x128xf32>
    tpu.vector_store %arg9[%c0_5, %c0_6, %c0_7], %1 {strides = array<i32>} : memref<10x10x128xf32, #tpu.memory_space<vmem>>, vector<10x1x128xf32>,
    %c0_8 = arith.constant 0 : index
    %c9_9 = arith.constant 9 : index
    %c0_10 = arith.constant 0 : index
    %5 = vector.load %arg9[%c0_8, %c9_9, %c0_10] : memref<10x10x128xf32, #tpu.memory_space<vmem>>, vector<10x1x128xf32>
    tpu.vector_store %arg9[%c0_8, %c9_9, %c0_10], %1 {strides = array<i32>} : memref<10x10x128xf32, #tpu.memory_space<vmem>>, vector<10x1x128xf32>,
    %c0_11 = arith.constant 0 : index
    %c0_12 = arith.constant 0 : index
    %c0_13 = arith.constant 0 : index
    %c0_14 = arith.constant 0 : index
    %6 = vector.load %arg1[%c0_11, %c0_12, %c0_13, %c0_14] : memref<1x8x8x128xf32, #tpu.memory_space<vmem>>, vector<1x8x8x128xf32>
    %7 = vector.shape_cast %6 : vector<1x8x8x128xf32> to vector<8x8x128xf32>
    %c1 = arith.constant 1 : index
    %c1_15 = arith.constant 1 : index
    %c0_16 = arith.constant 0 : index
    %8 = vector.load %arg9[%c1, %c1_15, %c0_16] : memref<10x10x128xf32, #tpu.memory_space<vmem>>, vector<8x8x128xf32>
    tpu.vector_store %arg9[%c1, %c1_15, %c0_16], %7 {strides = array<i32>} : memref<10x10x128xf32, #tpu.memory_space<vmem>>, vector<8x8x128xf32>,
    %cst_17 = arith.constant 0.000000e+00 : f32
    %9 = vector.broadcast %cst_17 : f32 to vector<64x128xf32>
    %c0_18 = arith.constant 0 : index
    %c0_19 = arith.constant 0 : index
    %c0_20 = arith.constant 0 : index
    %10 = vector.load %arg9[%c0_18, %c0_19, %c0_20] : memref<10x10x128xf32, #tpu.memory_space<vmem>>, vector<8x8x128xf32>
    %11 = vector.shape_cast %10 : vector<8x8x128xf32> to vector<64x128xf32>
    %c0_21 = arith.constant 0 : index
    %c0_22 = arith.constant 0 : index
    %c0_23 = arith.constant 0 : index
    %12 = vector.load %arg2[%c0_21, %c0_22, %c0_23] : memref<9x128x128xf32, #tpu.memory_space<vmem>>, vector<1x128x128xf32>
    %13 = vector.shape_cast %12 : vector<1x128x128xf32> to vector<128x128xf32>
    %cst_24 = arith.constant dense<0.000000e+00> : vector<64x128xf32>
    %14 = tpu.matmul %11, %13, %cst_24 {dimension_numbers = #tpu.dot_dimension_numbers<[1], [0], [0], [1], [0, 0, 1, 1], [], []>} : vector<64x128xf32>, vector<128x128xf32>, vector<64x128xf32> -> vector<64x128xf32>
    %15 = arith.addf %9, %14 : vector<64x128xf32>
    %c0_25 = arith.constant 0 : index
    %c1_26 = arith.constant 1 : index
    %c0_27 = arith.constant 0 : index
    %16 = vector.load %arg9[%c0_25, %c1_26, %c0_27] : memref<10x10x128xf32, #tpu.memory_space<vmem>>, vector<8x8x128xf32>
    %17 = vector.shape_cast %16 : vector<8x8x128xf32> to vector<64x128xf32>
    %c1_28 = arith.constant 1 : index
    %c0_29 = arith.constant 0 : index
    %c0_30 = arith.constant 0 : index
    %18 = vector.load %arg2[%c1_28, %c0_29, %c0_30] : memref<9x128x128xf32, #tpu.memory_space<vmem>>, vector<1x128x128xf32>
    %19 = vector.shape_cast %18 : vector<1x128x128xf32> to vector<128x128xf32>
    %cst_31 = arith.constant dense<0.000000e+00> : vector<64x128xf32>
    %20 = tpu.matmul %17, %19, %cst_31 {dimension_numbers = #tpu.dot_dimension_numbers<[1], [0], [0], [1], [0, 0, 1, 1], [], []>} : vector<64x128xf32>, vector<128x128xf32>, vector<64x128xf32> -> vector<64x128xf32>
    %21 = arith.addf %15, %20 : vector<64x128xf32>
    %c0_32 = arith.constant 0 : index
    %c2 = arith.constant 2 : index
    %c0_33 = arith.constant 0 : index
    %22 = vector.load %arg9[%c0_32, %c2, %c0_33] : memref<10x10x128xf32, #tpu.memory_space<vmem>>, vector<8x8x128xf32>
    %23 = vector.shape_cast %22 : vector<8x8x128xf32> to vector<64x128xf32>
    %c2_34 = arith.constant 2 : index
    %c0_35 = arith.constant 0 : index
    %c0_36 = arith.constant 0 : index
    %24 = vector.load %arg2[%c2_34, %c0_35, %c0_36] : memref<9x128x128xf32, #tpu.memory_space<vmem>>, vector<1x128x128xf32>
    %25 = vector.shape_cast %24 : vector<1x128x128xf32> to vector<128x128xf32>
    %cst_37 = arith.constant dense<0.000000e+00> : vector<64x128xf32>
    %26 = tpu.matmul %23, %25, %cst_37 {dimension_numbers = #tpu.dot_dimension_numbers<[1], [0], [0], [1], [0, 0, 1, 1], [], []>} : vector<64x128xf32>, vector<128x128xf32>, vector<64x128xf32> -> vector<64x128xf32>
    %27 = arith.addf %21, %26 : vector<64x128xf32>
    %c1_38 = arith.constant 1 : index
    %c0_39 = arith.constant 0 : index
    %c0_40 = arith.constant 0 : index
    %28 = vector.load %arg9[%c1_38, %c0_39, %c0_40] : memref<10x10x128xf32, #tpu.memory_space<vmem>>, vector<8x8x128xf32>
    %29 = vector.shape_cast %28 : vector<8x8x128xf32> to vector<64x128xf32>
    %c3 = arith.constant 3 : index
    %c0_41 = arith.constant 0 : index
    %c0_42 = arith.constant 0 : index
    %30 = vector.load %arg2[%c3, %c0_41, %c0_42] : memref<9x128x128xf32, #tpu.memory_space<vmem>>, vector<1x128x128xf32>
    %31 = vector.shape_cast %30 : vector<1x128x128xf32> to vector<128x128xf32>
    %cst_43 = arith.constant dense<0.000000e+00> : vector<64x128xf32>
    %32 = tpu.matmul %29, %31, %cst_43 {dimension_numbers = #tpu.dot_dimension_numbers<[1], [0], [0], [1], [0, 0, 1, 1], [], []>} : vector<64x128xf32>, vector<128x128xf32>, vector<64x128xf32> -> vector<64x128xf32>
    %33 = arith.addf %27, %32 : vector<64x128xf32>
    %c1_44 = arith.constant 1 : index
    %c1_45 = arith.constant 1 : index
    %c0_46 = arith.constant 0 : index
    %34 = vector.load %arg9[%c1_44, %c1_45, %c0_46] : memref<10x10x128xf32, #tpu.memory_space<vmem>>, vector<8x8x128xf32>
    %35 = vector.shape_cast %34 : vector<8x8x128xf32> to vector<64x128xf32>
    %c4 = arith.constant 4 : index
    %c0_47 = arith.constant 0 : index
    %c0_48 = arith.constant 0 : index
    %36 = vector.load %arg2[%c4, %c0_47, %c0_48] : memref<9x128x128xf32, #tpu.memory_space<vmem>>, vector<1x128x128xf32>
    %37 = vector.shape_cast %36 : vector<1x128x128xf32> to vector<128x128xf32>
    %cst_49 = arith.constant dense<0.000000e+00> : vector<64x128xf32>
    %38 = tpu.matmul %35, %37, %cst_49 {dimension_numbers = #tpu.dot_dimension_numbers<[1], [0], [0], [1], [0, 0, 1, 1], [], []>} : vector<64x128xf32>, vector<128x128xf32>, vector<64x128xf32> -> vector<64x128xf32>
    %39 = arith.addf %33, %38 : vector<64x128xf32>
    %c1_50 = arith.constant 1 : index
    %c2_51 = arith.constant 2 : index
    %c0_52 = arith.constant 0 : index
    %40 = vector.load %arg9[%c1_50, %c2_51, %c0_52] : memref<10x10x128xf32, #tpu.memory_space<vmem>>, vector<8x8x128xf32>
    %41 = vector.shape_cast %40 : vector<8x8x128xf32> to vector<64x128xf32>
    %c5 = arith.constant 5 : index
    %c0_53 = arith.constant 0 : index
    %c0_54 = arith.constant 0 : index
    %42 = vector.load %arg2[%c5, %c0_53, %c0_54] : memref<9x128x128xf32, #tpu.memory_space<vmem>>, vector<1x128x128xf32>
    %43 = vector.shape_cast %42 : vector<1x128x128xf32> to vector<128x128xf32>
    %cst_55 = arith.constant dense<0.000000e+00> : vector<64x128xf32>
    %44 = tpu.matmul %41, %43, %cst_55 {dimension_numbers = #tpu.dot_dimension_numbers<[1], [0], [0], [1], [0, 0, 1, 1], [], []>} : vector<64x128xf32>, vector<128x128xf32>, vector<64x128xf32> -> vector<64x128xf32>
    %45 = arith.addf %39, %44 : vector<64x128xf32>
    %c2_56 = arith.constant 2 : index
    %c0_57 = arith.constant 0 : index
    %c0_58 = arith.constant 0 : index
    %46 = vector.load %arg9[%c2_56, %c0_57, %c0_58] : memref<10x10x128xf32, #tpu.memory_space<vmem>>, vector<8x8x128xf32>
    %47 = vector.shape_cast %46 : vector<8x8x128xf32> to vector<64x128xf32>
    %c6 = arith.constant 6 : index
    %c0_59 = arith.constant 0 : index
    %c0_60 = arith.constant 0 : index
    %48 = vector.load %arg2[%c6, %c0_59, %c0_60] : memref<9x128x128xf32, #tpu.memory_space<vmem>>, vector<1x128x128xf32>
    %49 = vector.shape_cast %48 : vector<1x128x128xf32> to vector<128x128xf32>
    %cst_61 = arith.constant dense<0.000000e+00> : vector<64x128xf32>
    %50 = tpu.matmul %47, %49, %cst_61 {dimension_numbers = #tpu.dot_dimension_numbers<[1], [0], [0], [1], [0, 0, 1, 1], [], []>} : vector<64x128xf32>, vector<128x128xf32>, vector<64x128xf32> -> vector<64x128xf32>
    %51 = arith.addf %45, %50 : vector<64x128xf32>
    %c2_62 = arith.constant 2 : index
    %c1_63 = arith.constant 1 : index
    %c0_64 = arith.constant 0 : index
    %52 = vector.load %arg9[%c2_62, %c1_63, %c0_64] : memref<10x10x128xf32, #tpu.memory_space<vmem>>, vector<8x8x128xf32>
    %53 = vector.shape_cast %52 : vector<8x8x128xf32> to vector<64x128xf32>
    %c7 = arith.constant 7 : index
    %c0_65 = arith.constant 0 : index
    %c0_66 = arith.constant 0 : index
    %54 = vector.load %arg2[%c7, %c0_65, %c0_66] : memref<9x128x128xf32, #tpu.memory_space<vmem>>, vector<1x128x128xf32>
    %55 = vector.shape_cast %54 : vector<1x128x128xf32> to vector<128x128xf32>
    %cst_67 = arith.constant dense<0.000000e+00> : vector<64x128xf32>
    %56 = tpu.matmul %53, %55, %cst_67 {dimension_numbers = #tpu.dot_dimension_numbers<[1], [0], [0], [1], [0, 0, 1, 1], [], []>} : vector<64x128xf32>, vector<128x128xf32>, vector<64x128xf32> -> vector<64x128xf32>
    %57 = arith.addf %51, %56 : vector<64x128xf32>
    %c2_68 = arith.constant 2 : index
    %c2_69 = arith.constant 2 : index
    %c0_70 = arith.constant 0 : index
    %58 = vector.load %arg9[%c2_68, %c2_69, %c0_70] : memref<10x10x128xf32, #tpu.memory_space<vmem>>, vector<8x8x128xf32>
    %59 = vector.shape_cast %58 : vector<8x8x128xf32> to vector<64x128xf32>
    %c8 = arith.constant 8 : index
    %c0_71 = arith.constant 0 : index
    %c0_72 = arith.constant 0 : index
    %60 = vector.load %arg2[%c8, %c0_71, %c0_72] : memref<9x128x128xf32, #tpu.memory_space<vmem>>, vector<1x128x128xf32>
    %61 = vector.shape_cast %60 : vector<1x128x128xf32> to vector<128x128xf32>
    %cst_73 = arith.constant dense<0.000000e+00> : vector<64x128xf32>
    %62 = tpu.matmul %59, %61, %cst_73 {dimension_numbers = #tpu.dot_dimension_numbers<[1], [0], [0], [1], [0, 0, 1, 1], [], []>} : vector<64x128xf32>, vector<128x128xf32>, vector<64x128xf32> -> vector<64x128xf32>
    %63 = arith.addf %57, %62 : vector<64x128xf32>
    %cst_74 = arith.constant dense<0.000000e+00> : vector<64xf32>
    %64 = vector.multi_reduction <add>, %63, %cst_74 [1] : vector<64x128xf32> to vector<64xf32>
    %65 = vector.shape_cast %64 : vector<64xf32> to vector<64x1xf32>
    %66 = arith.mulf %63, %63 : vector<64x128xf32>
    %cst_75 = arith.constant dense<0.000000e+00> : vector<64xf32>
    %67 = vector.multi_reduction <add>, %66, %cst_75 [1] : vector<64x128xf32> to vector<64xf32>
    %68 = vector.shape_cast %67 : vector<64xf32> to vector<64x1xf32>
    %cst_76 = arith.constant 1.250000e-01 : f32
    %69 = vector.broadcast %cst_76 : f32 to vector<64x1xf32>
    %70 = arith.mulf %65, %69 : vector<64x1xf32>
    %cst_77 = arith.constant 1.250000e-01 : f32
    %71 = vector.broadcast %cst_77 : f32 to vector<64x1xf32>
    %72 = arith.mulf %68, %71 : vector<64x1xf32>
    %73 = arith.mulf %70, %70 : vector<64x1xf32>
    %74 = arith.subf %72, %73 : vector<64x1xf32>
    %cst_78 = arith.constant 0.000000e+00 : f32
    %75 = vector.broadcast %cst_78 : f32 to vector<64x1xf32>
    %76 = arith.maximumf %74, %75 : vector<64x1xf32>
    %77 = vector.broadcast %70 : vector<64x1xf32> to vector<64x128xf32>
    %78 = arith.subf %63, %77 : vector<64x128xf32>
    %cst_79 = arith.constant 9.99999997E-7 : f32
    %79 = vector.broadcast %cst_79 : f32 to vector<64x1xf32>
    %80 = arith.addf %76, %79 : vector<64x1xf32>
    %81 = math.rsqrt %80 : vector<64x1xf32>
    %82 = vector.broadcast %81 : vector<64x1xf32> to vector<64x128xf32>
    %83 = arith.mulf %78, %82 : vector<64x128xf32>
    %c0_80 = arith.constant 0 : index
    %c0_81 = arith.constant 0 : index
    %84 = vector.load %arg3[%c0_80, %c0_81] : memref<1x128xf32, #tpu.memory_space<vmem>>, vector<1x128xf32>
    %85 = vector.broadcast %84 : vector<1x128xf32> to vector<64x128xf32>
    %86 = arith.mulf %83, %85 : vector<64x128xf32>
    %c0_82 = arith.constant 0 : index
    %c0_83 = arith.constant 0 : index
    %87 = vector.load %arg4[%c0_82, %c0_83] : memref<1x128xf32, #tpu.memory_space<vmem>>, vector<1x128xf32>
    %88 = vector.broadcast %87 : vector<1x128xf32> to vector<64x128xf32>
    %89 = arith.addf %86, %88 : vector<64x128xf32>
    %cst_84 = arith.constant 0.000000e+00 : f32
    %90 = vector.broadcast %cst_84 : f32 to vector<64x128xf32>
    %91 = arith.maximumf %89, %90 : vector<64x128xf32>
    %92 = vector.shape_cast %91 : vector<64x128xf32> to vector<8x8x128xf32>
    %c1_85 = arith.constant 1 : index
    %c1_86 = arith.constant 1 : index
    %c0_87 = arith.constant 0 : index
    %93 = vector.load %arg9[%c1_85, %c1_86, %c0_87] : memref<10x10x128xf32, #tpu.memory_space<vmem>>, vector<8x8x128xf32>
    tpu.vector_store %arg9[%c1_85, %c1_86, %c0_87], %92 {strides = array<i32>} : memref<10x10x128xf32, #tpu.memory_space<vmem>>, vector<8x8x128xf32>,
    %cst_88 = arith.constant 0.000000e+00 : f32
    %94 = vector.broadcast %cst_88 : f32 to vector<64x128xf32>
    %c0_89 = arith.constant 0 : index
    %c0_90 = arith.constant 0 : index
    %c0_91 = arith.constant 0 : index
    %95 = vector.load %arg9[%c0_89, %c0_90, %c0_91] : memref<10x10x128xf32, #tpu.memory_space<vmem>>, vector<8x8x128xf32>
    %96 = vector.shape_cast %95 : vector<8x8x128xf32> to vector<64x128xf32>
    %c0_92 = arith.constant 0 : index
    %c0_93 = arith.constant 0 : index
    %c0_94 = arith.constant 0 : index
    %97 = vector.load %arg5[%c0_92, %c0_93, %c0_94] : memref<9x128x128xf32, #tpu.memory_space<vmem>>, vector<1x128x128xf32>
    %98 = vector.shape_cast %97 : vector<1x128x128xf32> to vector<128x128xf32>
    %cst_95 = arith.constant dense<0.000000e+00> : vector<64x128xf32>
    %99 = tpu.matmul %96, %98, %cst_95 {dimension_numbers = #tpu.dot_dimension_numbers<[1], [0], [0], [1], [0, 0, 1, 1], [], []>} : vector<64x128xf32>, vector<128x128xf32>, vector<64x128xf32> -> vector<64x128xf32>
    %100 = arith.addf %94, %99 : vector<64x128xf32>
    %c0_96 = arith.constant 0 : index
    %c1_97 = arith.constant 1 : index
    %c0_98 = arith.constant 0 : index
    %101 = vector.load %arg9[%c0_96, %c1_97, %c0_98] : memref<10x10x128xf32, #tpu.memory_space<vmem>>, vector<8x8x128xf32>
    %102 = vector.shape_cast %101 : vector<8x8x128xf32> to vector<64x128xf32>
    %c1_99 = arith.constant 1 : index
    %c0_100 = arith.constant 0 : index
    %c0_101 = arith.constant 0 : index
    %103 = vector.load %arg5[%c1_99, %c0_100, %c0_101] : memref<9x128x128xf32, #tpu.memory_space<vmem>>, vector<1x128x128xf32>
    %104 = vector.shape_cast %103 : vector<1x128x128xf32> to vector<128x128xf32>
    %cst_102 = arith.constant dense<0.000000e+00> : vector<64x128xf32>
    %105 = tpu.matmul %102, %104, %cst_102 {dimension_numbers = #tpu.dot_dimension_numbers<[1], [0], [0], [1], [0, 0, 1, 1], [], []>} : vector<64x128xf32>, vector<128x128xf32>, vector<64x128xf32> -> vector<64x128xf32>
    %106 = arith.addf %100, %105 : vector<64x128xf32>
    %c0_103 = arith.constant 0 : index
    %c2_104 = arith.constant 2 : index
    %c0_105 = arith.constant 0 : index
    %107 = vector.load %arg9[%c0_103, %c2_104, %c0_105] : memref<10x10x128xf32, #tpu.memory_space<vmem>>, vector<8x8x128xf32>
    %108 = vector.shape_cast %107 : vector<8x8x128xf32> to vector<64x128xf32>
    %c2_106 = arith.constant 2 : index
    %c0_107 = arith.constant 0 : index
    %c0_108 = arith.constant 0 : index
    %109 = vector.load %arg5[%c2_106, %c0_107, %c0_108] : memref<9x128x128xf32, #tpu.memory_space<vmem>>, vector<1x128x128xf32>
    %110 = vector.shape_cast %109 : vector<1x128x128xf32> to vector<128x128xf32>
    %cst_109 = arith.constant dense<0.000000e+00> : vector<64x128xf32>
    %111 = tpu.matmul %108, %110, %cst_109 {dimension_numbers = #tpu.dot_dimension_numbers<[1], [0], [0], [1], [0, 0, 1, 1], [], []>} : vector<64x128xf32>, vector<128x128xf32>, vector<64x128xf32> -> vector<64x128xf32>
    %112 = arith.addf %106, %111 : vector<64x128xf32>
    %c1_110 = arith.constant 1 : index
    %c0_111 = arith.constant 0 : index
    %c0_112 = arith.constant 0 : index
    %113 = vector.load %arg9[%c1_110, %c0_111, %c0_112] : memref<10x10x128xf32, #tpu.memory_space<vmem>>, vector<8x8x128xf32>
    %114 = vector.shape_cast %113 : vector<8x8x128xf32> to vector<64x128xf32>
    %c3_113 = arith.constant 3 : index
    %c0_114 = arith.constant 0 : index
    %c0_115 = arith.constant 0 : index
    %115 = vector.load %arg5[%c3_113, %c0_114, %c0_115] : memref<9x128x128xf32, #tpu.memory_space<vmem>>, vector<1x128x128xf32>
    %116 = vector.shape_cast %115 : vector<1x128x128xf32> to vector<128x128xf32>
    %cst_116 = arith.constant dense<0.000000e+00> : vector<64x128xf32>
    %117 = tpu.matmul %114, %116, %cst_116 {dimension_numbers = #tpu.dot_dimension_numbers<[1], [0], [0], [1], [0, 0, 1, 1], [], []>} : vector<64x128xf32>, vector<128x128xf32>, vector<64x128xf32> -> vector<64x128xf32>
    %118 = arith.addf %112, %117 : vector<64x128xf32>
    %c1_117 = arith.constant 1 : index
    %c1_118 = arith.constant 1 : index
    %c0_119 = arith.constant 0 : index
    %119 = vector.load %arg9[%c1_117, %c1_118, %c0_119] : memref<10x10x128xf32, #tpu.memory_space<vmem>>, vector<8x8x128xf32>
    %120 = vector.shape_cast %119 : vector<8x8x128xf32> to vector<64x128xf32>
    %c4_120 = arith.constant 4 : index
    %c0_121 = arith.constant 0 : index
    %c0_122 = arith.constant 0 : index
    %121 = vector.load %arg5[%c4_120, %c0_121, %c0_122] : memref<9x128x128xf32, #tpu.memory_space<vmem>>, vector<1x128x128xf32>
    %122 = vector.shape_cast %121 : vector<1x128x128xf32> to vector<128x128xf32>
    %cst_123 = arith.constant dense<0.000000e+00> : vector<64x128xf32>
    %123 = tpu.matmul %120, %122, %cst_123 {dimension_numbers = #tpu.dot_dimension_numbers<[1], [0], [0], [1], [0, 0, 1, 1], [], []>} : vector<64x128xf32>, vector<128x128xf32>, vector<64x128xf32> -> vector<64x128xf32>
    %124 = arith.addf %118, %123 : vector<64x128xf32>
    %c1_124 = arith.constant 1 : index
    %c2_125 = arith.constant 2 : index
    %c0_126 = arith.constant 0 : index
    %125 = vector.load %arg9[%c1_124, %c2_125, %c0_126] : memref<10x10x128xf32, #tpu.memory_space<vmem>>, vector<8x8x128xf32>
    %126 = vector.shape_cast %125 : vector<8x8x128xf32> to vector<64x128xf32>
    %c5_127 = arith.constant 5 : index
    %c0_128 = arith.constant 0 : index
    %c0_129 = arith.constant 0 : index
    %127 = vector.load %arg5[%c5_127, %c0_128, %c0_129] : memref<9x128x128xf32, #tpu.memory_space<vmem>>, vector<1x128x128xf32>
    %128 = vector.shape_cast %127 : vector<1x128x128xf32> to vector<128x128xf32>
    %cst_130 = arith.constant dense<0.000000e+00> : vector<64x128xf32>
    %129 = tpu.matmul %126, %128, %cst_130 {dimension_numbers = #tpu.dot_dimension_numbers<[1], [0], [0], [1], [0, 0, 1, 1], [], []>} : vector<64x128xf32>, vector<128x128xf32>, vector<64x128xf32> -> vector<64x128xf32>
    %130 = arith.addf %124, %129 : vector<64x128xf32>
    %c2_131 = arith.constant 2 : index
    %c0_132 = arith.constant 0 : index
    %c0_133 = arith.constant 0 : index
    %131 = vector.load %arg9[%c2_131, %c0_132, %c0_133] : memref<10x10x128xf32, #tpu.memory_space<vmem>>, vector<8x8x128xf32>
    %132 = vector.shape_cast %131 : vector<8x8x128xf32> to vector<64x128xf32>
    %c6_134 = arith.constant 6 : index
    %c0_135 = arith.constant 0 : index
    %c0_136 = arith.constant 0 : index
    %133 = vector.load %arg5[%c6_134, %c0_135, %c0_136] : memref<9x128x128xf32, #tpu.memory_space<vmem>>, vector<1x128x128xf32>
    %134 = vector.shape_cast %133 : vector<1x128x128xf32> to vector<128x128xf32>
    %cst_137 = arith.constant dense<0.000000e+00> : vector<64x128xf32>
    %135 = tpu.matmul %132, %134, %cst_137 {dimension_numbers = #tpu.dot_dimension_numbers<[1], [0], [0], [1], [0, 0, 1, 1], [], []>} : vector<64x128xf32>, vector<128x128xf32>, vector<64x128xf32> -> vector<64x128xf32>
    %136 = arith.addf %130, %135 : vector<64x128xf32>
    %c2_138 = arith.constant 2 : index
    %c1_139 = arith.constant 1 : index
    %c0_140 = arith.constant 0 : index
    %137 = vector.load %arg9[%c2_138, %c1_139, %c0_140] : memref<10x10x128xf32, #tpu.memory_space<vmem>>, vector<8x8x128xf32>
    %138 = vector.shape_cast %137 : vector<8x8x128xf32> to vector<64x128xf32>
    %c7_141 = arith.constant 7 : index
    %c0_142 = arith.constant 0 : index
    %c0_143 = arith.constant 0 : index
    %139 = vector.load %arg5[%c7_141, %c0_142, %c0_143] : memref<9x128x128xf32, #tpu.memory_space<vmem>>, vector<1x128x128xf32>
    %140 = vector.shape_cast %139 : vector<1x128x128xf32> to vector<128x128xf32>
    %cst_144 = arith.constant dense<0.000000e+00> : vector<64x128xf32>
    %141 = tpu.matmul %138, %140, %cst_144 {dimension_numbers = #tpu.dot_dimension_numbers<[1], [0], [0], [1], [0, 0, 1, 1], [], []>} : vector<64x128xf32>, vector<128x128xf32>, vector<64x128xf32> -> vector<64x128xf32>
    %142 = arith.addf %136, %141 : vector<64x128xf32>
    %c2_145 = arith.constant 2 : index
    %c2_146 = arith.constant 2 : index
    %c0_147 = arith.constant 0 : index
    %143 = vector.load %arg9[%c2_145, %c2_146, %c0_147] : memref<10x10x128xf32, #tpu.memory_space<vmem>>, vector<8x8x128xf32>
    %144 = vector.shape_cast %143 : vector<8x8x128xf32> to vector<64x128xf32>
    %c8_148 = arith.constant 8 : index
    %c0_149 = arith.constant 0 : index
    %c0_150 = arith.constant 0 : index
    %145 = vector.load %arg5[%c8_148, %c0_149, %c0_150] : memref<9x128x128xf32, #tpu.memory_space<vmem>>, vector<1x128x128xf32>
    %146 = vector.shape_cast %145 : vector<1x128x128xf32> to vector<128x128xf32>
    %cst_151 = arith.constant dense<0.000000e+00> : vector<64x128xf32>
    %147 = tpu.matmul %144, %146, %cst_151 {dimension_numbers = #tpu.dot_dimension_numbers<[1], [0], [0], [1], [0, 0, 1, 1], [], []>} : vector<64x128xf32>, vector<128x128xf32>, vector<64x128xf32> -> vector<64x128xf32>
    %148 = arith.addf %142, %147 : vector<64x128xf32>
    %cst_152 = arith.constant dense<0.000000e+00> : vector<64xf32>
    %149 = vector.multi_reduction <add>, %148, %cst_152 [1] : vector<64x128xf32> to vector<64xf32>
    %150 = vector.shape_cast %149 : vector<64xf32> to vector<64x1xf32>
    %151 = arith.mulf %148, %148 : vector<64x128xf32>
    %cst_153 = arith.constant dense<0.000000e+00> : vector<64xf32>
    %152 = vector.multi_reduction <add>, %151, %cst_153 [1] : vector<64x128xf32> to vector<64xf32>
    %153 = vector.shape_cast %152 : vector<64xf32> to vector<64x1xf32>
    %cst_154 = arith.constant 1.250000e-01 : f32
    %154 = vector.broadcast %cst_154 : f32 to vector<64x1xf32>
    %155 = arith.mulf %150, %154 : vector<64x1xf32>
    %cst_155 = arith.constant 1.250000e-01 : f32
    %156 = vector.broadcast %cst_155 : f32 to vector<64x1xf32>
    %157 = arith.mulf %153, %156 : vector<64x1xf32>
    %158 = arith.mulf %155, %155 : vector<64x1xf32>
    %159 = arith.subf %157, %158 : vector<64x1xf32>
    %cst_156 = arith.constant 0.000000e+00 : f32
    %160 = vector.broadcast %cst_156 : f32 to vector<64x1xf32>
    %161 = arith.maximumf %159, %160 : vector<64x1xf32>
    %162 = vector.broadcast %155 : vector<64x1xf32> to vector<64x128xf32>
    %163 = arith.subf %148, %162 : vector<64x128xf32>
    %cst_157 = arith.constant 9.99999997E-7 : f32
    %164 = vector.broadcast %cst_157 : f32 to vector<64x1xf32>
    %165 = arith.addf %161, %164 : vector<64x1xf32>
    %166 = math.rsqrt %165 : vector<64x1xf32>
    %167 = vector.broadcast %166 : vector<64x1xf32> to vector<64x128xf32>
    %168 = arith.mulf %163, %167 : vector<64x128xf32>
    %c0_158 = arith.constant 0 : index
    %c0_159 = arith.constant 0 : index
    %169 = vector.load %arg6[%c0_158, %c0_159] : memref<1x128xf32, #tpu.memory_space<vmem>>, vector<1x128xf32>
    %170 = vector.broadcast %169 : vector<1x128xf32> to vector<64x128xf32>
    %171 = arith.mulf %168, %170 : vector<64x128xf32>
    %c0_160 = arith.constant 0 : index
    %c0_161 = arith.constant 0 : index
    %172 = vector.load %arg7[%c0_160, %c0_161] : memref<1x128xf32, #tpu.memory_space<vmem>>, vector<1x128xf32>
    %173 = vector.broadcast %172 : vector<1x128xf32> to vector<64x128xf32>
    %174 = arith.addf %171, %173 : vector<64x128xf32>
    %cst_162 = arith.constant 0.000000e+00 : f32
    %175 = vector.broadcast %cst_162 : f32 to vector<64x128xf32>
    %176 = arith.maximumf %174, %175 : vector<64x128xf32>
    %c0_163 = arith.constant 0 : index
    %c0_164 = arith.constant 0 : index
    %c0_165 = arith.constant 0 : index
    %177 = vector.load %arg8[%c0_163, %c0_164, %c0_165] : memref<1x64x128xf32, #tpu.memory_space<vmem>>, vector<1x64x128xf32>
    %178 = vector.shape_cast %177 : vector<1x64x128xf32> to vector<64x128xf32>
    %179 = vector.shape_cast %176 : vector<64x128xf32> to vector<1x64x128xf32>
    tpu.vector_store %arg8[%c0_163, %c0_164, %c0_165], %179 {strides = array<i32>} : memref<1x64x128xf32, #tpu.memory_space<vmem>>, vector<1x64x128xf32>,
    return
  }
  func.func @transform_0(%arg0: i32) -> (i32, i32, i32, i32) {
    %c0_i32 = arith.constant 0 : i32
    %c0_i32_0 = arith.constant 0 : i32
    %c0_i32_1 = arith.constant 0 : i32
    %c0_i32_2 = arith.constant 0 : i32
    return %arg0, %c0_i32, %c0_i32_0, %c0_i32_1 : i32, i32, i32, i32
  }
  func.func @transform_1(%arg0: i32) -> (i32, i32, i32) {
    %c0_i32 = arith.constant 0 : i32
    %c0_i32_0 = arith.constant 0 : i32
    %c0_i32_1 = arith.constant 0 : i32
    %c0_i32_2 = arith.constant 0 : i32
    return %c0_i32, %c0_i32_0, %c0_i32_1 : i32, i32, i32
  }
  func.func @transform_2(%arg0: i32) -> (i32, i32) {
    %c0_i32 = arith.constant 0 : i32
    %c0_i32_0 = arith.constant 0 : i32
    %c0_i32_1 = arith.constant 0 : i32
    return %c0_i32, %c0_i32_0 : i32, i32
  }
  func.func @transform_3(%arg0: i32) -> (i32, i32) {
    %c0_i32 = arith.constant 0 : i32
    %c0_i32_0 = arith.constant 0 : i32
    %c0_i32_1 = arith.constant 0 : i32
    return %c0_i32, %c0_i32_0 : i32, i32
  }
  func.func @transform_4(%arg0: i32) -> (i32, i32, i32) {
    %c0_i32 = arith.constant 0 : i32
    %c0_i32_0 = arith.constant 0 : i32
    %c0_i32_1 = arith.constant 0 : i32
    %c0_i32_2 = arith.constant 0 : i32
    return %c0_i32, %c0_i32_0, %c0_i32_1 : i32, i32, i32
  }
  func.func @transform_5(%arg0: i32) -> (i32, i32) {
    %c0_i32 = arith.constant 0 : i32
    %c0_i32_0 = arith.constant 0 : i32
    %c0_i32_1 = arith.constant 0 : i32
    return %c0_i32, %c0_i32_0 : i32, i32
  }
  func.func @transform_6(%arg0: i32) -> (i32, i32) {
    %c0_i32 = arith.constant 0 : i32
    %c0_i32_0 = arith.constant 0 : i32
    %c0_i32_1 = arith.constant 0 : i32
    return %c0_i32, %c0_i32_0 : i32, i32
  }
  func.func @transform_7(%arg0: i32) -> (i32, i32, i32) {
    %c0_i32 = arith.constant 0 : i32
    %c0_i32_0 = arith.constant 0 : i32
    %c0_i32_1 = arith.constant 0 : i32
    return %arg0, %c0_i32, %c0_i32_0 : i32, i32, i32
  }
}

</mosaic_0001>

<llo_original>
// kernel: down_ln.1
$region0: #{down_ln.1}
  #allocation0 [shape = 'u32[]', space=smem, size = 0x4, offset = 0x4, fixed_abs, tag = 'smem constant byte address 0x4 - core index']
  #allocation1 [shape = 'u32[144,128]{1,0:T(1,128)}', space=vmem, size = 0x12000, scoped, tag = 'internal scratch']
  #allocation2 [shape = 'f32[10,10,128]{2,1,0:T(8,128)}', space=vmem, size = 0x14000, scoped, tag = 'scratch operand']
  %s0 = inlined_call_operand.vmem [shape: f32[2,8,8,128], index: 0, kind: input, shape index: {}]
  %s1 = inlined_call_operand.vmem [shape: f32[9,128,128], index: 1, kind: input, shape index: {}]
  %s2 = inlined_call_operand.vmem [shape: f32[1,128], index: 2, kind: input, shape index: {}]
  %s3 = inlined_call_operand.vmem [shape: f32[1,128], index: 3, kind: input, shape index: {}]
  %s4 = inlined_call_operand.vmem [shape: f32[9,128,128], index: 4, kind: input, shape index: {}]
  %s5 = inlined_call_operand.vmem [shape: f32[1,128], index: 5, kind: input, shape index: {}]
  %s6 = inlined_call_operand.vmem [shape: f32[1,128], index: 6, kind: input, shape index: {}]
  %s7 = inlined_call_operand.vmem [shape: f32[2,64,128], index: 7, kind: output, shape index: {}]
  %s8 = sld [smem:[#allocation0]]
  $region61: #{down_ln.1} parent=0
    _
  %s10 = ssub.s32 1, %s8
  %s11 = scalar_select 0, %s10, %s8
  loop: start=0, step=1, limit=4
  $region2: #{down_ln.1} parent=0 // loop_pre_header
    _
  $region3: #{down_ln.1} parent=0 // loop_header
    %s13 = sphi 0, %s17
    %p14 = scmp.ge.s32.totalorder %s13, 4
    %s23 = sphi 0, %s25
    %s26 = sphi 0, %s23
    %s27 = sphi 0, %s26
    %s43 = sphi 0, %s27
    %s47 = sphi 0, %s47
    %s49 = sphi 0, %s47
    %s50 = sphi 0, %s49
    %s64 = sphi 0, %s50
    %s68 = sphi 0, %s68
    %s70 = sphi 0, %s68
    %s71 = sphi 0, %s70
    %s85 = sphi 0, %s71
    %s89 = sphi 0, %s89
    %s91 = sphi 0, %s89
    %s92 = sphi 0, %s91
    %s106 = sphi 0, %s92
    %s110 = sphi 0, %s110
    %s112 = sphi 0, %s110
    %s113 = sphi 0, %s112
    %s127 = sphi 0, %s113
    %s131 = sphi 0, %s131
    %s133 = sphi 0, %s131
    %s134 = sphi 0, %s133
    %s148 = sphi 0, %s134
    %s152 = sphi 0, %s152
    %s154 = sphi 0, %s152
    %s155 = sphi 0, %s154
    %s169 = sphi 0, %s155
    %s175 = sphi 0, %s177
    %s178 = sphi 0, %s175
    %s179 = sphi 0, %s178
    %s195 = sphi 0, %s179
  $region4: #{down_ln.1} parent=0 // loop_header_branch
    %16 = sbr.rel (%p14) target = $region8
  $region5: #{down_ln.1} parent=0 // loop_body
    %s18 = ssub.s32 %s13, 1
    %s19 = ssub.s32 %s13, 2
    %s20 = sadd.s32 %s13, 1
    %s21 = ssub.s32 %s13, %s20
    %p22 = scmp.eq.s32.totalorder %s21, 0
    %s24 = sadd.s32 %s23, 1
    %s25 = scalar_select %p22, %s23, %s24
    %p28 = pneg %p22
    %p29 = scmp.eq.s32.totalorder %s13, 1
    %p30 = por %p28, %p29
    %p31 = scmp.ne.s32.totalorder %s23, %s26
    %p32 = scmp.eq.s32.totalorder %s13, 0
    %p33 = por %p31, %p32
    %p34 = scmp.ne.s32.totalorder %s23, %s26
    %p35 = scmp.eq.s32.totalorder %s18, 1
    %p36 = por %p34, %p35
    %p37 = scmp.ne.s32.totalorder %s26, %s27
    %p38 = scmp.eq.s32.totalorder %s18, 0
    %p39 = por %p37, %p38
    %p40 = scmp.ne.s32.totalorder %s26, %s27
    %p41 = scmp.eq.s32.totalorder %s19, 1
    %p42 = por %p40, %p41
    %p44 = scmp.ne.s32.totalorder %s27, %s43
    %p45 = scmp.eq.s32.totalorder %s19, 0
    %p46 = por %p44, %p45
    %s48 = sadd.s32 %s47, 1
    %p51 = scmp.eq.s32.totalorder %s13, 1
    %p52 = scmp.ne.s32.totalorder %s47, %s49
    %p53 = scmp.eq.s32.totalorder %s13, 0
    %p54 = por %p52, %p53
    %p55 = scmp.ne.s32.totalorder %s47, %s49
    %p56 = scmp.eq.s32.totalorder %s18, 1
    %p57 = por %p55, %p56
    %p58 = scmp.ne.s32.totalorder %s49, %s50
    %p59 = scmp.eq.s32.totalorder %s18, 0
    %p60 = por %p58, %p59
    %p61 = scmp.ne.s32.totalorder %s49, %s50
    %p62 = scmp.eq.s32.totalorder %s19, 1
    %p63 = por %p61, %p62
    %p65 = scmp.ne.s32.totalorder %s50, %s64
    %p66 = scmp.eq.s32.totalorder %s19, 0
    %p67 = por %p65, %p66
    %s69 = sadd.s32 %s68, 1
    %p72 = scmp.eq.s32.totalorder %s13, 1
    %p73 = scmp.ne.s32.totalorder %s68, %s70
    %p74 = scmp.eq.s32.totalorder %s13, 0
    %p75 = por %p73, %p74
    %p76 = scmp.ne.s32.totalorder %s68, %s70
    %p77 = scmp.eq.s32.totalorder %s18, 1
    %p78 = por %p76, %p77
    %p79 = scmp.ne.s32.totalorder %s70, %s71
    %p80 = scmp.eq.s32.totalorder %s18, 0
    %p81 = por %p79, %p80
    %p82 = scmp.ne.s32.totalorder %s70, %s71
    %p83 = scmp.eq.s32.totalorder %s19, 1
    %p84 = por %p82, %p83
    %p86 = scmp.ne.s32.totalorder %s71, %s85
    %p87 = scmp.eq.s32.totalorder %s19, 0
    %p88 = por %p86, %p87
    %s90 = sadd.s32 %s89, 1
    %p93 = scmp.eq.s32.totalorder %s13, 1
    %p94 = scmp.ne.s32.totalorder %s89, %s91
    %p95 = scmp.eq.s32.totalorder %s13, 0
    %p96 = por %p94, %p95
    %p97 = scmp.ne.s32.totalorder %s89, %s91
    %p98 = scmp.eq.s32.totalorder %s18, 1
    %p99 = por %p97, %p98
    %p100 = scmp.ne.s32.totalorder %s91, %s92
    %p101 = scmp.eq.s32.totalorder %s18, 0
    %p102 = por %p100, %p101
    %p103 = scmp.ne.s32.totalorder %s91, %s92
    %p104 = scmp.eq.s32.totalorder %s19, 1
    %p105 = por %p103, %p104
    %p107 = scmp.ne.s32.totalorder %s92, %s106
    %p108 = scmp.eq.s32.totalorder %s19, 0
    %p109 = por %p107, %p108
    %s111 = sadd.s32 %s110, 1
    %p114 = scmp.eq.s32.totalorder %s13, 1
    %p115 = scmp.ne.s32.totalorder %s110, %s112
    %p116 = scmp.eq.s32.totalorder %s13, 0
    %p117 = por %p115, %p116
    %p118 = scmp.ne.s32.totalorder %s110, %s112
    %p119 = scmp.eq.s32.totalorder %s18, 1
    %p120 = por %p118, %p119
    %p121 = scmp.ne.s32.totalorder %s112, %s113
    %p122 = scmp.eq.s32.totalorder %s18, 0
    %p123 = por %p121, %p122
    %p124 = scmp.ne.s32.totalorder %s112, %s113
    %p125 = scmp.eq.s32.totalorder %s19, 1
    %p126 = por %p124, %p125
    %p128 = scmp.ne.s32.totalorder %s113, %s127
    %p129 = scmp.eq.s32.totalorder %s19, 0
    %p130 = por %p128, %p129
    %s132 = sadd.s32 %s131, 1
    %p135 = scmp.eq.s32.totalorder %s13, 1
    %p136 = scmp.ne.s32.totalorder %s131, %s133
    %p137 = scmp.eq.s32.totalorder %s13, 0
    %p138 = por %p136, %p137
    %p139 = scmp.ne.s32.totalorder %s131, %s133
    %p140 = scmp.eq.s32.totalorder %s18, 1
    %p141 = por %p139, %p140
    %p142 = scmp.ne.s32.totalorder %s133, %s134
    %p143 = scmp.eq.s32.totalorder %s18, 0
    %p144 = por %p142, %p143
    %p145 = scmp.ne.s32.totalorder %s133, %s134
    %p146 = scmp.eq.s32.totalorder %s19, 1
    %p147 = por %p145, %p146
    %p149 = scmp.ne.s32.totalorder %s134, %s148
    %p150 = scmp.eq.s32.totalorder %s19, 0
    %p151 = por %p149, %p150
    %s153 = sadd.s32 %s152, 1
    %p156 = scmp.eq.s32.totalorder %s13, 1
    %p157 = scmp.ne.s32.totalorder %s152, %s154
    %p158 = scmp.eq.s32.totalorder %s13, 0
    %p159 = por %p157, %p158
    %p160 = scmp.ne.s32.totalorder %s152, %s154
    %p161 = scmp.eq.s32.totalorder %s18, 1
    %p162 = por %p160, %p161
    %p163 = scmp.ne.s32.totalorder %s154, %s155
    %p164 = scmp.eq.s32.totalorder %s18, 0
    %p165 = por %p163, %p164
    %p166 = scmp.ne.s32.totalorder %s154, %s155
    %p167 = scmp.eq.s32.totalorder %s19, 1
    %p168 = por %p166, %p167
    %p170 = scmp.ne.s32.totalorder %s155, %s169
    %p171 = scmp.eq.s32.totalorder %s19, 0
    %p172 = por %p170, %p171
    %s173 = ssub.s32 %s13, %s20
    %p174 = scmp.eq.s32.totalorder %s173, 0
    %s176 = sadd.s32 %s175, 1
    %s177 = scalar_select %p174, %s175, %s176
    %p180 = pneg %p174
    %p181 = scmp.eq.s32.totalorder %s13, 1
    %p182 = por %p180, %p181
    %p183 = scmp.ne.s32.totalorder %s175, %s178
    %p184 = scmp.eq.s32.totalorder %s13, 0
    %p185 = por %p183, %p184
    %p186 = scmp.ne.s32.totalorder %s175, %s178
    %p187 = scmp.eq.s32.totalorder %s18, 1
    %p188 = por %p186, %p187
    %p189 = scmp.ne.s32.totalorder %s178, %s179
    %p190 = scmp.eq.s32.totalorder %s18, 0
    %p191 = por %p189, %p190
    %p192 = scmp.ne.s32.totalorder %s178, %s179
    %p193 = scmp.eq.s32.totalorder %s19, 1
    %p194 = por %p192, %p193
    %p196 = scmp.ne.s32.totalorder %s179, %s195
    %p197 = scmp.eq.s32.totalorder %s19, 0
    %p198 = por %p196, %p197
    %p199 = scmp.le.s32.totalorder 1, %s13
    %p200 = scmp.lt.s32.totalorder %s13, 3
    %p201 = pnand %p199, %p200
    %p202 = pneg %p201
    // Predicated region
    $region9: #{down_ln.1} parent=5 // pred_check
      _
    $region10: #{down_ln.1} parent=5 // pred_check_branch
      %204 = sbr.rel (%p201) target = $region12
    $region11: #{down_ln.1} parent=5 // pred_region
      %s205 = ssub.s32 %s13, 1
      // Predicated region
      $region13: #{down_ln.1} parent=11 // pred_check
        %p206 = pneg %p60
      $region14: #{down_ln.1} parent=11 // pred_check_branch
        %208 = sbr.rel (%p206) target = $region16
      $region15: #{down_ln.1} parent=11 // pred_region
        _
      $region16: #{down_ln.1} parent=11 // pred_fallthru
        _
      // Predicated region
      $region17: #{down_ln.1} parent=11 // pred_check
        %p209 = pneg %p81
      $region18: #{down_ln.1} parent=11 // pred_check_branch
        %211 = sbr.rel (%p209) target = $region20
      $region19: #{down_ln.1} parent=11 // pred_region
        _
      $region20: #{down_ln.1} parent=11 // pred_fallthru
        _
      // Predicated region
      $region21: #{down_ln.1} parent=11 // pred_check
        %p212 = pneg %p102
      $region22: #{down_ln.1} parent=11 // pred_check_branch
        %214 = sbr.rel (%p212) target = $region24
      $region23: #{down_ln.1} parent=11 // pred_region
        _
      $region24: #{down_ln.1} parent=11 // pred_fallthru
        _
      // Predicated region
      $region25: #{down_ln.1} parent=11 // pred_check
        %p215 = pneg %p123
      $region26: #{down_ln.1} parent=11 // pred_check_branch
        %217 = sbr.rel (%p215) target = $region28
      $region27: #{down_ln.1} parent=11 // pred_region
        _
      $region28: #{down_ln.1} parent=11 // pred_fallthru
        _
      // Predicated region
      $region29: #{down_ln.1} parent=11 // pred_check
        %p218 = pneg %p144
      $region30: #{down_ln.1} parent=11 // pred_check_branch
        %220 = sbr.rel (%p218) target = $region32
      $region31: #{down_ln.1} parent=11 // pred_region
        _
      $region32: #{down_ln.1} parent=11 // pred_fallthru
        _
      // Predicated region
      $region33: #{down_ln.1} parent=11 // pred_check
        %p221 = pneg %p165
      $region34: #{down_ln.1} parent=11 // pred_check_branch
        %223 = sbr.rel (%p221) target = $region36
      $region35: #{down_ln.1} parent=11 // pred_region
        _
      $region36: #{down_ln.1} parent=11 // pred_fallthru
        _
    $region12: #{down_ln.1} parent=5 // pred_fallthru
      _
    %p224 = scmp.lt.s32.totalorder %s13, 2
    // Predicated region
    $region37: #{down_ln.1} parent=5 // pred_check
      %p225 = pneg %p224
    $region38: #{down_ln.1} parent=5 // pred_check_branch
      %227 = sbr.rel (%p225) target = $region40
    $region39: #{down_ln.1} parent=5 // pred_region
      // Predicated region
      $region41: #{down_ln.1} parent=39 // pred_check
        %p228 = pneg %p33
      $region42: #{down_ln.1} parent=39 // pred_check_branch
        %230 = sbr.rel (%p228) target = $region44
      $region43: #{down_ln.1} parent=39 // pred_region
        %p231 = scmp.lt.s32.totalorder %s13, 1
        %s232 = scalar_select %p231, %s13, 1
        %s233 = smul.addr %s232, 8
        %s234 = smul.addr %s233, 8
        %s235 = scalar_lea.vmem %s0, %s234
      $region44: #{down_ln.1} parent=39 // pred_fallthru
        _
    $region40: #{down_ln.1} parent=5 // pred_fallthru
      _
    %p236 = scmp.le.s32.totalorder 1, %s13
    %p237 = scmp.lt.s32.totalorder %s13, 3
    %p238 = pnand %p236, %p237
    %p239 = pneg %p238
    // Predicated region
    $region45: #{down_ln.1} parent=5 // pred_check
      _
    $region46: #{down_ln.1} parent=5 // pred_check_branch
      %241 = sbr.rel (%p238) target = $region48
    $region47: #{down_ln.1} parent=5 // pred_region
      %s242 = ssub.s32 %s13, 1
      %p243 = scmp.lt.s32.totalorder %s18, 1
      %s244 = scalar_select %p243, %s18, 1
      %s245 = smul.addr %s244, 8
      %s246 = smul.addr %s245, 8
      %s247 = scalar_lea.vmem %s0, %s246
      %p248 = pneg %p39
      %p249 = pneg %p36
      %p250 = pneg %p60
      %p251 = pneg %p57
      %p252 = pneg %p81
      %p253 = pneg %p78
      %p254 = pneg %p102
      %p255 = pneg %p99
      %p256 = pneg %p123
      %p257 = pneg %p120
      %p258 = pneg %p144
      %p259 = pneg %p141
      %p260 = pneg %p165
      %p261 = pneg %p162
      %p262 = pneg %p191
      %p263 = pneg %p188
      %p264 = scmp.lt.s32.totalorder %s18, 1
      %s265 = scalar_select %p264, %s18, 1
      %s266 = smul.addr %s265, 8
      %s267 = smul.addr %s266, 8
      %s268 = scalar_lea.vmem %s7, %s267
      %p269 = scmp.lt.s32.totalorder %s18, 1
      %s270 = scalar_select %p269, %s18, 1
      %s271 = smul.addr %s270, 8
      %s272 = smul.addr %s271, 8
      %s273 = scalar_lea.vmem %s0, %s272
      %p274 = scmp.lt.s32.totalorder %s18, 1
      %s275 = scalar_select %p274, %s18, 1
      %s276 = smul.addr %s275, 8
      %s277 = smul.addr %s276, 8
      %s278 = scalar_lea.vmem %s7, %s277
      %279 = vst [vmem:[#allocation2] sm:$0xff] 0.0
      %280 = vst [vmem:[#allocation2 + $0x8] sm:$0x3] 0.0
      %s281 = scalar_lea.vmem [#allocation2], 144
      %282 = vst [vmem:[%s281] sm:$0xff] 0.0
      %283 = vst [vmem:[%s281 + $0x8] sm:$0x3] 0.0
      %284 = vst [vmem:[#allocation2] sm:$0x1] 0.0
      %285 = vst [vmem:[#allocation2 + $0x10] sm:$0x1] 0.0
      %286 = vst [vmem:[#allocation2 + $0x20] sm:$0x1] 0.0
      %287 = vst [vmem:[#allocation2 + $0x30] sm:$0x1] 0.0
      %288 = vst [vmem:[#allocation2 + $0x40] sm:$0x1] 0.0
      %289 = vst [vmem:[#allocation2 + $0x50] sm:$0x1] 0.0
      %290 = vst [vmem:[#allocation2 + $0x60] sm:$0x1] 0.0
      %291 = vst [vmem:[#allocation2 + $0x70] sm:$0x1] 0.0
      %292 = vst [vmem:[#allocation2 + $0x80] sm:$0x1] 0.0
      %293 = vst [vmem:[#allocation2 + $0x90] sm:$0x1] 0.0
      %294 = vst [vmem:[#allocation2 + $0x9] sm:$0x1] 0.0
      %295 = vst [vmem:[#allocation2 + $0x19] sm:$0x1] 0.0
      %296 = vst [vmem:[#allocation2 + $0x29] sm:$0x1] 0.0
      %297 = vst [vmem:[#allocation2 + $0x39] sm:$0x1] 0.0
      %298 = vst [vmem:[#allocation2 + $0x49] sm:$0x1] 0.0
      %299 = vst [vmem:[#allocation2 + $0x59] sm:$0x1] 0.0
      %300 = vst [vmem:[#allocation2 + $0x69] sm:$0x1] 0.0
      %301 = vst [vmem:[#allocation2 + $0x79] sm:$0x1] 0.0
      %302 = vst [vmem:[#allocation2 + $0x89] sm:$0x1] 0.0
      %303 = vst [vmem:[#allocation2 + $0x99] sm:$0x1] 0.0
      %v304 = vld [vmem:[%s273] sm:$0xff]
      %v305 = vld [vmem:[%s273 + $0x8] sm:$0xff]
      %v306 = vld [vmem:[%s273 + $0x10] sm:$0xff]
      %v307 = vld [vmem:[%s273 + $0x18] sm:$0xff]
      %v308 = vld [vmem:[%s273 + $0x20] sm:$0xff]
      %v309 = vld [vmem:[%s273 + $0x28] sm:$0xff]
      %v310 = vld [vmem:[%s273 + $0x30] sm:$0xff]
      %v311 = vld [vmem:[%s273 + $0x38] sm:$0xff]
      %s312 = scalar_lea.vmem [#allocation2], 16
      %313 = vst [vmem:[%s312 + $0x1] sm:$0xff] %v304
      %314 = vst [vmem:[%s312 + $0x11] sm:$0xff] %v305
      %315 = vst [vmem:[%s312 + $0x21] sm:$0xff] %v306
      %316 = vst [vmem:[%s312 + $0x31] sm:$0xff] %v307
      %317 = vst [vmem:[%s312 + $0x41] sm:$0xff] %v308
      %318 = vst [vmem:[%s312 + $0x51] sm:$0xff] %v309
      %319 = vst [vmem:[%s312 + $0x61] sm:$0xff] %v310
      %320 = vst [vmem:[%s312 + $0x71] sm:$0xff] %v311
      %v321 = vld [vmem:[#allocation2] sm:$0xff]
      %v322 = vld [vmem:[#allocation2 + $0x10] sm:$0xff]
      %v323 = vld [vmem:[#allocation2 + $0x20] sm:$0xff]
      %v324 = vld [vmem:[#allocation2 + $0x30] sm:$0xff]
      %v325 = vld [vmem:[#allocation2 + $0x40] sm:$0xff]
      %v326 = vld [vmem:[#allocation2 + $0x50] sm:$0xff]
      %v327 = vld [vmem:[#allocation2 + $0x60] sm:$0xff]
      %v328 = vld [vmem:[#allocation2 + $0x70] sm:$0xff]
      %v329 = vld [vmem:[%s1] sm:$0xff]
      %v330 = vld [vmem:[%s1 + $0x8] sm:$0xff]
      %v331 = vld [vmem:[%s1 + $0x10] sm:$0xff]
      %v332 = vld [vmem:[%s1 + $0x18] sm:$0xff]
      %v333 = vld [vmem:[%s1 + $0x20] sm:$0xff]
      %v334 = vld [vmem:[%s1 + $0x28] sm:$0xff]
      %v335 = vld [vmem:[%s1 + $0x30] sm:$0xff]
      %v336 = vld [vmem:[%s1 + $0x38] sm:$0xff]
      %v337 = vld [vmem:[%s1 + $0x40] sm:$0xff]
      %v338 = vld [vmem:[%s1 + $0x48] sm:$0xff]
      %v339 = vld [vmem:[%s1 + $0x50] sm:$0xff]
      %v340 = vld [vmem:[%s1 + $0x58] sm:$0xff]
      %v341 = vld [vmem:[%s1 + $0x60] sm:$0xff]
      %v342 = vld [vmem:[%s1 + $0x68] sm:$0xff]
      %v343 = vld [vmem:[%s1 + $0x70] sm:$0xff]
      %v344 = vld [vmem:[%s1 + $0x78] sm:$0xff]
      %v345 = vld [vmem:[#allocation2 + $0x1] sm:$0xff]
      %v346 = vld [vmem:[#allocation2 + $0x11] sm:$0xff]
      %v347 = vld [vmem:[#allocation2 + $0x21] sm:$0xff]
      %v348 = vld [vmem:[#allocation2 + $0x31] sm:$0xff]
      %v349 = vld [vmem:[#allocation2 + $0x41] sm:$0xff]
      %v350 = vld [vmem:[#allocation2 + $0x51] sm:$0xff]
      %v351 = vld [vmem:[#allocation2 + $0x61] sm:$0xff]
      %v352 = vld [vmem:[#allocation2 + $0x71] sm:$0xff]
      %s353 = scalar_lea.vmem %s1, 128
      %v354 = vld [vmem:[%s353] sm:$0xff]
      %v355 = vld [vmem:[%s353 + $0x8] sm:$0xff]
      %v356 = vld [vmem:[%s353 + $0x10] sm:$0xff]
      %v357 = vld [vmem:[%s353 + $0x18] sm:$0xff]
      %v358 = vld [vmem:[%s353 + $0x20] sm:$0xff]
      %v359 = vld [vmem:[%s353 + $0x28] sm:$0xff]
      %v360 = vld [vmem:[%s353 + $0x30] sm:$0xff]
      %v361 = vld [vmem:[%s353 + $0x38] sm:$0xff]
      %v362 = vld [vmem:[%s353 + $0x40] sm:$0xff]
      %v363 = vld [vmem:[%s353 + $0x48] sm:$0xff]
      %v364 = vld [vmem:[%s353 + $0x50] sm:$0xff]
      %v365 = vld [vmem:[%s353 + $0x58] sm:$0xff]
      %v366 = vld [vmem:[%s353 + $0x60] sm:$0xff]
      %v367 = vld [vmem:[%s353 + $0x68] sm:$0xff]
      %v368 = vld [vmem:[%s353 + $0x70] sm:$0xff]
      %v369 = vld [vmem:[%s353 + $0x78] sm:$0xff]
      %370 = vmatprep.subr.mxu0 0.0
      %371 = vmatpush1.msra.mxu0 %v369
      %372 = vmatprep.subr.mxu0 0.0
      %373 = vmatpush1.msra.mxu0 %v368
      %374 = vmatprep.subr.mxu0 0.0
      %375 = vmatpush1.msra.mxu0 %v367
      %376 = vmatprep.subr.mxu0 0.0
      %377 = vmatpush1.msra.mxu0 %v366
      %378 = vmatprep.subr.mxu0 0.0
      %379 = vmatpush1.msra.mxu0 %v365
      %380 = vmatprep.subr.mxu0 0.0
      %381 = vmatpush1.msra.mxu0 %v364
      %382 = vmatprep.subr.mxu0 0.0
      %383 = vmatpush1.msra.mxu0 %v363
      %384 = vmatprep.subr.mxu0 0.0
      %385 = vmatpush1.msra.mxu0 %v362
      %386 = vmatprep.subr.mxu0 0.0
      %387 = vmatpush1.msra.mxu0 %v361
      %388 = vmatprep.subr.mxu0 0.0
      %389 = vmatpush1.msra.mxu0 %v360
      %390 = vmatprep.subr.mxu0 0.0
      %391 = vmatpush1.msra.mxu0 %v359
      %392 = vmatprep.subr.mxu0 0.0
      %393 = vmatpush1.msra.mxu0 %v358
      %394 = vmatprep.subr.mxu0 0.0
      %395 = vmatpush1.msra.mxu0 %v357
      %396 = vmatprep.subr.mxu0 0.0
      %397 = vmatpush1.msra.mxu0 %v356
      %398 = vmatprep.subr.mxu0 0.0
      %399 = vmatpush1.msra.mxu0 %v355
      %400 = vmatprep.subr.mxu0 0.0
      %401 = vmatpush1.msra.mxu0 %v354
      %402 = vmatprep.subr.mxu0 0.0
      %403 = vmatpush2.msra.mxu0 0.0
      %404 = vmatprep.subr.mxu0 0.0
      %405 = vmatpush2.msra.mxu0 0.0
      %406 = vmatprep.subr.mxu0 0.0
      %407 = vmatpush2.msra.mxu0 0.0
      %408 = vmatprep.subr.mxu0 0.0
      %409 = vmatpush2.msra.mxu0 0.0
      %410 = vmatprep.subr.mxu0 0.0
      %411 = vmatpush2.msra.mxu0 0.0
      %412 = vmatprep.subr.mxu0 0.0
      %413 = vmatpush2.msra.mxu0 0.0
      %414 = vmatprep.subr.mxu0 0.0
      %415 = vmatpush2.msra.mxu0 0.0
      %416 = vmatprep.subr.mxu0 0.0
      %417 = vmatpush2.msra.mxu0 0.0
      %418 = vmatprep.subr.mxu0 0.0
      %419 = vmatpush2.msra.mxu0 0.0
      %420 = vmatprep.subr.mxu0 0.0
      %421 = vmatpush2.msra.mxu0 0.0
      %422 = vmatprep.subr.mxu0 0.0
      %423 = vmatpush2.msra.mxu0 0.0
      %424 = vmatprep.subr.mxu0 0.0
      %425 = vmatpush2.msra.mxu0 0.0
      %426 = vmatprep.subr.mxu0 0.0
      %427 = vmatpush2.msra.mxu0 0.0
      %428 = vmatprep.subr.mxu0 0.0
      %429 = vmatpush2.msra.mxu0 0.0
      %430 = vmatprep.subr.mxu0 0.0
      %431 = vmatpush2.msra.mxu0 0.0
      %432 = vmatprep.subr.mxu0 0.0
      %433 = vmatpush2.msra.mxu0 0.0
      %434 = vmatprep.mubr.f32.mxu0 0.0
      %435 = vmatmul.mubr.f32.gmra.mxu0 %v345
      %v436 = vpop.f32.mrf.mxu0
      %v437 = vadd.f32 0.0, %v436
      %v438 = vpop.f32.mrf.mxu0
      %439 = vmatprep.mubr.f32.mxu0 0.0
      %440 = vmatmul.mubr.f32.gmra.mxu0 %v346
      %v441 = vpop.f32.mrf.mxu0
      %v442 = vadd.f32 0.0, %v441
      %v443 = vpop.f32.mrf.mxu0
      %444 = vmatprep.mubr.f32.mxu0 0.0
      %445 = vmatmul.mubr.f32.gmra.mxu0 %v347
      %v446 = vpop.f32.mrf.mxu0
      %v447 = vadd.f32 0.0, %v446
      %v448 = vpop.f32.mrf.mxu0
      %449 = vmatprep.mubr.f32.mxu0 0.0
      %450 = vmatmul.mubr.f32.gmra.mxu0 %v348
      %v451 = vpop.f32.mrf.mxu0
      %v452 = vadd.f32 0.0, %v451
      %v453 = vpop.f32.mrf.mxu0
      %454 = vmatprep.mubr.f32.mxu0 0.0
      %455 = vmatmul.mubr.f32.gmra.mxu0 %v349
      %v456 = vpop.f32.mrf.mxu0
      %v457 = vadd.f32 0.0, %v456
      %v458 = vpop.f32.mrf.mxu0
      %459 = vmatprep.mubr.f32.mxu0 0.0
      %460 = vmatmul.mubr.f32.gmra.mxu0 %v350
      %v461 = vpop.f32.mrf.mxu0
      %v462 = vadd.f32 0.0, %v461
      %v463 = vpop.f32.mrf.mxu0
      %464 = vmatprep.mubr.f32.mxu0 0.0
      %465 = vmatmul.mubr.f32.gmra.mxu0 %v351
      %v466 = vpop.f32.mrf.mxu0
      %v467 = vadd.f32 0.0, %v466
      %v468 = vpop.f32.mrf.mxu0
      %469 = vmatprep.mubr.f32.mxu0 0.0
      %470 = vmatmul.mubr.f32.gmra.mxu0 %v352
      %v471 = vpop.f32.mrf.mxu0
      %v472 = vadd.f32 0.0, %v471
      %v473 = vpop.f32.mrf.mxu0
      %474 = vdwg.mxu0
      %475 = vmatprep.subr.mxu0 0.0
      %476 = vmatpush1.msra.mxu0 %v344
      %477 = vmatprep.subr.mxu0 0.0
      %478 = vmatpush1.msra.mxu0 %v343
      %479 = vmatprep.subr.mxu0 0.0
      %480 = vmatpush1.msra.mxu0 %v342
      %481 = vmatprep.subr.mxu0 0.0
      %482 = vmatpush1.msra.mxu0 %v341
      %483 = vmatprep.subr.mxu0 0.0
      %484 = vmatpush1.msra.mxu0 %v340
      %485 = vmatprep.subr.mxu0 0.0
      %486 = vmatpush1.msra.mxu0 %v339
      %487 = vmatprep.subr.mxu0 0.0
      %488 = vmatpush1.msra.mxu0 %v338
      %489 = vmatprep.subr.mxu0 0.0
      %490 = vmatpush1.msra.mxu0 %v337
      %491 = vmatprep.subr.mxu0 0.0
      %492 = vmatpush1.msra.mxu0 %v336
      %493 = vmatprep.subr.mxu0 0.0
      %494 = vmatpush1.msra.mxu0 %v335
      %495 = vmatprep.subr.mxu0 0.0
      %496 = vmatpush1.msra.mxu0 %v334
      %497 = vmatprep.subr.mxu0 0.0
      %498 = vmatpush1.msra.mxu0 %v333
      %499 = vmatprep.subr.mxu0 0.0
      %500 = vmatpush1.msra.mxu0 %v332
      %501 = vmatprep.subr.mxu0 0.0
      %502 = vmatpush1.msra.mxu0 %v331
      %503 = vmatprep.subr.mxu0 0.0
      %504 = vmatpush1.msra.mxu0 %v330
      %505 = vmatprep.subr.mxu0 0.0
      %506 = vmatpush1.msra.mxu0 %v329
      %507 = vmatprep.subr.mxu0 0.0
      %508 = vmatpush2.msra.mxu0 0.0
      %509 = vmatprep.subr.mxu0 0.0
      %510 = vmatpush2.msra.mxu0 0.0
      %511 = vmatprep.subr.mxu0 0.0
      %512 = vmatpush2.msra.mxu0 0.0
      %513 = vmatprep.subr.mxu0 0.0
      %514 = vmatpush2.msra.mxu0 0.0
      %515 = vmatprep.subr.mxu0 0.0
      %516 = vmatpush2.msra.mxu0 0.0
      %517 = vmatprep.subr.mxu0 0.0
      %518 = vmatpush2.msra.mxu0 0.0
      %519 = vmatprep.subr.mxu0 0.0
      %520 = vmatpush2.msra.mxu0 0.0
      %521 = vmatprep.subr.mxu0 0.0
      %522 = vmatpush2.msra.mxu0 0.0
      %523 = vmatprep.subr.mxu0 0.0
      %524 = vmatpush2.msra.mxu0 0.0
      %525 = vmatprep.subr.mxu0 0.0
      %526 = vmatpush2.msra.mxu0 0.0
      %527 = vmatprep.subr.mxu0 0.0
      %528 = vmatpush2.msra.mxu0 0.0
      %529 = vmatprep.subr.mxu0 0.0
      %530 = vmatpush2.msra.mxu0 0.0
      %531 = vmatprep.subr.mxu0 0.0
      %532 = vmatpush2.msra.mxu0 0.0
      %533 = vmatprep.subr.mxu0 0.0
      %534 = vmatpush2.msra.mxu0 0.0
      %535 = vmatprep.subr.mxu0 0.0
      %536 = vmatpush2.msra.mxu0 0.0
      %537 = vmatprep.subr.mxu0 0.0
      %538 = vmatpush2.msra.mxu0 0.0
      %539 = vmatprep.mubr.f32.mxu0 0.0
      %540 = vmatmul.mubr.f32.gmra.mxu0 %v321
      %v541 = vpop.f32.mrf.mxu0
      %v542 = vadd.f32 %v437, %v541
      %v543 = vpop.f32.mrf.mxu0
      %544 = vmatprep.mubr.f32.mxu0 0.0
      %545 = vmatmul.mubr.f32.gmra.mxu0 %v322
      %v546 = vpop.f32.mrf.mxu0
      %v547 = vadd.f32 %v442, %v546
      %v548 = vpop.f32.mrf.mxu0
      %549 = vmatprep.mubr.f32.mxu0 0.0
      %550 = vmatmul.mubr.f32.gmra.mxu0 %v323
      %v551 = vpop.f32.mrf.mxu0
      %v552 = vadd.f32 %v447, %v551
      %v553 = vpop.f32.mrf.mxu0
      %554 = vmatprep.mubr.f32.mxu0 0.0
      %555 = vmatmul.mubr.f32.gmra.mxu0 %v324
      %v556 = vpop.f32.mrf.mxu0
      %v557 = vadd.f32 %v452, %v556
      %v558 = vpop.f32.mrf.mxu0
      %559 = vmatprep.mubr.f32.mxu0 0.0
      %560 = vmatmul.mubr.f32.gmra.mxu0 %v325
      %v561 = vpop.f32.mrf.mxu0
      %v562 = vadd.f32 %v457, %v561
      %v563 = vpop.f32.mrf.mxu0
      %564 = vmatprep.mubr.f32.mxu0 0.0
      %565 = vmatmul.mubr.f32.gmra.mxu0 %v326
      %v566 = vpop.f32.mrf.mxu0
      %v567 = vadd.f32 %v462, %v566
      %v568 = vpop.f32.mrf.mxu0
      %569 = vmatprep.mubr.f32.mxu0 0.0
      %570 = vmatmul.mubr.f32.gmra.mxu0 %v327
      %v571 = vpop.f32.mrf.mxu0
      %v572 = vadd.f32 %v467, %v571
      %v573 = vpop.f32.mrf.mxu0
      %574 = vmatprep.mubr.f32.mxu0 0.0
      %575 = vmatmul.mubr.f32.gmra.mxu0 %v328
      %v576 = vpop.f32.mrf.mxu0
      %v577 = vadd.f32 %v472, %v576
      %v578 = vpop.f32.mrf.mxu0
      %579 = vdwg.mxu0
      %v580 = vld [vmem:[#allocation2 + $0x2] sm:$0xff]
      %v581 = vld [vmem:[#allocation2 + $0x12] sm:$0xff]
      %v582 = vld [vmem:[#allocation2 + $0x22] sm:$0xff]
      %v583 = vld [vmem:[#allocation2 + $0x32] sm:$0xff]
      %v584 = vld [vmem:[#allocation2 + $0x42] sm:$0xff]
      %v585 = vld [vmem:[#allocation2 + $0x52] sm:$0xff]
      %v586 = vld [vmem:[#allocation2 + $0x62] sm:$0xff]
      %v587 = vld [vmem:[#allocation2 + $0x72] sm:$0xff]
      %s588 = scalar_lea.vmem %s1, 256
      %v589 = vld [vmem:[%s588] sm:$0xff]
      %v590 = vld [vmem:[%s588 + $0x8] sm:$0xff]
      %v591 = vld [vmem:[%s588 + $0x10] sm:$0xff]
      %v592 = vld [vmem:[%s588 + $0x18] sm:$0xff]
      %v593 = vld [vmem:[%s588 + $0x20] sm:$0xff]
      %v594 = vld [vmem:[%s588 + $0x28] sm:$0xff]
      %v595 = vld [vmem:[%s588 + $0x30] sm:$0xff]
      %v596 = vld [vmem:[%s588 + $0x38] sm:$0xff]
      %v597 = vld [vmem:[%s588 + $0x40] sm:$0xff]
      %v598 = vld [vmem:[%s588 + $0x48] sm:$0xff]
      %v599 = vld [vmem:[%s588 + $0x50] sm:$0xff]
      %v600 = vld [vmem:[%s588 + $0x58] sm:$0xff]
      %v601 = vld [vmem:[%s588 + $0x60] sm:$0xff]
      %v602 = vld [vmem:[%s588 + $0x68] sm:$0xff]
      %v603 = vld [vmem:[%s588 + $0x70] sm:$0xff]
      %v604 = vld [vmem:[%s588 + $0x78] sm:$0xff]
      %605 = vmatprep.subr.mxu0 0.0
      %606 = vmatpush1.msra.mxu0 %v604
      %607 = vmatprep.subr.mxu0 0.0
      %608 = vmatpush1.msra.mxu0 %v603
      %609 = vmatprep.subr.mxu0 0.0
      %610 = vmatpush1.msra.mxu0 %v602
      %611 = vmatprep.subr.mxu0 0.0
      %612 = vmatpush1.msra.mxu0 %v601
      %613 = vmatprep.subr.mxu0 0.0
      %614 = vmatpush1.msra.mxu0 %v600
      %615 = vmatprep.subr.mxu0 0.0
      %616 = vmatpush1.msra.mxu0 %v599
      %617 = vmatprep.subr.mxu0 0.0
      %618 = vmatpush1.msra.mxu0 %v598
      %619 = vmatprep.subr.mxu0 0.0
      %620 = vmatpush1.msra.mxu0 %v597
      %621 = vmatprep.subr.mxu0 0.0
      %622 = vmatpush1.msra.mxu0 %v596
      %623 = vmatprep.subr.mxu0 0.0
      %624 = vmatpush1.msra.mxu0 %v595
      %625 = vmatprep.subr.mxu0 0.0
      %626 = vmatpush1.msra.mxu0 %v594
      %627 = vmatprep.subr.mxu0 0.0
      %628 = vmatpush1.msra.mxu0 %v593
      %629 = vmatprep.subr.mxu0 0.0
      %630 = vmatpush1.msra.mxu0 %v592
      %631 = vmatprep.subr.mxu0 0.0
      %632 = vmatpush1.msra.mxu0 %v591
      %633 = vmatprep.subr.mxu0 0.0
      %634 = vmatpush1.msra.mxu0 %v590
      %635 = vmatprep.subr.mxu0 0.0
      %636 = vmatpush1.msra.mxu0 %v589
      %637 = vmatprep.subr.mxu0 0.0
      %638 = vmatpush2.msra.mxu0 0.0
      %639 = vmatprep.subr.mxu0 0.0
      %640 = vmatpush2.msra.mxu0 0.0
      %641 = vmatprep.subr.mxu0 0.0
      %642 = vmatpush2.msra.mxu0 0.0
      %643 = vmatprep.subr.mxu0 0.0
      %644 = vmatpush2.msra.mxu0 0.0
      %645 = vmatprep.subr.mxu0 0.0
      %646 = vmatpush2.msra.mxu0 0.0
      %647 = vmatprep.subr.mxu0 0.0
      %648 = vmatpush2.msra.mxu0 0.0
      %649 = vmatprep.subr.mxu0 0.0
      %650 = vmatpush2.msra.mxu0 0.0
      %651 = vmatprep.subr.mxu0 0.0
      %652 = vmatpush2.msra.mxu0 0.0
      %653 = vmatprep.subr.mxu0 0.0
      %654 = vmatpush2.msra.mxu0 0.0
      %655 = vmatprep.subr.mxu0 0.0
      %656 = vmatpush2.msra.mxu0 0.0
      %657 = vmatprep.subr.mxu0 0.0
      %658 = vmatpush2.msra.mxu0 0.0
      %659 = vmatprep.subr.mxu0 0.0
      %660 = vmatpush2.msra.mxu0 0.0
      %661 = vmatprep.subr.mxu0 0.0
      %662 = vmatpush2.msra.mxu0 0.0
      %663 = vmatprep.subr.mxu0 0.0
      %664 = vmatpush2.msra.mxu0 0.0
      %665 = vmatprep.subr.mxu0 0.0
      %666 = vmatpush2.msra.mxu0 0.0
      %667 = vmatprep.subr.mxu0 0.0
      %668 = vmatpush2.msra.mxu0 0.0
      %669 = vmatprep.mubr.f32.mxu0 0.0
      %670 = vmatmul.mubr.f32.gmra.mxu0 %v580
      %v671 = vpop.f32.mrf.mxu0
      %v672 = vadd.f32 0.0, %v671
      %v673 = vpop.f32.mrf.mxu0
      %674 = vmatprep.mubr.f32.mxu0 0.0
      %675 = vmatmul.mubr.f32.gmra.mxu0 %v581
      %v676 = vpop.f32.mrf.mxu0
      %v677 = vadd.f32 0.0, %v676
      %v678 = vpop.f32.mrf.mxu0
      %679 = vmatprep.mubr.f32.mxu0 0.0
      %680 = vmatmul.mubr.f32.gmra.mxu0 %v582
      %v681 = vpop.f32.mrf.mxu0
      %v682 = vadd.f32 0.0, %v681
      %v683 = vpop.f32.mrf.mxu0
      %684 = vmatprep.mubr.f32.mxu0 0.0
      %685 = vmatmul.mubr.f32.gmra.mxu0 %v583
      %v686 = vpop.f32.mrf.mxu0
      %v687 = vadd.f32 0.0, %v686
      %v688 = vpop.f32.mrf.mxu0
      %689 = vmatprep.mubr.f32.mxu0 0.0
      %690 = vmatmul.mubr.f32.gmra.mxu0 %v584
      %v691 = vpop.f32.mrf.mxu0
      %v692 = vadd.f32 0.0, %v691
      %v693 = vpop.f32.mrf.mxu0
      %694 = vmatprep.mubr.f32.mxu0 0.0
      %695 = vmatmul.mubr.f32.gmra.mxu0 %v585
      %v696 = vpop.f32.mrf.mxu0
      %v697 = vadd.f32 0.0, %v696
      %v698 = vpop.f32.mrf.mxu0
      %699 = vmatprep.mubr.f32.mxu0 0.0
      %700 = vmatmul.mubr.f32.gmra.mxu0 %v586
      %v701 = vpop.f32.mrf.mxu0
      %v702 = vadd.f32 0.0, %v701
      %v703 = vpop.f32.mrf.mxu0
      %704 = vmatprep.mubr.f32.mxu0 0.0
      %705 = vmatmul.mubr.f32.gmra.mxu0 %v587
      %v706 = vpop.f32.mrf.mxu0
      %v707 = vadd.f32 0.0, %v706
      %v708 = vpop.f32.mrf.mxu0
      %709 = vdwg.mxu0
      %v710 = vadd.f32 %v542, %v672
      %v711 = vadd.f32 %v547, %v677
      %v712 = vadd.f32 %v552, %v682
      %v713 = vadd.f32 %v557, %v687
      %v714 = vadd.f32 %v562, %v692
      %v715 = vadd.f32 %v567, %v697
      %v716 = vadd.f32 %v572, %v702
      %v717 = vadd.f32 %v577, %v707
      %v718 = vld [vmem:[%s312] sm:$0xff]
      %v719 = vld [vmem:[%s312 + $0x10] sm:$0xff]
      %v720 = vld [vmem:[%s312 + $0x20] sm:$0xff]
      %v721 = vld [vmem:[%s312 + $0x30] sm:$0xff]
      %v722 = vld [vmem:[%s312 + $0x40] sm:$0xff]
      %v723 = vld [vmem:[%s312 + $0x50] sm:$0xff]
      %v724 = vld [vmem:[%s312 + $0x60] sm:$0xff]
      %v725 = vld [vmem:[%s312 + $0x70] sm:$0xff]
      %s726 = scalar_lea.vmem %s1, 384
      %v727 = vld [vmem:[%s726] sm:$0xff]
      %v728 = vld [vmem:[%s726 + $0x8] sm:$0xff]
      %v729 = vld [vmem:[%s726 + $0x10] sm:$0xff]
      %v730 = vld [vmem:[%s726 + $0x18] sm:$0xff]
      %v731 = vld [vmem:[%s726 + $0x20] sm:$0xff]
      %v732 = vld [vmem:[%s726 + $0x28] sm:$0xff]
      %v733 = vld [vmem:[%s726 + $0x30] sm:$0xff]
      %v734 = vld [vmem:[%s726 + $0x38] sm:$0xff]
      %v735 = vld [vmem:[%s726 + $0x40] sm:$0xff]
      %v736 = vld [vmem:[%s726 + $0x48] sm:$0xff]
      %v737 = vld [vmem:[%s726 + $0x50] sm:$0xff]
      %v738 = vld [vmem:[%s726 + $0x58] sm:$0xff]
      %v739 = vld [vmem:[%s726 + $0x60] sm:$0xff]
      %v740 = vld [vmem:[%s726 + $0x68] sm:$0xff]
      %v741 = vld [vmem:[%s726 + $0x70] sm:$0xff]
      %v742 = vld [vmem:[%s726 + $0x78] sm:$0xff]
      %743 = vmatprep.subr.mxu0 0.0
      %744 = vmatpush1.msra.mxu0 %v742
      %745 = vmatprep.subr.mxu0 0.0
      %746 = vmatpush1.msra.mxu0 %v741
      %747 = vmatprep.subr.mxu0 0.0
      %748 = vmatpush1.msra.mxu0 %v740
      %749 = vmatprep.subr.mxu0 0.0
      %750 = vmatpush1.msra.mxu0 %v739
      %751 = vmatprep.subr.mxu0 0.0
      %752 = vmatpush1.msra.mxu0 %v738
      %753 = vmatprep.subr.mxu0 0.0
      %754 = vmatpush1.msra.mxu0 %v737
      %755 = vmatprep.subr.mxu0 0.0
      %756 = vmatpush1.msra.mxu0 %v736
      %757 = vmatprep.subr.mxu0 0.0
      %758 = vmatpush1.msra.mxu0 %v735
      %759 = vmatprep.subr.mxu0 0.0
      %760 = vmatpush1.msra.mxu0 %v734
      %761 = vmatprep.subr.mxu0 0.0
      %762 = vmatpush1.msra.mxu0 %v733
      %763 = vmatprep.subr.mxu0 0.0
      %764 = vmatpush1.msra.mxu0 %v732
      %765 = vmatprep.subr.mxu0 0.0
      %766 = vmatpush1.msra.mxu0 %v731
      %767 = vmatprep.subr.mxu0 0.0
      %768 = vmatpush1.msra.mxu0 %v730
      %769 = vmatprep.subr.mxu0 0.0
      %770 = vmatpush1.msra.mxu0 %v729
      %771 = vmatprep.subr.mxu0 0.0
      %772 = vmatpush1.msra.mxu0 %v728
      %773 = vmatprep.subr.mxu0 0.0
      %774 = vmatpush1.msra.mxu0 %v727
      %775 = vmatprep.subr.mxu0 0.0
      %776 = vmatpush2.msra.mxu0 0.0
      %777 = vmatprep.subr.mxu0 0.0
      %778 = vmatpush2.msra.mxu0 0.0
      %779 = vmatprep.subr.mxu0 0.0
      %780 = vmatpush2.msra.mxu0 0.0
      %781 = vmatprep.subr.mxu0 0.0
      %782 = vmatpush2.msra.mxu0 0.0
      %783 = vmatprep.subr.mxu0 0.0
      %784 = vmatpush2.msra.mxu0 0.0
      %785 = vmatprep.subr.mxu0 0.0
      %786 = vmatpush2.msra.mxu0 0.0
      %787 = vmatprep.subr.mxu0 0.0
      %788 = vmatpush2.msra.mxu0 0.0
      %789 = vmatprep.subr.mxu0 0.0
      %790 = vmatpush2.msra.mxu0 0.0
      %791 = vmatprep.subr.mxu0 0.0
      %792 = vmatpush2.msra.mxu0 0.0
      %793 = vmatprep.subr.mxu0 0.0
      %794 = vmatpush2.msra.mxu0 0.0
      %795 = vmatprep.subr.mxu0 0.0
      %796 = vmatpush2.msra.mxu0 0.0
      %797 = vmatprep.subr.mxu0 0.0
      %798 = vmatpush2.msra.mxu0 0.0
      %799 = vmatprep.subr.mxu0 0.0
      %800 = vmatpush2.msra.mxu0 0.0
      %801 = vmatprep.subr.mxu0 0.0
      %802 = vmatpush2.msra.mxu0 0.0
      %803 = vmatprep.subr.mxu0 0.0
      %804 = vmatpush2.msra.mxu0 0.0
      %805 = vmatprep.subr.mxu0 0.0
      %806 = vmatpush2.msra.mxu0 0.0
      %807 = vmatprep.mubr.f32.mxu0 0.0
      %808 = vmatmul.mubr.f32.gmra.mxu0 %v718
      %v809 = vpop.f32.mrf.mxu0
      %v810 = vadd.f32 0.0, %v809
      %v811 = vpop.f32.mrf.mxu0
      %812 = vmatprep.mubr.f32.mxu0 0.0
      %813 = vmatmul.mubr.f32.gmra.mxu0 %v719
      %v814 = vpop.f32.mrf.mxu0
      %v815 = vadd.f32 0.0, %v814
      %v816 = vpop.f32.mrf.mxu0
      %817 = vmatprep.mubr.f32.mxu0 0.0
      %818 = vmatmul.mubr.f32.gmra.mxu0 %v720
      %v819 = vpop.f32.mrf.mxu0
      %v820 = vadd.f32 0.0, %v819
      %v821 = vpop.f32.mrf.mxu0
      %822 = vmatprep.mubr.f32.mxu0 0.0
      %823 = vmatmul.mubr.f32.gmra.mxu0 %v721
      %v824 = vpop.f32.mrf.mxu0
      %v825 = vadd.f32 0.0, %v824
      %v826 = vpop.f32.mrf.mxu0
      %827 = vmatprep.mubr.f32.mxu0 0.0
      %828 = vmatmul.mubr.f32.gmra.mxu0 %v722
      %v829 = vpop.f32.mrf.mxu0
      %v830 = vadd.f32 0.0, %v829
      %v831 = vpop.f32.mrf.mxu0
      %832 = vmatprep.mubr.f32.mxu0 0.0
      %833 = vmatmul.mubr.f32.gmra.mxu0 %v723
      %v834 = vpop.f32.mrf.mxu0
      %v835 = vadd.f32 0.0, %v834
      %v836 = vpop.f32.mrf.mxu0
      %837 = vmatprep.mubr.f32.mxu0 0.0
      %838 = vmatmul.mubr.f32.gmra.mxu0 %v724
      %v839 = vpop.f32.mrf.mxu0
      %v840 = vadd.f32 0.0, %v839
      %v841 = vpop.f32.mrf.mxu0
      %842 = vmatprep.mubr.f32.mxu0 0.0
      %843 = vmatmul.mubr.f32.gmra.mxu0 %v725
      %v844 = vpop.f32.mrf.mxu0
      %v845 = vadd.f32 0.0, %v844
      %v846 = vpop.f32.mrf.mxu0
      %847 = vdwg.mxu0
      %v848 = vadd.f32 %v710, %v810
      %v849 = vadd.f32 %v711, %v815
      %v850 = vadd.f32 %v712, %v820
      %v851 = vadd.f32 %v713, %v825
      %v852 = vadd.f32 %v714, %v830
      %v853 = vadd.f32 %v715, %v835
      %v854 = vadd.f32 %v716, %v840
      %v855 = vadd.f32 %v717, %v845
      %v856 = vld [vmem:[%s312 + $0x1] sm:$0xff]
      %v857 = vld [vmem:[%s312 + $0x11] sm:$0xff]
      %v858 = vld [vmem:[%s312 + $0x21] sm:$0xff]
      %v859 = vld [vmem:[%s312 + $0x31] sm:$0xff]
      %v860 = vld [vmem:[%s312 + $0x41] sm:$0xff]
      %v861 = vld [vmem:[%s312 + $0x51] sm:$0xff]
      %v862 = vld [vmem:[%s312 + $0x61] sm:$0xff]
      %v863 = vld [vmem:[%s312 + $0x71] sm:$0xff]
      %s864 = scalar_lea.vmem %s1, 512
      %v865 = vld [vmem:[%s864] sm:$0xff]
      %v866 = vld [vmem:[%s864 + $0x8] sm:$0xff]
      %v867 = vld [vmem:[%s864 + $0x10] sm:$0xff]
      %v868 = vld [vmem:[%s864 + $0x18] sm:$0xff]
      %v869 = vld [vmem:[%s864 + $0x20] sm:$0xff]
      %v870 = vld [vmem:[%s864 + $0x28] sm:$0xff]
      %v871 = vld [vmem:[%s864 + $0x30] sm:$0xff]
      %v872 = vld [vmem:[%s864 + $0x38] sm:$0xff]
      %v873 = vld [vmem:[%s864 + $0x40] sm:$0xff]
      %v874 = vld [vmem:[%s864 + $0x48] sm:$0xff]
      %v875 = vld [vmem:[%s864 + $0x50] sm:$0xff]
      %v876 = vld [vmem:[%s864 + $0x58] sm:$0xff]
      %v877 = vld [vmem:[%s864 + $0x60] sm:$0xff]
      %v878 = vld [vmem:[%s864 + $0x68] sm:$0xff]
      %v879 = vld [vmem:[%s864 + $0x70] sm:$0xff]
      %v880 = vld [vmem:[%s864 + $0x78] sm:$0xff]
      %881 = vmatprep.subr.mxu0 0.0
      %882 = vmatpush1.msra.mxu0 %v880
      %883 = vmatprep.subr.mxu0 0.0
      %884 = vmatpush1.msra.mxu0 %v879
      %885 = vmatprep.subr.mxu0 0.0
      %886 = vmatpush1.msra.mxu0 %v878
      %887 = vmatprep.subr.mxu0 0.0
      %888 = vmatpush1.msra.mxu0 %v877
      %889 = vmatprep.subr.mxu0 0.0
      %890 = vmatpush1.msra.mxu0 %v876
      %891 = vmatprep.subr.mxu0 0.0
      %892 = vmatpush1.msra.mxu0 %v875
      %893 = vmatprep.subr.mxu0 0.0
      %894 = vmatpush1.msra.mxu0 %v874
      %895 = vmatprep.subr.mxu0 0.0
      %896 = vmatpush1.msra.mxu0 %v873
      %897 = vmatprep.subr.mxu0 0.0
      %898 = vmatpush1.msra.mxu0 %v872
      %899 = vmatprep.subr.mxu0 0.0
      %900 = vmatpush1.msra.mxu0 %v871
      %901 = vmatprep.subr.mxu0 0.0
      %902 = vmatpush1.msra.mxu0 %v870
      %903 = vmatprep.subr.mxu0 0.0
      %904 = vmatpush1.msra.mxu0 %v869
      %905 = vmatprep.subr.mxu0 0.0
      %906 = vmatpush1.msra.mxu0 %v868
      %907 = vmatprep.subr.mxu0 0.0
      %908 = vmatpush1.msra.mxu0 %v867
      %909 = vmatprep.subr.mxu0 0.0
      %910 = vmatpush1.msra.mxu0 %v866
      %911 = vmatprep.subr.mxu0 0.0
      %912 = vmatpush1.msra.mxu0 %v865
      %913 = vmatprep.subr.mxu0 0.0
      %914 = vmatpush2.msra.mxu0 0.0
      %915 = vmatprep.subr.mxu0 0.0
      %916 = vmatpush2.msra.mxu0 0.0
      %917 = vmatprep.subr.mxu0 0.0
      %918 = vmatpush2.msra.mxu0 0.0
      %919 = vmatprep.subr.mxu0 0.0
      %920 = vmatpush2.msra.mxu0 0.0
      %921 = vmatprep.subr.mxu0 0.0
      %922 = vmatpush2.msra.mxu0 0.0
      %923 = vmatprep.subr.mxu0 0.0
      %924 = vmatpush2.msra.mxu0 0.0
      %925 = vmatprep.subr.mxu0 0.0
      %926 = vmatpush2.msra.mxu0 0.0
      %927 = vmatprep.subr.mxu0 0.0
      %928 = vmatpush2.msra.mxu0 0.0
      %929 = vmatprep.subr.mxu0 0.0
      %930 = vmatpush2.msra.mxu0 0.0
      %931 = vmatprep.subr.mxu0 0.0
      %932 = vmatpush2.msra.mxu0 0.0
      %933 = vmatprep.subr.mxu0 0.0
      %934 = vmatpush2.msra.mxu0 0.0
      %935 = vmatprep.subr.mxu0 0.0
      %936 = vmatpush2.msra.mxu0 0.0
      %937 = vmatprep.subr.mxu0 0.0
      %938 = vmatpush2.msra.mxu0 0.0
      %939 = vmatprep.subr.mxu0 0.0
      %940 = vmatpush2.msra.mxu0 0.0
      %941 = vmatprep.subr.mxu0 0.0
      %942 = vmatpush2.msra.mxu0 0.0
      %943 = vmatprep.subr.mxu0 0.0
      %944 = vmatpush2.msra.mxu0 0.0
      %945 = vmatprep.mubr.f32.mxu0 0.0
      %946 = vmatmul.mubr.f32.gmra.mxu0 %v856
      %v947 = vpop.f32.mrf.mxu0
      %v948 = vadd.f32 0.0, %v947
      %v949 = vpop.f32.mrf.mxu0
      %950 = vmatprep.mubr.f32.mxu0 0.0
      %951 = vmatmul.mubr.f32.gmra.mxu0 %v857
      %v952 = vpop.f32.mrf.mxu0
      %v953 = vadd.f32 0.0, %v952
      %v954 = vpop.f32.mrf.mxu0
      %955 = vmatprep.mubr.f32.mxu0 0.0
      %956 = vmatmul.mubr.f32.gmra.mxu0 %v858
      %v957 = vpop.f32.mrf.mxu0
      %v958 = vadd.f32 0.0, %v957
      %v959 = vpop.f32.mrf.mxu0
      %960 = vmatprep.mubr.f32.mxu0 0.0
      %961 = vmatmul.mubr.f32.gmra.mxu0 %v859
      %v962 = vpop.f32.mrf.mxu0
      %v963 = vadd.f32 0.0, %v962
      %v964 = vpop.f32.mrf.mxu0
      %965 = vmatprep.mubr.f32.mxu0 0.0
      %966 = vmatmul.mubr.f32.gmra.mxu0 %v860
      %v967 = vpop.f32.mrf.mxu0
      %v968 = vadd.f32 0.0, %v967
      %v969 = vpop.f32.mrf.mxu0
      %970 = vmatprep.mubr.f32.mxu0 0.0
      %971 = vmatmul.mubr.f32.gmra.mxu0 %v861
      %v972 = vpop.f32.mrf.mxu0
      %v973 = vadd.f32 0.0, %v972
      %v974 = vpop.f32.mrf.mxu0
      %975 = vmatprep.mubr.f32.mxu0 0.0
      %976 = vmatmul.mubr.f32.gmra.mxu0 %v862
      %v977 = vpop.f32.mrf.mxu0
      %v978 = vadd.f32 0.0, %v977
      %v979 = vpop.f32.mrf.mxu0
      %980 = vmatprep.mubr.f32.mxu0 0.0
      %981 = vmatmul.mubr.f32.gmra.mxu0 %v863
      %v982 = vpop.f32.mrf.mxu0
      %v983 = vadd.f32 0.0, %v982
      %v984 = vpop.f32.mrf.mxu0
      %985 = vdwg.mxu0
      %v986 = vadd.f32 %v848, %v948
      %v987 = vadd.f32 %v849, %v953
      %v988 = vadd.f32 %v850, %v958
      %v989 = vadd.f32 %v851, %v963
      %v990 = vadd.f32 %v852, %v968
      %v991 = vadd.f32 %v853, %v973
      %v992 = vadd.f32 %v854, %v978
      %v993 = vadd.f32 %v855, %v983
      %v994 = vld [vmem:[%s312 + $0x2] sm:$0xff]
      %v995 = vld [vmem:[%s312 + $0x12] sm:$0xff]
      %v996 = vld [vmem:[%s312 + $0x22] sm:$0xff]
      %v997 = vld [vmem:[%s312 + $0x32] sm:$0xff]
      %v998 = vld [vmem:[%s312 + $0x42] sm:$0xff]
      %v999 = vld [vmem:[%s312 + $0x52] sm:$0xff]
      %v1000 = vld [vmem:[%s312 + $0x62] sm:$0xff]
      %v1001 = vld [vmem:[%s312 + $0x72] sm:$0xff]
      %s1002 = scalar_lea.vmem %s1, 640
      %v1003 = vld [vmem:[%s1002] sm:$0xff]
      %v1004 = vld [vmem:[%s1002 + $0x8] sm:$0xff]
      %v1005 = vld [vmem:[%s1002 + $0x10] sm:$0xff]
      %v1006 = vld [vmem:[%s1002 + $0x18] sm:$0xff]
      %v1007 = vld [vmem:[%s1002 + $0x20] sm:$0xff]
      %v1008 = vld [vmem:[%s1002 + $0x28] sm:$0xff]
      %v1009 = vld [vmem:[%s1002 + $0x30] sm:$0xff]
      %v1010 = vld [vmem:[%s1002 + $0x38] sm:$0xff]
      %v1011 = vld [vmem:[%s1002 + $0x40] sm:$0xff]
      %v1012 = vld [vmem:[%s1002 + $0x48] sm:$0xff]
      %v1013 = vld [vmem:[%s1002 + $0x50] sm:$0xff]
      %v1014 = vld [vmem:[%s1002 + $0x58] sm:$0xff]
      %v1015 = vld [vmem:[%s1002 + $0x60] sm:$0xff]
      %v1016 = vld [vmem:[%s1002 + $0x68] sm:$0xff]
      %v1017 = vld [vmem:[%s1002 + $0x70] sm:$0xff]
      %v1018 = vld [vmem:[%s1002 + $0x78] sm:$0xff]
      %1019 = vmatprep.subr.mxu0 0.0
      %1020 = vmatpush1.msra.mxu0 %v1018
      %1021 = vmatprep.subr.mxu0 0.0
      %1022 = vmatpush1.msra.mxu0 %v1017
      %1023 = vmatprep.subr.mxu0 0.0
      %1024 = vmatpush1.msra.mxu0 %v1016
      %1025 = vmatprep.subr.mxu0 0.0
      %1026 = vmatpush1.msra.mxu0 %v1015
      %1027 = vmatprep.subr.mxu0 0.0
      %1028 = vmatpush1.msra.mxu0 %v1014
      %1029 = vmatprep.subr.mxu0 0.0
      %1030 = vmatpush1.msra.mxu0 %v1013
      %1031 = vmatprep.subr.mxu0 0.0
      %1032 = vmatpush1.msra.mxu0 %v1012
      %1033 = vmatprep.subr.mxu0 0.0
      %1034 = vmatpush1.msra.mxu0 %v1011
      %1035 = vmatprep.subr.mxu0 0.0
      %1036 = vmatpush1.msra.mxu0 %v1010
      %1037 = vmatprep.subr.mxu0 0.0
      %1038 = vmatpush1.msra.mxu0 %v1009
      %1039 = vmatprep.subr.mxu0 0.0
      %1040 = vmatpush1.msra.mxu0 %v1008
      %1041 = vmatprep.subr.mxu0 0.0
      %1042 = vmatpush1.msra.mxu0 %v1007
      %1043 = vmatprep.subr.mxu0 0.0
      %1044 = vmatpush1.msra.mxu0 %v1006
      %1045 = vmatprep.subr.mxu0 0.0
      %1046 = vmatpush1.msra.mxu0 %v1005
      %1047 = vmatprep.subr.mxu0 0.0
      %1048 = vmatpush1.msra.mxu0 %v1004
      %1049 = vmatprep.subr.mxu0 0.0
      %1050 = vmatpush1.msra.mxu0 %v1003
      %1051 = vmatprep.subr.mxu0 0.0
      %1052 = vmatpush2.msra.mxu0 0.0
      %1053 = vmatprep.subr.mxu0 0.0
      %1054 = vmatpush2.msra.mxu0 0.0
      %1055 = vmatprep.subr.mxu0 0.0
      %1056 = vmatpush2.msra.mxu0 0.0
      %1057 = vmatprep.subr.mxu0 0.0
      %1058 = vmatpush2.msra.mxu0 0.0
      %1059 = vmatprep.subr.mxu0 0.0
      %1060 = vmatpush2.msra.mxu0 0.0
      %1061 = vmatprep.subr.mxu0 0.0
      %1062 = vmatpush2.msra.mxu0 0.0
      %1063 = vmatprep.subr.mxu0 0.0
      %1064 = vmatpush2.msra.mxu0 0.0
      %1065 = vmatprep.subr.mxu0 0.0
      %1066 = vmatpush2.msra.mxu0 0.0
      %1067 = vmatprep.subr.mxu0 0.0
      %1068 = vmatpush2.msra.mxu0 0.0
      %1069 = vmatprep.subr.mxu0 0.0
      %1070 = vmatpush2.msra.mxu0 0.0
      %1071 = vmatprep.subr.mxu0 0.0
      %1072 = vmatpush2.msra.mxu0 0.0
      %1073 = vmatprep.subr.mxu0 0.0
      %1074 = vmatpush2.msra.mxu0 0.0
      %1075 = vmatprep.subr.mxu0 0.0
      %1076 = vmatpush2.msra.mxu0 0.0
      %1077 = vmatprep.subr.mxu0 0.0
      %1078 = vmatpush2.msra.mxu0 0.0
      %1079 = vmatprep.subr.mxu0 0.0
      %1080 = vmatpush2.msra.mxu0 0.0
      %1081 = vmatprep.subr.mxu0 0.0
      %1082 = vmatpush2.msra.mxu0 0.0
      %1083 = vmatprep.mubr.f32.mxu0 0.0
      %1084 = vmatmul.mubr.f32.gmra.mxu0 %v994
      %v1085 = vpop.f32.mrf.mxu0
      %v1086 = vadd.f32 0.0, %v1085
      %v1087 = vpop.f32.mrf.mxu0
      %1088 = vmatprep.mubr.f32.mxu0 0.0
      %1089 = vmatmul.mubr.f32.gmra.mxu0 %v995
      %v1090 = vpop.f32.mrf.mxu0
      %v1091 = vadd.f32 0.0, %v1090
      %v1092 = vpop.f32.mrf.mxu0
      %1093 = vmatprep.mubr.f32.mxu0 0.0
      %1094 = vmatmul.mubr.f32.gmra.mxu0 %v996
      %v1095 = vpop.f32.mrf.mxu0
      %v1096 = vadd.f32 0.0, %v1095
      %v1097 = vpop.f32.mrf.mxu0
      %1098 = vmatprep.mubr.f32.mxu0 0.0
      %1099 = vmatmul.mubr.f32.gmra.mxu0 %v997
      %v1100 = vpop.f32.mrf.mxu0
      %v1101 = vadd.f32 0.0, %v1100
      %v1102 = vpop.f32.mrf.mxu0
      %1103 = vmatprep.mubr.f32.mxu0 0.0
      %1104 = vmatmul.mubr.f32.gmra.mxu0 %v998
      %v1105 = vpop.f32.mrf.mxu0
      %v1106 = vadd.f32 0.0, %v1105
      %v1107 = vpop.f32.mrf.mxu0
      %1108 = vmatprep.mubr.f32.mxu0 0.0
      %1109 = vmatmul.mubr.f32.gmra.mxu0 %v999
      %v1110 = vpop.f32.mrf.mxu0
      %v1111 = vadd.f32 0.0, %v1110
      %v1112 = vpop.f32.mrf.mxu0
      %1113 = vmatprep.mubr.f32.mxu0 0.0
      %1114 = vmatmul.mubr.f32.gmra.mxu0 %v1000
      %v1115 = vpop.f32.mrf.mxu0
      %v1116 = vadd.f32 0.0, %v1115
      %v1117 = vpop.f32.mrf.mxu0
      %1118 = vmatprep.mubr.f32.mxu0 0.0
      %1119 = vmatmul.mubr.f32.gmra.mxu0 %v1001
      %v1120 = vpop.f32.mrf.mxu0
      %v1121 = vadd.f32 0.0, %v1120
      %v1122 = vpop.f32.mrf.mxu0
      %1123 = vdwg.mxu0
      %v1124 = vadd.f32 %v986, %v1086
      %v1125 = vadd.f32 %v987, %v1091
      %v1126 = vadd.f32 %v988, %v1096
      %v1127 = vadd.f32 %v989, %v1101
      %v1128 = vadd.f32 %v990, %v1106
      %v1129 = vadd.f32 %v991, %v1111
      %v1130 = vadd.f32 %v992, %v1116
      %v1131 = vadd.f32 %v993, %v1121
      %s1132 = scalar_lea.vmem [#allocation2], 32
      %v1133 = vld [vmem:[%s1132] sm:$0xff]
      %v1134 = vld [vmem:[%s1132 + $0x10] sm:$0xff]
      %v1135 = vld [vmem:[%s1132 + $0x20] sm:$0xff]
      %v1136 = vld [vmem:[%s1132 + $0x30] sm:$0xff]
      %v1137 = vld [vmem:[%s1132 + $0x40] sm:$0xff]
      %v1138 = vld [vmem:[%s1132 + $0x50] sm:$0xff]
      %v1139 = vld [vmem:[%s1132 + $0x60] sm:$0xff]
      %v1140 = vld [vmem:[%s1132 + $0x70] sm:$0xff]
      %s1141 = scalar_lea.vmem %s1, 768
      %v1142 = vld [vmem:[%s1141] sm:$0xff]
      %v1143 = vld [vmem:[%s1141 + $0x8] sm:$0xff]
      %v1144 = vld [vmem:[%s1141 + $0x10] sm:$0xff]
      %v1145 = vld [vmem:[%s1141 + $0x18] sm:$0xff]
      %v1146 = vld [vmem:[%s1141 + $0x20] sm:$0xff]
      %v1147 = vld [vmem:[%s1141 + $0x28] sm:$0xff]
      %v1148 = vld [vmem:[%s1141 + $0x30] sm:$0xff]
      %v1149 = vld [vmem:[%s1141 + $0x38] sm:$0xff]
      %v1150 = vld [vmem:[%s1141 + $0x40] sm:$0xff]
      %v1151 = vld [vmem:[%s1141 + $0x48] sm:$0xff]
      %v1152 = vld [vmem:[%s1141 + $0x50] sm:$0xff]
      %v1153 = vld [vmem:[%s1141 + $0x58] sm:$0xff]
      %v1154 = vld [vmem:[%s1141 + $0x60] sm:$0xff]
      %v1155 = vld [vmem:[%s1141 + $0x68] sm:$0xff]
      %v1156 = vld [vmem:[%s1141 + $0x70] sm:$0xff]
      %v1157 = vld [vmem:[%s1141 + $0x78] sm:$0xff]
      %1158 = vmatprep.subr.mxu0 0.0
      %1159 = vmatpush1.msra.mxu0 %v1157
      %1160 = vmatprep.subr.mxu0 0.0
      %1161 = vmatpush1.msra.mxu0 %v1156
      %1162 = vmatprep.subr.mxu0 0.0
      %1163 = vmatpush1.msra.mxu0 %v1155
      %1164 = vmatprep.subr.mxu0 0.0
      %1165 = vmatpush1.msra.mxu0 %v1154
      %1166 = vmatprep.subr.mxu0 0.0
      %1167 = vmatpush1.msra.mxu0 %v1153
      %1168 = vmatprep.subr.mxu0 0.0
      %1169 = vmatpush1.msra.mxu0 %v1152
      %1170 = vmatprep.subr.mxu0 0.0
      %1171 = vmatpush1.msra.mxu0 %v1151
      %1172 = vmatprep.subr.mxu0 0.0
      %1173 = vmatpush1.msra.mxu0 %v1150
      %1174 = vmatprep.subr.mxu0 0.0
      %1175 = vmatpush1.msra.mxu0 %v1149
      %1176 = vmatprep.subr.mxu0 0.0
      %1177 = vmatpush1.msra.mxu0 %v1148
      %1178 = vmatprep.subr.mxu0 0.0
      %1179 = vmatpush1.msra.mxu0 %v1147
      %1180 = vmatprep.subr.mxu0 0.0
      %1181 = vmatpush1.msra.mxu0 %v1146
      %1182 = vmatprep.subr.mxu0 0.0
      %1183 = vmatpush1.msra.mxu0 %v1145
      %1184 = vmatprep.subr.mxu0 0.0
      %1185 = vmatpush1.msra.mxu0 %v1144
      %1186 = vmatprep.subr.mxu0 0.0
      %1187 = vmatpush1.msra.mxu0 %v1143
      %1188 = vmatprep.subr.mxu0 0.0
      %1189 = vmatpush1.msra.mxu0 %v1142
      %1190 = vmatprep.subr.mxu0 0.0
      %1191 = vmatpush2.msra.mxu0 0.0
      %1192 = vmatprep.subr.mxu0 0.0
      %1193 = vmatpush2.msra.mxu0 0.0
      %1194 = vmatprep.subr.mxu0 0.0
      %1195 = vmatpush2.msra.mxu0 0.0
      %1196 = vmatprep.subr.mxu0 0.0
      %1197 = vmatpush2.msra.mxu0 0.0
      %1198 = vmatprep.subr.mxu0 0.0
      %1199 = vmatpush2.msra.mxu0 0.0
      %1200 = vmatprep.subr.mxu0 0.0
      %1201 = vmatpush2.msra.mxu0 0.0
      %1202 = vmatprep.subr.mxu0 0.0
      %1203 = vmatpush2.msra.mxu0 0.0
      %1204 = vmatprep.subr.mxu0 0.0
      %1205 = vmatpush2.msra.mxu0 0.0
      %1206 = vmatprep.subr.mxu0 0.0
      %1207 = vmatpush2.msra.mxu0 0.0
      %1208 = vmatprep.subr.mxu0 0.0
      %1209 = vmatpush2.msra.mxu0 0.0
      %1210 = vmatprep.subr.mxu0 0.0
      %1211 = vmatpush2.msra.mxu0 0.0
      %1212 = vmatprep.subr.mxu0 0.0
      %1213 = vmatpush2.msra.mxu0 0.0
      %1214 = vmatprep.subr.mxu0 0.0
      %1215 = vmatpush2.msra.mxu0 0.0
      %1216 = vmatprep.subr.mxu0 0.0
      %1217 = vmatpush2.msra.mxu0 0.0
      %1218 = vmatprep.subr.mxu0 0.0
      %1219 = vmatpush2.msra.mxu0 0.0
      %1220 = vmatprep.subr.mxu0 0.0
      %1221 = vmatpush2.msra.mxu0 0.0
      %1222 = vmatprep.mubr.f32.mxu0 0.0
      %1223 = vmatmul.mubr.f32.gmra.mxu0 %v1133
      %v1224 = vpop.f32.mrf.mxu0
      %v1225 = vadd.f32 0.0, %v1224
      %v1226 = vpop.f32.mrf.mxu0
      %1227 = vmatprep.mubr.f32.mxu0 0.0
      %1228 = vmatmul.mubr.f32.gmra.mxu0 %v1134
      %v1229 = vpop.f32.mrf.mxu0
      %v1230 = vadd.f32 0.0, %v1229
      %v1231 = vpop.f32.mrf.mxu0
      %1232 = vmatprep.mubr.f32.mxu0 0.0
      %1233 = vmatmul.mubr.f32.gmra.mxu0 %v1135
      %v1234 = vpop.f32.mrf.mxu0
      %v1235 = vadd.f32 0.0, %v1234
      %v1236 = vpop.f32.mrf.mxu0
      %1237 = vmatprep.mubr.f32.mxu0 0.0
      %1238 = vmatmul.mubr.f32.gmra.mxu0 %v1136
      %v1239 = vpop.f32.mrf.mxu0
      %v1240 = vadd.f32 0.0, %v1239
      %v1241 = vpop.f32.mrf.mxu0
      %1242 = vmatprep.mubr.f32.mxu0 0.0
      %1243 = vmatmul.mubr.f32.gmra.mxu0 %v1137
      %v1244 = vpop.f32.mrf.mxu0
      %v1245 = vadd.f32 0.0, %v1244
      %v1246 = vpop.f32.mrf.mxu0
      %1247 = vmatprep.mubr.f32.mxu0 0.0
      %1248 = vmatmul.mubr.f32.gmra.mxu0 %v1138
      %v1249 = vpop.f32.mrf.mxu0
      %v1250 = vadd.f32 0.0, %v1249
      %v1251 = vpop.f32.mrf.mxu0
      %1252 = vmatprep.mubr.f32.mxu0 0.0
      %1253 = vmatmul.mubr.f32.gmra.mxu0 %v1139
      %v1254 = vpop.f32.mrf.mxu0
      %v1255 = vadd.f32 0.0, %v1254
      %v1256 = vpop.f32.mrf.mxu0
      %1257 = vmatprep.mubr.f32.mxu0 0.0
      %1258 = vmatmul.mubr.f32.gmra.mxu0 %v1140
      %v1259 = vpop.f32.mrf.mxu0
      %v1260 = vadd.f32 0.0, %v1259
      %v1261 = vpop.f32.mrf.mxu0
      %1262 = vdwg.mxu0
      %v1263 = vadd.f32 %v1124, %v1225
      %v1264 = vadd.f32 %v1125, %v1230
      %v1265 = vadd.f32 %v1126, %v1235
      %v1266 = vadd.f32 %v1127, %v1240
      %v1267 = vadd.f32 %v1128, %v1245
      %v1268 = vadd.f32 %v1129, %v1250
      %v1269 = vadd.f32 %v1130, %v1255
      %v1270 = vadd.f32 %v1131, %v1260
      %v1271 = vld [vmem:[%s1132 + $0x1] sm:$0xff]
      %v1272 = vld [vmem:[%s1132 + $0x11] sm:$0xff]
      %v1273 = vld [vmem:[%s1132 + $0x21] sm:$0xff]
      %v1274 = vld [vmem:[%s1132 + $0x31] sm:$0xff]
      %v1275 = vld [vmem:[%s1132 + $0x41] sm:$0xff]
      %v1276 = vld [vmem:[%s1132 + $0x51] sm:$0xff]
      %v1277 = vld [vmem:[%s1132 + $0x61] sm:$0xff]
      %v1278 = vld [vmem:[%s1132 + $0x71] sm:$0xff]
      %s1279 = scalar_lea.vmem %s1, 896
      %v1280 = vld [vmem:[%s1279] sm:$0xff]
      %v1281 = vld [vmem:[%s1279 + $0x8] sm:$0xff]
      %v1282 = vld [vmem:[%s1279 + $0x10] sm:$0xff]
      %v1283 = vld [vmem:[%s1279 + $0x18] sm:$0xff]
      %v1284 = vld [vmem:[%s1279 + $0x20] sm:$0xff]
      %v1285 = vld [vmem:[%s1279 + $0x28] sm:$0xff]
      %v1286 = vld [vmem:[%s1279 + $0x30] sm:$0xff]
      %v1287 = vld [vmem:[%s1279 + $0x38] sm:$0xff]
      %v1288 = vld [vmem:[%s1279 + $0x40] sm:$0xff]
      %v1289 = vld [vmem:[%s1279 + $0x48] sm:$0xff]
      %v1290 = vld [vmem:[%s1279 + $0x50] sm:$0xff]
      %v1291 = vld [vmem:[%s1279 + $0x58] sm:$0xff]
      %v1292 = vld [vmem:[%s1279 + $0x60] sm:$0xff]
      %v1293 = vld [vmem:[%s1279 + $0x68] sm:$0xff]
      %v1294 = vld [vmem:[%s1279 + $0x70] sm:$0xff]
      %v1295 = vld [vmem:[%s1279 + $0x78] sm:$0xff]
      %1296 = vmatprep.subr.mxu0 0.0
      %1297 = vmatpush1.msra.mxu0 %v1295
      %1298 = vmatprep.subr.mxu0 0.0
      %1299 = vmatpush1.msra.mxu0 %v1294
      %1300 = vmatprep.subr.mxu0 0.0
      %1301 = vmatpush1.msra.mxu0 %v1293
      %1302 = vmatprep.subr.mxu0 0.0
      %1303 = vmatpush1.msra.mxu0 %v1292
      %1304 = vmatprep.subr.mxu0 0.0
      %1305 = vmatpush1.msra.mxu0 %v1291
      %1306 = vmatprep.subr.mxu0 0.0
      %1307 = vmatpush1.msra.mxu0 %v1290
      %1308 = vmatprep.subr.mxu0 0.0
      %1309 = vmatpush1.msra.mxu0 %v1289
      %1310 = vmatprep.subr.mxu0 0.0
      %1311 = vmatpush1.msra.mxu0 %v1288
      %1312 = vmatprep.subr.mxu0 0.0
      %1313 = vmatpush1.msra.mxu0 %v1287
      %1314 = vmatprep.subr.mxu0 0.0
      %1315 = vmatpush1.msra.mxu0 %v1286
      %1316 = vmatprep.subr.mxu0 0.0
      %1317 = vmatpush1.msra.mxu0 %v1285
      %1318 = vmatprep.subr.mxu0 0.0
      %1319 = vmatpush1.msra.mxu0 %v1284
      %1320 = vmatprep.subr.mxu0 0.0
      %1321 = vmatpush1.msra.mxu0 %v1283
      %1322 = vmatprep.subr.mxu0 0.0
      %1323 = vmatpush1.msra.mxu0 %v1282
      %1324 = vmatprep.subr.mxu0 0.0
      %1325 = vmatpush1.msra.mxu0 %v1281
      %1326 = vmatprep.subr.mxu0 0.0
      %1327 = vmatpush1.msra.mxu0 %v1280
      %1328 = vmatprep.subr.mxu0 0.0
      %1329 = vmatpush2.msra.mxu0 0.0
      %1330 = vmatprep.subr.mxu0 0.0
      %1331 = vmatpush2.msra.mxu0 0.0
      %1332 = vmatprep.subr.mxu0 0.0
      %1333 = vmatpush2.msra.mxu0 0.0
      %1334 = vmatprep.subr.mxu0 0.0
      %1335 = vmatpush2.msra.mxu0 0.0
      %1336 = vmatprep.subr.mxu0 0.0
      %1337 = vmatpush2.msra.mxu0 0.0
      %1338 = vmatprep.subr.mxu0 0.0
      %1339 = vmatpush2.msra.mxu0 0.0
      %1340 = vmatprep.subr.mxu0 0.0
      %1341 = vmatpush2.msra.mxu0 0.0
      %1342 = vmatprep.subr.mxu0 0.0
      %1343 = vmatpush2.msra.mxu0 0.0
      %1344 = vmatprep.subr.mxu0 0.0
      %1345 = vmatpush2.msra.mxu0 0.0
      %1346 = vmatprep.subr.mxu0 0.0
      %1347 = vmatpush2.msra.mxu0 0.0
      %1348 = vmatprep.subr.mxu0 0.0
      %1349 = vmatpush2.msra.mxu0 0.0
      %1350 = vmatprep.subr.mxu0 0.0
      %1351 = vmatpush2.msra.mxu0 0.0
      %1352 = vmatprep.subr.mxu0 0.0
      %1353 = vmatpush2.msra.mxu0 0.0
      %1354 = vmatprep.subr.mxu0 0.0
      %1355 = vmatpush2.msra.mxu0 0.0
      %1356 = vmatprep.subr.mxu0 0.0
      %1357 = vmatpush2.msra.mxu0 0.0
      %1358 = vmatprep.subr.mxu0 0.0
      %1359 = vmatpush2.msra.mxu0 0.0
      %1360 = vmatprep.mubr.f32.mxu0 0.0
      %1361 = vmatmul.mubr.f32.gmra.mxu0 %v1271
      %v1362 = vpop.f32.mrf.mxu0
      %v1363 = vadd.f32 0.0, %v1362
      %v1364 = vpop.f32.mrf.mxu0
      %1365 = vmatprep.mubr.f32.mxu0 0.0
      %1366 = vmatmul.mubr.f32.gmra.mxu0 %v1272
      %v1367 = vpop.f32.mrf.mxu0
      %v1368 = vadd.f32 0.0, %v1367
      %v1369 = vpop.f32.mrf.mxu0
      %1370 = vmatprep.mubr.f32.mxu0 0.0
      %1371 = vmatmul.mubr.f32.gmra.mxu0 %v1273
      %v1372 = vpop.f32.mrf.mxu0
      %v1373 = vadd.f32 0.0, %v1372
      %v1374 = vpop.f32.mrf.mxu0
      %1375 = vmatprep.mubr.f32.mxu0 0.0
      %1376 = vmatmul.mubr.f32.gmra.mxu0 %v1274
      %v1377 = vpop.f32.mrf.mxu0
      %v1378 = vadd.f32 0.0, %v1377
      %v1379 = vpop.f32.mrf.mxu0
      %1380 = vmatprep.mubr.f32.mxu0 0.0
      %1381 = vmatmul.mubr.f32.gmra.mxu0 %v1275
      %v1382 = vpop.f32.mrf.mxu0
      %v1383 = vadd.f32 0.0, %v1382
      %v1384 = vpop.f32.mrf.mxu0
      %1385 = vmatprep.mubr.f32.mxu0 0.0
      %1386 = vmatmul.mubr.f32.gmra.mxu0 %v1276
      %v1387 = vpop.f32.mrf.mxu0
      %v1388 = vadd.f32 0.0, %v1387
      %v1389 = vpop.f32.mrf.mxu0
      %1390 = vmatprep.mubr.f32.mxu0 0.0
      %1391 = vmatmul.mubr.f32.gmra.mxu0 %v1277
      %v1392 = vpop.f32.mrf.mxu0
      %v1393 = vadd.f32 0.0, %v1392
      %v1394 = vpop.f32.mrf.mxu0
      %1395 = vmatprep.mubr.f32.mxu0 0.0
      %1396 = vmatmul.mubr.f32.gmra.mxu0 %v1278
      %v1397 = vpop.f32.mrf.mxu0
      %v1398 = vadd.f32 0.0, %v1397
      %v1399 = vpop.f32.mrf.mxu0
      %1400 = vdwg.mxu0
      %v1401 = vadd.f32 %v1263, %v1363
      %v1402 = vadd.f32 %v1264, %v1368
      %v1403 = vadd.f32 %v1265, %v1373
      %v1404 = vadd.f32 %v1266, %v1378
      %v1405 = vadd.f32 %v1267, %v1383
      %v1406 = vadd.f32 %v1268, %v1388
      %v1407 = vadd.f32 %v1269, %v1393
      %v1408 = vadd.f32 %v1270, %v1398
      %v1409 = vld [vmem:[%s1132 + $0x2] sm:$0xff]
      %v1410 = vld [vmem:[%s1132 + $0x12] sm:$0xff]
      %v1411 = vld [vmem:[%s1132 + $0x22] sm:$0xff]
      %v1412 = vld [vmem:[%s1132 + $0x32] sm:$0xff]
      %v1413 = vld [vmem:[%s1132 + $0x42] sm:$0xff]
      %v1414 = vld [vmem:[%s1132 + $0x52] sm:$0xff]
      %v1415 = vld [vmem:[%s1132 + $0x62] sm:$0xff]
      %v1416 = vld [vmem:[%s1132 + $0x72] sm:$0xff]
      %s1417 = scalar_lea.vmem %s1, 1024
      %v1418 = vld [vmem:[%s1417] sm:$0xff]
      %v1419 = vld [vmem:[%s1417 + $0x8] sm:$0xff]
      %v1420 = vld [vmem:[%s1417 + $0x10] sm:$0xff]
      %v1421 = vld [vmem:[%s1417 + $0x18] sm:$0xff]
      %v1422 = vld [vmem:[%s1417 + $0x20] sm:$0xff]
      %v1423 = vld [vmem:[%s1417 + $0x28] sm:$0xff]
      %v1424 = vld [vmem:[%s1417 + $0x30] sm:$0xff]
      %v1425 = vld [vmem:[%s1417 + $0x38] sm:$0xff]
      %v1426 = vld [vmem:[%s1417 + $0x40] sm:$0xff]
      %v1427 = vld [vmem:[%s1417 + $0x48] sm:$0xff]
      %v1428 = vld [vmem:[%s1417 + $0x50] sm:$0xff]
      %v1429 = vld [vmem:[%s1417 + $0x58] sm:$0xff]
      %v1430 = vld [vmem:[%s1417 + $0x60] sm:$0xff]
      %v1431 = vld [vmem:[%s1417 + $0x68] sm:$0xff]
      %v1432 = vld [vmem:[%s1417 + $0x70] sm:$0xff]
      %v1433 = vld [vmem:[%s1417 + $0x78] sm:$0xff]
      %1434 = vmatprep.subr.mxu0 0.0
      %1435 = vmatpush1.msra.mxu0 %v1433
      %1436 = vmatprep.subr.mxu0 0.0
      %1437 = vmatpush1.msra.mxu0 %v1432
      %1438 = vmatprep.subr.mxu0 0.0
      %1439 = vmatpush1.msra.mxu0 %v1431
      %1440 = vmatprep.subr.mxu0 0.0
      %1441 = vmatpush1.msra.mxu0 %v1430
      %1442 = vmatprep.subr.mxu0 0.0
      %1443 = vmatpush1.msra.mxu0 %v1429
      %1444 = vmatprep.subr.mxu0 0.0
      %1445 = vmatpush1.msra.mxu0 %v1428
      %1446 = vmatprep.subr.mxu0 0.0
      %1447 = vmatpush1.msra.mxu0 %v1427
      %1448 = vmatprep.subr.mxu0 0.0
      %1449 = vmatpush1.msra.mxu0 %v1426
      %1450 = vmatprep.subr.mxu0 0.0
      %1451 = vmatpush1.msra.mxu0 %v1425
      %1452 = vmatprep.subr.mxu0 0.0
      %1453 = vmatpush1.msra.mxu0 %v1424
      %1454 = vmatprep.subr.mxu0 0.0
      %1455 = vmatpush1.msra.mxu0 %v1423
      %1456 = vmatprep.subr.mxu0 0.0
      %1457 = vmatpush1.msra.mxu0 %v1422
      %1458 = vmatprep.subr.mxu0 0.0
      %1459 = vmatpush1.msra.mxu0 %v1421
      %1460 = vmatprep.subr.mxu0 0.0
      %1461 = vmatpush1.msra.mxu0 %v1420
      %1462 = vmatprep.subr.mxu0 0.0
      %1463 = vmatpush1.msra.mxu0 %v1419
      %1464 = vmatprep.subr.mxu0 0.0
      %1465 = vmatpush1.msra.mxu0 %v1418
      %1466 = vmatprep.subr.mxu0 0.0
      %1467 = vmatpush2.msra.mxu0 0.0
      %1468 = vmatprep.subr.mxu0 0.0
      %1469 = vmatpush2.msra.mxu0 0.0
      %1470 = vmatprep.subr.mxu0 0.0
      %1471 = vmatpush2.msra.mxu0 0.0
      %1472 = vmatprep.subr.mxu0 0.0
      %1473 = vmatpush2.msra.mxu0 0.0
      %1474 = vmatprep.subr.mxu0 0.0
      %1475 = vmatpush2.msra.mxu0 0.0
      %1476 = vmatprep.subr.mxu0 0.0
      %1477 = vmatpush2.msra.mxu0 0.0
      %1478 = vmatprep.subr.mxu0 0.0
      %1479 = vmatpush2.msra.mxu0 0.0
      %1480 = vmatprep.subr.mxu0 0.0
      %1481 = vmatpush2.msra.mxu0 0.0
      %1482 = vmatprep.subr.mxu0 0.0
      %1483 = vmatpush2.msra.mxu0 0.0
      %1484 = vmatprep.subr.mxu0 0.0
      %1485 = vmatpush2.msra.mxu0 0.0
      %1486 = vmatprep.subr.mxu0 0.0
      %1487 = vmatpush2.msra.mxu0 0.0
      %1488 = vmatprep.subr.mxu0 0.0
      %1489 = vmatpush2.msra.mxu0 0.0
      %1490 = vmatprep.subr.mxu0 0.0
      %1491 = vmatpush2.msra.mxu0 0.0
      %1492 = vmatprep.subr.mxu0 0.0
      %1493 = vmatpush2.msra.mxu0 0.0
      %1494 = vmatprep.subr.mxu0 0.0
      %1495 = vmatpush2.msra.mxu0 0.0
      %1496 = vmatprep.subr.mxu0 0.0
      %1497 = vmatpush2.msra.mxu0 0.0
      %1498 = vmatprep.mubr.f32.mxu0 0.0
      %1499 = vmatmul.mubr.f32.gmra.mxu0 %v1409
      %v1500 = vpop.f32.mrf.mxu0
      %v1501 = vadd.f32 0.0, %v1500
      %v1502 = vpop.f32.mrf.mxu0
      %1503 = vmatprep.mubr.f32.mxu0 0.0
      %1504 = vmatmul.mubr.f32.gmra.mxu0 %v1410
      %v1505 = vpop.f32.mrf.mxu0
      %v1506 = vadd.f32 0.0, %v1505
      %v1507 = vpop.f32.mrf.mxu0
      %1508 = vmatprep.mubr.f32.mxu0 0.0
      %1509 = vmatmul.mubr.f32.gmra.mxu0 %v1411
      %v1510 = vpop.f32.mrf.mxu0
      %v1511 = vadd.f32 0.0, %v1510
      %v1512 = vpop.f32.mrf.mxu0
      %1513 = vmatprep.mubr.f32.mxu0 0.0
      %1514 = vmatmul.mubr.f32.gmra.mxu0 %v1412
      %v1515 = vpop.f32.mrf.mxu0
      %v1516 = vadd.f32 0.0, %v1515
      %v1517 = vpop.f32.mrf.mxu0
      %1518 = vmatprep.mubr.f32.mxu0 0.0
      %1519 = vmatmul.mubr.f32.gmra.mxu0 %v1413
      %v1520 = vpop.f32.mrf.mxu0
      %v1521 = vadd.f32 0.0, %v1520
      %v1522 = vpop.f32.mrf.mxu0
      %1523 = vmatprep.mubr.f32.mxu0 0.0
      %1524 = vmatmul.mubr.f32.gmra.mxu0 %v1414
      %v1525 = vpop.f32.mrf.mxu0
      %v1526 = vadd.f32 0.0, %v1525
      %v1527 = vpop.f32.mrf.mxu0
      %1528 = vmatprep.mubr.f32.mxu0 0.0
      %1529 = vmatmul.mubr.f32.gmra.mxu0 %v1415
      %v1530 = vpop.f32.mrf.mxu0
      %v1531 = vadd.f32 0.0, %v1530
      %v1532 = vpop.f32.mrf.mxu0
      %1533 = vmatprep.mubr.f32.mxu0 0.0
      %1534 = vmatmul.mubr.f32.gmra.mxu0 %v1416
      %v1535 = vpop.f32.mrf.mxu0
      %v1536 = vadd.f32 0.0, %v1535
      %v1537 = vpop.f32.mrf.mxu0
      %1538 = vdwg.mxu0
      %v1539 = vadd.f32 %v1401, %v1501
      %v1540 = vadd.f32 %v1402, %v1506
      %v1541 = vadd.f32 %v1403, %v1511
      %v1542 = vadd.f32 %v1404, %v1516
      %v1543 = vadd.f32 %v1405, %v1521
      %v1544 = vadd.f32 %v1406, %v1526
      %v1545 = vadd.f32 %v1407, %v1531
      %v1546 = vadd.f32 %v1408, %v1536
      %1547 = vadd.xlane.f32.xlu0 %v1539
      %v1548 = vpop.xlane.xlu0 %1547
      %1549 = vadd.xlane.f32.xlu0 %v1540
      %v1550 = vpop.xlane.xlu0 %1549
      %1551 = vadd.xlane.f32.xlu0 %v1541
      %v1552 = vpop.xlane.xlu0 %1551
      %1553 = vadd.xlane.f32.xlu0 %v1542
      %v1554 = vpop.xlane.xlu0 %1553
      %1555 = vadd.xlane.f32.xlu0 %v1543
      %v1556 = vpop.xlane.xlu0 %1555
      %1557 = vadd.xlane.f32.xlu0 %v1544
      %v1558 = vpop.xlane.xlu0 %1557
      %1559 = vadd.xlane.f32.xlu0 %v1545
      %v1560 = vpop.xlane.xlu0 %1559
      %1561 = vadd.xlane.f32.xlu0 %v1546
      %v1562 = vpop.xlane.xlu0 %1561
      %v1563 = vmul.f32 %v1539, %v1539
      %v1564 = vmul.f32 %v1540, %v1540
      %v1565 = vmul.f32 %v1541, %v1541
      %v1566 = vmul.f32 %v1542, %v1542
      %v1567 = vmul.f32 %v1543, %v1543
      %v1568 = vmul.f32 %v1544, %v1544
      %v1569 = vmul.f32 %v1545, %v1545
      %v1570 = vmul.f32 %v1546, %v1546
      %1571 = vadd.xlane.f32.xlu0 %v1563
      %v1572 = vpop.xlane.xlu0 %1571
      %1573 = vadd.xlane.f32.xlu0 %v1564
      %v1574 = vpop.xlane.xlu0 %1573
      %1575 = vadd.xlane.f32.xlu0 %v1565
      %v1576 = vpop.xlane.xlu0 %1575
      %1577 = vadd.xlane.f32.xlu0 %v1566
      %v1578 = vpop.xlane.xlu0 %1577
      %1579 = vadd.xlane.f32.xlu0 %v1567
      %v1580 = vpop.xlane.xlu0 %1579
      %1581 = vadd.xlane.f32.xlu0 %v1568
      %v1582 = vpop.xlane.xlu0 %1581
      %1583 = vadd.xlane.f32.xlu0 %v1569
      %v1584 = vpop.xlane.xlu0 %1583
      %1585 = vadd.xlane.f32.xlu0 %v1570
      %v1586 = vpop.xlane.xlu0 %1585
      %v1587 = vmul.f32 %v1548, 0.125
      %v1588 = vmul.f32 %v1550, 0.125
      %v1589 = vmul.f32 %v1552, 0.125
      %v1590 = vmul.f32 %v1554, 0.125
      %v1591 = vmul.f32 %v1556, 0.125
      %v1592 = vmul.f32 %v1558, 0.125
      %v1593 = vmul.f32 %v1560, 0.125
      %v1594 = vmul.f32 %v1562, 0.125
      %v1595 = vmul.f32 %v1572, 0.125
      %v1596 = vmul.f32 %v1574, 0.125
      %v1597 = vmul.f32 %v1576, 0.125
      %v1598 = vmul.f32 %v1578, 0.125
      %v1599 = vmul.f32 %v1580, 0.125
      %v1600 = vmul.f32 %v1582, 0.125
      %v1601 = vmul.f32 %v1584, 0.125
      %v1602 = vmul.f32 %v1586, 0.125
      %v1603 = vmul.f32 %v1587, %v1587
      %v1604 = vmul.f32 %v1588, %v1588
      %v1605 = vmul.f32 %v1589, %v1589
      %v1606 = vmul.f32 %v1590, %v1590
      %v1607 = vmul.f32 %v1591, %v1591
      %v1608 = vmul.f32 %v1592, %v1592
      %v1609 = vmul.f32 %v1593, %v1593
      %v1610 = vmul.f32 %v1594, %v1594
      %v1611 = vsub.f32 %v1595, %v1603
      %v1612 = vsub.f32 %v1596, %v1604
      %v1613 = vsub.f32 %v1597, %v1605
      %v1614 = vsub.f32 %v1598, %v1606
      %v1615 = vsub.f32 %v1599, %v1607
      %v1616 = vsub.f32 %v1600, %v1608
      %v1617 = vsub.f32 %v1601, %v1609
      %v1618 = vsub.f32 %v1602, %v1610
      %v1619 = vmax.f32 %v1611, 0.0
      %v1620 = vmax.f32 %v1612, 0.0
      %v1621 = vmax.f32 %v1613, 0.0
      %v1622 = vmax.f32 %v1614, 0.0
      %v1623 = vmax.f32 %v1615, 0.0
      %v1624 = vmax.f32 %v1616, 0.0
      %v1625 = vmax.f32 %v1617, 0.0
      %v1626 = vmax.f32 %v1618, 0.0
      %v1627 = vsub.f32 %v1539, %v1587
      %v1628 = vsub.f32 %v1540, %v1588
      %v1629 = vsub.f32 %v1541, %v1589
      %v1630 = vsub.f32 %v1542, %v1590
      %v1631 = vsub.f32 %v1543, %v1591
      %v1632 = vsub.f32 %v1544, %v1592
      %v1633 = vsub.f32 %v1545, %v1593
      %v1634 = vsub.f32 %v1546, %v1594
      %v1635 = vadd.f32 %v1619, 1e-06
      %v1636 = vadd.f32 %v1620, 1e-06
      %v1637 = vadd.f32 %v1621, 1e-06
      %v1638 = vadd.f32 %v1622, 1e-06
      %v1639 = vadd.f32 %v1623, 1e-06
      %v1640 = vadd.f32 %v1624, 1e-06
      %v1641 = vadd.f32 %v1625, 1e-06
      %v1642 = vadd.f32 %v1626, 1e-06
      %v1643 = vrsqrt.pop %v1635
      %v1644 = vrsqrt.pop %v1636
      %v1645 = vrsqrt.pop %v1637
      %v1646 = vrsqrt.pop %v1638
      %v1647 = vrsqrt.pop %v1639
      %v1648 = vrsqrt.pop %v1640
      %v1649 = vrsqrt.pop %v1641
      %v1650 = vrsqrt.pop %v1642
      %v1651 = vmul.f32 %v1627, %v1643
      %v1652 = vmul.f32 %v1628, %v1644
      %v1653 = vmul.f32 %v1629, %v1645
      %v1654 = vmul.f32 %v1630, %v1646
      %v1655 = vmul.f32 %v1631, %v1647
      %v1656 = vmul.f32 %v1632, %v1648
      %v1657 = vmul.f32 %v1633, %v1649
      %v1658 = vmul.f32 %v1634, %v1650
      %v1659 = vld [vmem:[%s2] sm:$0x1]
      %v1661 = vlaneseq
      %v1662 = vshrl.u32 %v1661, 7
      %v1663 = vsub.s32 0, %v1662
      %v1664 = vrot.slane %v1659, %v1663
      %v1666 = vmul.f32 %v1651, %v1664
      %v1667 = vmul.f32 %v1652, %v1664
      %v1668 = vmul.f32 %v1653, %v1664
      %v1669 = vmul.f32 %v1654, %v1664
      %v1670 = vmul.f32 %v1655, %v1664
      %v1671 = vmul.f32 %v1656, %v1664
      %v1672 = vmul.f32 %v1657, %v1664
      %v1673 = vmul.f32 %v1658, %v1664
      %v1674 = vld [vmem:[%s3] sm:$0x1]
      %v1676 = vlaneseq
      %v1677 = vshrl.u32 %v1676, 7
      %v1678 = vsub.s32 0, %v1677
      %v1679 = vrot.slane %v1674, %v1678
      %v1681 = vadd.f32 %v1666, %v1679
      %v1682 = vadd.f32 %v1667, %v1679
      %v1683 = vadd.f32 %v1668, %v1679
      %v1684 = vadd.f32 %v1669, %v1679
      %v1685 = vadd.f32 %v1670, %v1679
      %v1686 = vadd.f32 %v1671, %v1679
      %v1687 = vadd.f32 %v1672, %v1679
      %v1688 = vadd.f32 %v1673, %v1679
      %v1689 = vmax.f32 %v1681, 0.0
      %v1690 = vmax.f32 %v1682, 0.0
      %v1691 = vmax.f32 %v1683, 0.0
      %v1692 = vmax.f32 %v1684, 0.0
      %v1693 = vmax.f32 %v1685, 0.0
      %v1694 = vmax.f32 %v1686, 0.0
      %v1695 = vmax.f32 %v1687, 0.0
      %v1696 = vmax.f32 %v1688, 0.0
      %1697 = vst [vmem:[%s312 + $0x1] sm:$0xff] %v1689
      %1698 = vst [vmem:[%s312 + $0x11] sm:$0xff] %v1690
      %1699 = vst [vmem:[%s312 + $0x21] sm:$0xff] %v1691
      %1700 = vst [vmem:[%s312 + $0x31] sm:$0xff] %v1692
      %1701 = vst [vmem:[%s312 + $0x41] sm:$0xff] %v1693
      %1702 = vst [vmem:[%s312 + $0x51] sm:$0xff] %v1694
      %1703 = vst [vmem:[%s312 + $0x61] sm:$0xff] %v1695
      %1704 = vst [vmem:[%s312 + $0x71] sm:$0xff] %v1696
      %v1705 = vld [vmem:[#allocation2] sm:$0xff]
      %v1706 = vld [vmem:[#allocation2 + $0x10] sm:$0xff]
      %v1707 = vld [vmem:[#allocation2 + $0x20] sm:$0xff]
      %v1708 = vld [vmem:[#allocation2 + $0x30] sm:$0xff]
      %v1709 = vld [vmem:[#allocation2 + $0x40] sm:$0xff]
      %v1710 = vld [vmem:[#allocation2 + $0x50] sm:$0xff]
      %v1711 = vld [vmem:[#allocation2 + $0x60] sm:$0xff]
      %v1712 = vld [vmem:[#allocation2 + $0x70] sm:$0xff]
      %v1713 = vld [vmem:[%s4] sm:$0xff]
      %v1714 = vld [vmem:[%s4 + $0x8] sm:$0xff]
      %v1715 = vld [vmem:[%s4 + $0x10] sm:$0xff]
      %v1716 = vld [vmem:[%s4 + $0x18] sm:$0xff]
      %v1717 = vld [vmem:[%s4 + $0x20] sm:$0xff]
      %v1718 = vld [vmem:[%s4 + $0x28] sm:$0xff]
      %v1719 = vld [vmem:[%s4 + $0x30] sm:$0xff]
      %v1720 = vld [vmem:[%s4 + $0x38] sm:$0xff]
      %v1721 = vld [vmem:[%s4 + $0x40] sm:$0xff]
      %v1722 = vld [vmem:[%s4 + $0x48] sm:$0xff]
      %v1723 = vld [vmem:[%s4 + $0x50] sm:$0xff]
      %v1724 = vld [vmem:[%s4 + $0x58] sm:$0xff]
      %v1725 = vld [vmem:[%s4 + $0x60] sm:$0xff]
      %v1726 = vld [vmem:[%s4 + $0x68] sm:$0xff]
      %v1727 = vld [vmem:[%s4 + $0x70] sm:$0xff]
      %v1728 = vld [vmem:[%s4 + $0x78] sm:$0xff]
      %v1729 = vld [vmem:[#allocation2 + $0x1] sm:$0xff]
      %v1730 = vld [vmem:[#allocation2 + $0x11] sm:$0xff]
      %v1731 = vld [vmem:[#allocation2 + $0x21] sm:$0xff]
      %v1732 = vld [vmem:[#allocation2 + $0x31] sm:$0xff]
      %v1733 = vld [vmem:[#allocation2 + $0x41] sm:$0xff]
      %v1734 = vld [vmem:[#allocation2 + $0x51] sm:$0xff]
      %v1735 = vld [vmem:[#allocation2 + $0x61] sm:$0xff]
      %v1736 = vld [vmem:[#allocation2 + $0x71] sm:$0xff]
      %s1737 = scalar_lea.vmem %s4, 128
      %v1738 = vld [vmem:[%s1737] sm:$0xff]
      %v1739 = vld [vmem:[%s1737 + $0x8] sm:$0xff]
      %v1740 = vld [vmem:[%s1737 + $0x10] sm:$0xff]
      %v1741 = vld [vmem:[%s1737 + $0x18] sm:$0xff]
      %v1742 = vld [vmem:[%s1737 + $0x20] sm:$0xff]
      %v1743 = vld [vmem:[%s1737 + $0x28] sm:$0xff]
      %v1744 = vld [vmem:[%s1737 + $0x30] sm:$0xff]
      %v1745 = vld [vmem:[%s1737 + $0x38] sm:$0xff]
      %v1746 = vld [vmem:[%s1737 + $0x40] sm:$0xff]
      %v1747 = vld [vmem:[%s1737 + $0x48] sm:$0xff]
      %v1748 = vld [vmem:[%s1737 + $0x50] sm:$0xff]
      %v1749 = vld [vmem:[%s1737 + $0x58] sm:$0xff]
      %v1750 = vld [vmem:[%s1737 + $0x60] sm:$0xff]
      %v1751 = vld [vmem:[%s1737 + $0x68] sm:$0xff]
      %v1752 = vld [vmem:[%s1737 + $0x70] sm:$0xff]
      %v1753 = vld [vmem:[%s1737 + $0x78] sm:$0xff]
      %1754 = vmatprep.subr.mxu0 0.0
      %1755 = vmatpush1.msra.mxu0 %v1753
      %1756 = vmatprep.subr.mxu0 0.0
      %1757 = vmatpush1.msra.mxu0 %v1752
      %1758 = vmatprep.subr.mxu0 0.0
      %1759 = vmatpush1.msra.mxu0 %v1751
      %1760 = vmatprep.subr.mxu0 0.0
      %1761 = vmatpush1.msra.mxu0 %v1750
      %1762 = vmatprep.subr.mxu0 0.0
      %1763 = vmatpush1.msra.mxu0 %v1749
      %1764 = vmatprep.subr.mxu0 0.0
      %1765 = vmatpush1.msra.mxu0 %v1748
      %1766 = vmatprep.subr.mxu0 0.0
      %1767 = vmatpush1.msra.mxu0 %v1747
      %1768 = vmatprep.subr.mxu0 0.0
      %1769 = vmatpush1.msra.mxu0 %v1746
      %1770 = vmatprep.subr.mxu0 0.0
      %1771 = vmatpush1.msra.mxu0 %v1745
      %1772 = vmatprep.subr.mxu0 0.0
      %1773 = vmatpush1.msra.mxu0 %v1744
      %1774 = vmatprep.subr.mxu0 0.0
      %1775 = vmatpush1.msra.mxu0 %v1743
      %1776 = vmatprep.subr.mxu0 0.0
      %1777 = vmatpush1.msra.mxu0 %v1742
      %1778 = vmatprep.subr.mxu0 0.0
      %1779 = vmatpush1.msra.mxu0 %v1741
      %1780 = vmatprep.subr.mxu0 0.0
      %1781 = vmatpush1.msra.mxu0 %v1740
      %1782 = vmatprep.subr.mxu0 0.0
      %1783 = vmatpush1.msra.mxu0 %v1739
      %1784 = vmatprep.subr.mxu0 0.0
      %1785 = vmatpush1.msra.mxu0 %v1738
      %1786 = vmatprep.subr.mxu0 0.0
      %1787 = vmatpush2.msra.mxu0 0.0
      %1788 = vmatprep.subr.mxu0 0.0
      %1789 = vmatpush2.msra.mxu0 0.0
      %1790 = vmatprep.subr.mxu0 0.0
      %1791 = vmatpush2.msra.mxu0 0.0
      %1792 = vmatprep.subr.mxu0 0.0
      %1793 = vmatpush2.msra.mxu0 0.0
      %1794 = vmatprep.subr.mxu0 0.0
      %1795 = vmatpush2.msra.mxu0 0.0
      %1796 = vmatprep.subr.mxu0 0.0
      %1797 = vmatpush2.msra.mxu0 0.0
      %1798 = vmatprep.subr.mxu0 0.0
      %1799 = vmatpush2.msra.mxu0 0.0
      %1800 = vmatprep.subr.mxu0 0.0
      %1801 = vmatpush2.msra.mxu0 0.0
      %1802 = vmatprep.subr.mxu0 0.0
      %1803 = vmatpush2.msra.mxu0 0.0
      %1804 = vmatprep.subr.mxu0 0.0
      %1805 = vmatpush2.msra.mxu0 0.0
      %1806 = vmatprep.subr.mxu0 0.0
      %1807 = vmatpush2.msra.mxu0 0.0
      %1808 = vmatprep.subr.mxu0 0.0
      %1809 = vmatpush2.msra.mxu0 0.0
      %1810 = vmatprep.subr.mxu0 0.0
      %1811 = vmatpush2.msra.mxu0 0.0
      %1812 = vmatprep.subr.mxu0 0.0
      %1813 = vmatpush2.msra.mxu0 0.0
      %1814 = vmatprep.subr.mxu0 0.0
      %1815 = vmatpush2.msra.mxu0 0.0
      %1816 = vmatprep.subr.mxu0 0.0
      %1817 = vmatpush2.msra.mxu0 0.0
      %1818 = vmatprep.mubr.f32.mxu0 0.0
      %1819 = vmatmul.mubr.f32.gmra.mxu0 %v1729
      %v1820 = vpop.f32.mrf.mxu0
      %v1821 = vadd.f32 0.0, %v1820
      %v1822 = vpop.f32.mrf.mxu0
      %1823 = vmatprep.mubr.f32.mxu0 0.0
      %1824 = vmatmul.mubr.f32.gmra.mxu0 %v1730
      %v1825 = vpop.f32.mrf.mxu0
      %v1826 = vadd.f32 0.0, %v1825
      %v1827 = vpop.f32.mrf.mxu0
      %1828 = vmatprep.mubr.f32.mxu0 0.0
      %1829 = vmatmul.mubr.f32.gmra.mxu0 %v1731
      %v1830 = vpop.f32.mrf.mxu0
      %v1831 = vadd.f32 0.0, %v1830
      %v1832 = vpop.f32.mrf.mxu0
      %1833 = vmatprep.mubr.f32.mxu0 0.0
      %1834 = vmatmul.mubr.f32.gmra.mxu0 %v1732
      %v1835 = vpop.f32.mrf.mxu0
      %v1836 = vadd.f32 0.0, %v1835
      %v1837 = vpop.f32.mrf.mxu0
      %1838 = vmatprep.mubr.f32.mxu0 0.0
      %1839 = vmatmul.mubr.f32.gmra.mxu0 %v1733
      %v1840 = vpop.f32.mrf.mxu0
      %v1841 = vadd.f32 0.0, %v1840
      %v1842 = vpop.f32.mrf.mxu0
      %1843 = vmatprep.mubr.f32.mxu0 0.0
      %1844 = vmatmul.mubr.f32.gmra.mxu0 %v1734
      %v1845 = vpop.f32.mrf.mxu0
      %v1846 = vadd.f32 0.0, %v1845
      %v1847 = vpop.f32.mrf.mxu0
      %1848 = vmatprep.mubr.f32.mxu0 0.0
      %1849 = vmatmul.mubr.f32.gmra.mxu0 %v1735
      %v1850 = vpop.f32.mrf.mxu0
      %v1851 = vadd.f32 0.0, %v1850
      %v1852 = vpop.f32.mrf.mxu0
      %1853 = vmatprep.mubr.f32.mxu0 0.0
      %1854 = vmatmul.mubr.f32.gmra.mxu0 %v1736
      %v1855 = vpop.f32.mrf.mxu0
      %v1856 = vadd.f32 0.0, %v1855
      %v1857 = vpop.f32.mrf.mxu0
      %1858 = vdwg.mxu0
      %1859 = vmatprep.subr.mxu0 0.0
      %1860 = vmatpush1.msra.mxu0 %v1728
      %1861 = vmatprep.subr.mxu0 0.0
      %1862 = vmatpush1.msra.mxu0 %v1727
      %1863 = vmatprep.subr.mxu0 0.0
      %1864 = vmatpush1.msra.mxu0 %v1726
      %1865 = vmatprep.subr.mxu0 0.0
      %1866 = vmatpush1.msra.mxu0 %v1725
      %1867 = vmatprep.subr.mxu0 0.0
      %1868 = vmatpush1.msra.mxu0 %v1724
      %1869 = vmatprep.subr.mxu0 0.0
      %1870 = vmatpush1.msra.mxu0 %v1723
      %1871 = vmatprep.subr.mxu0 0.0
      %1872 = vmatpush1.msra.mxu0 %v1722
      %1873 = vmatprep.subr.mxu0 0.0
      %1874 = vmatpush1.msra.mxu0 %v1721
      %1875 = vmatprep.subr.mxu0 0.0
      %1876 = vmatpush1.msra.mxu0 %v1720
      %1877 = vmatprep.subr.mxu0 0.0
      %1878 = vmatpush1.msra.mxu0 %v1719
      %1879 = vmatprep.subr.mxu0 0.0
      %1880 = vmatpush1.msra.mxu0 %v1718
      %1881 = vmatprep.subr.mxu0 0.0
      %1882 = vmatpush1.msra.mxu0 %v1717
      %1883 = vmatprep.subr.mxu0 0.0
      %1884 = vmatpush1.msra.mxu0 %v1716
      %1885 = vmatprep.subr.mxu0 0.0
      %1886 = vmatpush1.msra.mxu0 %v1715
      %1887 = vmatprep.subr.mxu0 0.0
      %1888 = vmatpush1.msra.mxu0 %v1714
      %1889 = vmatprep.subr.mxu0 0.0
      %1890 = vmatpush1.msra.mxu0 %v1713
      %1891 = vmatprep.subr.mxu0 0.0
      %1892 = vmatpush2.msra.mxu0 0.0
      %1893 = vmatprep.subr.mxu0 0.0
      %1894 = vmatpush2.msra.mxu0 0.0
      %1895 = vmatprep.subr.mxu0 0.0
      %1896 = vmatpush2.msra.mxu0 0.0
      %1897 = vmatprep.subr.mxu0 0.0
      %1898 = vmatpush2.msra.mxu0 0.0
      %1899 = vmatprep.subr.mxu0 0.0
      %1900 = vmatpush2.msra.mxu0 0.0
      %1901 = vmatprep.subr.mxu0 0.0
      %1902 = vmatpush2.msra.mxu0 0.0
      %1903 = vmatprep.subr.mxu0 0.0
      %1904 = vmatpush2.msra.mxu0 0.0
      %1905 = vmatprep.subr.mxu0 0.0
      %1906 = vmatpush2.msra.mxu0 0.0
      %1907 = vmatprep.subr.mxu0 0.0
      %1908 = vmatpush2.msra.mxu0 0.0
      %1909 = vmatprep.subr.mxu0 0.0
      %1910 = vmatpush2.msra.mxu0 0.0
      %1911 = vmatprep.subr.mxu0 0.0
      %1912 = vmatpush2.msra.mxu0 0.0
      %1913 = vmatprep.subr.mxu0 0.0
      %1914 = vmatpush2.msra.mxu0 0.0
      %1915 = vmatprep.subr.mxu0 0.0
      %1916 = vmatpush2.msra.mxu0 0.0
      %1917 = vmatprep.subr.mxu0 0.0
      %1918 = vmatpush2.msra.mxu0 0.0
      %1919 = vmatprep.subr.mxu0 0.0
      %1920 = vmatpush2.msra.mxu0 0.0
      %1921 = vmatprep.subr.mxu0 0.0
      %1922 = vmatpush2.msra.mxu0 0.0
      %1923 = vmatprep.mubr.f32.mxu0 0.0
      %1924 = vmatmul.mubr.f32.gmra.mxu0 %v1705
      %v1925 = vpop.f32.mrf.mxu0
      %v1926 = vadd.f32 %v1821, %v1925
      %v1927 = vpop.f32.mrf.mxu0
      %1928 = vmatprep.mubr.f32.mxu0 0.0
      %1929 = vmatmul.mubr.f32.gmra.mxu0 %v1706
      %v1930 = vpop.f32.mrf.mxu0
      %v1931 = vadd.f32 %v1826, %v1930
      %v1932 = vpop.f32.mrf.mxu0
      %1933 = vmatprep.mubr.f32.mxu0 0.0
      %1934 = vmatmul.mubr.f32.gmra.mxu0 %v1707
      %v1935 = vpop.f32.mrf.mxu0
      %v1936 = vadd.f32 %v1831, %v1935
      %v1937 = vpop.f32.mrf.mxu0
      %1938 = vmatprep.mubr.f32.mxu0 0.0
      %1939 = vmatmul.mubr.f32.gmra.mxu0 %v1708
      %v1940 = vpop.f32.mrf.mxu0
      %v1941 = vadd.f32 %v1836, %v1940
      %v1942 = vpop.f32.mrf.mxu0
      %1943 = vmatprep.mubr.f32.mxu0 0.0
      %1944 = vmatmul.mubr.f32.gmra.mxu0 %v1709
      %v1945 = vpop.f32.mrf.mxu0
      %v1946 = vadd.f32 %v1841, %v1945
      %v1947 = vpop.f32.mrf.mxu0
      %1948 = vmatprep.mubr.f32.mxu0 0.0
      %1949 = vmatmul.mubr.f32.gmra.mxu0 %v1710
      %v1950 = vpop.f32.mrf.mxu0
      %v1951 = vadd.f32 %v1846, %v1950
      %v1952 = vpop.f32.mrf.mxu0
      %1953 = vmatprep.mubr.f32.mxu0 0.0
      %1954 = vmatmul.mubr.f32.gmra.mxu0 %v1711
      %v1955 = vpop.f32.mrf.mxu0
      %v1956 = vadd.f32 %v1851, %v1955
      %v1957 = vpop.f32.mrf.mxu0
      %1958 = vmatprep.mubr.f32.mxu0 0.0
      %1959 = vmatmul.mubr.f32.gmra.mxu0 %v1712
      %v1960 = vpop.f32.mrf.mxu0
      %v1961 = vadd.f32 %v1856, %v1960
      %v1962 = vpop.f32.mrf.mxu0
      %1963 = vdwg.mxu0
      %v1964 = vld [vmem:[#allocation2 + $0x2] sm:$0xff]
      %v1965 = vld [vmem:[#allocation2 + $0x12] sm:$0xff]
      %v1966 = vld [vmem:[#allocation2 + $0x22] sm:$0xff]
      %v1967 = vld [vmem:[#allocation2 + $0x32] sm:$0xff]
      %v1968 = vld [vmem:[#allocation2 + $0x42] sm:$0xff]
      %v1969 = vld [vmem:[#allocation2 + $0x52] sm:$0xff]
      %v1970 = vld [vmem:[#allocation2 + $0x62] sm:$0xff]
      %v1971 = vld [vmem:[#allocation2 + $0x72] sm:$0xff]
      %s1972 = scalar_lea.vmem %s4, 256
      %v1973 = vld [vmem:[%s1972] sm:$0xff]
      %v1974 = vld [vmem:[%s1972 + $0x8] sm:$0xff]
      %v1975 = vld [vmem:[%s1972 + $0x10] sm:$0xff]
      %v1976 = vld [vmem:[%s1972 + $0x18] sm:$0xff]
      %v1977 = vld [vmem:[%s1972 + $0x20] sm:$0xff]
      %v1978 = vld [vmem:[%s1972 + $0x28] sm:$0xff]
      %v1979 = vld [vmem:[%s1972 + $0x30] sm:$0xff]
      %v1980 = vld [vmem:[%s1972 + $0x38] sm:$0xff]
      %v1981 = vld [vmem:[%s1972 + $0x40] sm:$0xff]
      %v1982 = vld [vmem:[%s1972 + $0x48] sm:$0xff]
      %v1983 = vld [vmem:[%s1972 + $0x50] sm:$0xff]
      %v1984 = vld [vmem:[%s1972 + $0x58] sm:$0xff]
      %v1985 = vld [vmem:[%s1972 + $0x60] sm:$0xff]
      %v1986 = vld [vmem:[%s1972 + $0x68] sm:$0xff]
      %v1987 = vld [vmem:[%s1972 + $0x70] sm:$0xff]
      %v1988 = vld [vmem:[%s1972 + $0x78] sm:$0xff]
      %1989 = vmatprep.subr.mxu0 0.0
      %1990 = vmatpush1.msra.mxu0 %v1988
      %1991 = vmatprep.subr.mxu0 0.0
      %1992 = vmatpush1.msra.mxu0 %v1987
      %1993 = vmatprep.subr.mxu0 0.0
      %1994 = vmatpush1.msra.mxu0 %v1986
      %1995 = vmatprep.subr.mxu0 0.0
      %1996 = vmatpush1.msra.mxu0 %v1985
      %1997 = vmatprep.subr.mxu0 0.0
      %1998 = vmatpush1.msra.mxu0 %v1984
      %1999 = vmatprep.subr.mxu0 0.0
      %2000 = vmatpush1.msra.mxu0 %v1983
      %2001 = vmatprep.subr.mxu0 0.0
      %2002 = vmatpush1.msra.mxu0 %v1982
      %2003 = vmatprep.subr.mxu0 0.0
      %2004 = vmatpush1.msra.mxu0 %v1981
      %2005 = vmatprep.subr.mxu0 0.0
      %2006 = vmatpush1.msra.mxu0 %v1980
      %2007 = vmatprep.subr.mxu0 0.0
      %2008 = vmatpush1.msra.mxu0 %v1979
      %2009 = vmatprep.subr.mxu0 0.0
      %2010 = vmatpush1.msra.mxu0 %v1978
      %2011 = vmatprep.subr.mxu0 0.0
      %2012 = vmatpush1.msra.mxu0 %v1977
      %2013 = vmatprep.subr.mxu0 0.0
      %2014 = vmatpush1.msra.mxu0 %v1976
      %2015 = vmatprep.subr.mxu0 0.0
      %2016 = vmatpush1.msra.mxu0 %v1975
      %2017 = vmatprep.subr.mxu0 0.0
      %2018 = vmatpush1.msra.mxu0 %v1974
      %2019 = vmatprep.subr.mxu0 0.0
      %2020 = vmatpush1.msra.mxu0 %v1973
      %2021 = vmatprep.subr.mxu0 0.0
      %2022 = vmatpush2.msra.mxu0 0.0
      %2023 = vmatprep.subr.mxu0 0.0
      %2024 = vmatpush2.msra.mxu0 0.0
      %2025 = vmatprep.subr.mxu0 0.0
      %2026 = vmatpush2.msra.mxu0 0.0
      %2027 = vmatprep.subr.mxu0 0.0
      %2028 = vmatpush2.msra.mxu0 0.0
      %2029 = vmatprep.subr.mxu0 0.0
      %2030 = vmatpush2.msra.mxu0 0.0
      %2031 = vmatprep.subr.mxu0 0.0
      %2032 = vmatpush2.msra.mxu0 0.0
      %2033 = vmatprep.subr.mxu0 0.0
      %2034 = vmatpush2.msra.mxu0 0.0
      %2035 = vmatprep.subr.mxu0 0.0
      %2036 = vmatpush2.msra.mxu0 0.0
      %2037 = vmatprep.subr.mxu0 0.0
      %2038 = vmatpush2.msra.mxu0 0.0
      %2039 = vmatprep.subr.mxu0 0.0
      %2040 = vmatpush2.msra.mxu0 0.0
      %2041 = vmatprep.subr.mxu0 0.0
      %2042 = vmatpush2.msra.mxu0 0.0
      %2043 = vmatprep.subr.mxu0 0.0
      %2044 = vmatpush2.msra.mxu0 0.0
      %2045 = vmatprep.subr.mxu0 0.0
      %2046 = vmatpush2.msra.mxu0 0.0
      %2047 = vmatprep.subr.mxu0 0.0
      %2048 = vmatpush2.msra.mxu0 0.0
      %2049 = vmatprep.subr.mxu0 0.0
      %2050 = vmatpush2.msra.mxu0 0.0
      %2051 = vmatprep.subr.mxu0 0.0
      %2052 = vmatpush2.msra.mxu0 0.0
      %2053 = vmatprep.mubr.f32.mxu0 0.0
      %2054 = vmatmul.mubr.f32.gmra.mxu0 %v1964
      %v2055 = vpop.f32.mrf.mxu0
      %v2056 = vadd.f32 0.0, %v2055
      %v2057 = vpop.f32.mrf.mxu0
      %2058 = vmatprep.mubr.f32.mxu0 0.0
      %2059 = vmatmul.mubr.f32.gmra.mxu0 %v1965
      %v2060 = vpop.f32.mrf.mxu0
      %v2061 = vadd.f32 0.0, %v2060
      %v2062 = vpop.f32.mrf.mxu0
      %2063 = vmatprep.mubr.f32.mxu0 0.0
      %2064 = vmatmul.mubr.f32.gmra.mxu0 %v1966
      %v2065 = vpop.f32.mrf.mxu0
      %v2066 = vadd.f32 0.0, %v2065
      %v2067 = vpop.f32.mrf.mxu0
      %2068 = vmatprep.mubr.f32.mxu0 0.0
      %2069 = vmatmul.mubr.f32.gmra.mxu0 %v1967
      %v2070 = vpop.f32.mrf.mxu0
      %v2071 = vadd.f32 0.0, %v2070
      %v2072 = vpop.f32.mrf.mxu0
      %2073 = vmatprep.mubr.f32.mxu0 0.0
      %2074 = vmatmul.mubr.f32.gmra.mxu0 %v1968
      %v2075 = vpop.f32.mrf.mxu0
      %v2076 = vadd.f32 0.0, %v2075
      %v2077 = vpop.f32.mrf.mxu0
      %2078 = vmatprep.mubr.f32.mxu0 0.0
      %2079 = vmatmul.mubr.f32.gmra.mxu0 %v1969
      %v2080 = vpop.f32.mrf.mxu0
      %v2081 = vadd.f32 0.0, %v2080
      %v2082 = vpop.f32.mrf.mxu0
      %2083 = vmatprep.mubr.f32.mxu0 0.0
      %2084 = vmatmul.mubr.f32.gmra.mxu0 %v1970
      %v2085 = vpop.f32.mrf.mxu0
      %v2086 = vadd.f32 0.0, %v2085
      %v2087 = vpop.f32.mrf.mxu0
      %2088 = vmatprep.mubr.f32.mxu0 0.0
      %2089 = vmatmul.mubr.f32.gmra.mxu0 %v1971
      %v2090 = vpop.f32.mrf.mxu0
      %v2091 = vadd.f32 0.0, %v2090
      %v2092 = vpop.f32.mrf.mxu0
      %2093 = vdwg.mxu0
      %v2094 = vadd.f32 %v1926, %v2056
      %v2095 = vadd.f32 %v1931, %v2061
      %v2096 = vadd.f32 %v1936, %v2066
      %v2097 = vadd.f32 %v1941, %v2071
      %v2098 = vadd.f32 %v1946, %v2076
      %v2099 = vadd.f32 %v1951, %v2081
      %v2100 = vadd.f32 %v1956, %v2086
      %v2101 = vadd.f32 %v1961, %v2091
      %v2102 = vld [vmem:[%s312] sm:$0xff]
      %v2103 = vld [vmem:[%s312 + $0x10] sm:$0xff]
      %v2104 = vld [vmem:[%s312 + $0x20] sm:$0xff]
      %v2105 = vld [vmem:[%s312 + $0x30] sm:$0xff]
      %v2106 = vld [vmem:[%s312 + $0x40] sm:$0xff]
      %v2107 = vld [vmem:[%s312 + $0x50] sm:$0xff]
      %v2108 = vld [vmem:[%s312 + $0x60] sm:$0xff]
      %v2109 = vld [vmem:[%s312 + $0x70] sm:$0xff]
      %s2110 = scalar_lea.vmem %s4, 384
      %v2111 = vld [vmem:[%s2110] sm:$0xff]
      %v2112 = vld [vmem:[%s2110 + $0x8] sm:$0xff]
      %v2113 = vld [vmem:[%s2110 + $0x10] sm:$0xff]
      %v2114 = vld [vmem:[%s2110 + $0x18] sm:$0xff]
      %v2115 = vld [vmem:[%s2110 + $0x20] sm:$0xff]
      %v2116 = vld [vmem:[%s2110 + $0x28] sm:$0xff]
      %v2117 = vld [vmem:[%s2110 + $0x30] sm:$0xff]
      %v2118 = vld [vmem:[%s2110 + $0x38] sm:$0xff]
      %v2119 = vld [vmem:[%s2110 + $0x40] sm:$0xff]
      %v2120 = vld [vmem:[%s2110 + $0x48] sm:$0xff]
      %v2121 = vld [vmem:[%s2110 + $0x50] sm:$0xff]
      %v2122 = vld [vmem:[%s2110 + $0x58] sm:$0xff]
      %v2123 = vld [vmem:[%s2110 + $0x60] sm:$0xff]
      %v2124 = vld [vmem:[%s2110 + $0x68] sm:$0xff]
      %v2125 = vld [vmem:[%s2110 + $0x70] sm:$0xff]
      %v2126 = vld [vmem:[%s2110 + $0x78] sm:$0xff]
      %2127 = vmatprep.subr.mxu0 0.0
      %2128 = vmatpush1.msra.mxu0 %v2126
      %2129 = vmatprep.subr.mxu0 0.0
      %2130 = vmatpush1.msra.mxu0 %v2125
      %2131 = vmatprep.subr.mxu0 0.0
      %2132 = vmatpush1.msra.mxu0 %v2124
      %2133 = vmatprep.subr.mxu0 0.0
      %2134 = vmatpush1.msra.mxu0 %v2123
      %2135 = vmatprep.subr.mxu0 0.0
      %2136 = vmatpush1.msra.mxu0 %v2122
      %2137 = vmatprep.subr.mxu0 0.0
      %2138 = vmatpush1.msra.mxu0 %v2121
      %2139 = vmatprep.subr.mxu0 0.0
      %2140 = vmatpush1.msra.mxu0 %v2120
      %2141 = vmatprep.subr.mxu0 0.0
      %2142 = vmatpush1.msra.mxu0 %v2119
      %2143 = vmatprep.subr.mxu0 0.0
      %2144 = vmatpush1.msra.mxu0 %v2118
      %2145 = vmatprep.subr.mxu0 0.0
      %2146 = vmatpush1.msra.mxu0 %v2117
      %2147 = vmatprep.subr.mxu0 0.0
      %2148 = vmatpush1.msra.mxu0 %v2116
      %2149 = vmatprep.subr.mxu0 0.0
      %2150 = vmatpush1.msra.mxu0 %v2115
      %2151 = vmatprep.subr.mxu0 0.0
      %2152 = vmatpush1.msra.mxu0 %v2114
      %2153 = vmatprep.subr.mxu0 0.0
      %2154 = vmatpush1.msra.mxu0 %v2113
      %2155 = vmatprep.subr.mxu0 0.0
      %2156 = vmatpush1.msra.mxu0 %v2112
      %2157 = vmatprep.subr.mxu0 0.0
      %2158 = vmatpush1.msra.mxu0 %v2111
      %2159 = vmatprep.subr.mxu0 0.0
      %2160 = vmatpush2.msra.mxu0 0.0
      %2161 = vmatprep.subr.mxu0 0.0
      %2162 = vmatpush2.msra.mxu0 0.0
      %2163 = vmatprep.subr.mxu0 0.0
      %2164 = vmatpush2.msra.mxu0 0.0
      %2165 = vmatprep.subr.mxu0 0.0
      %2166 = vmatpush2.msra.mxu0 0.0
      %2167 = vmatprep.subr.mxu0 0.0
      %2168 = vmatpush2.msra.mxu0 0.0
      %2169 = vmatprep.subr.mxu0 0.0
      %2170 = vmatpush2.msra.mxu0 0.0
      %2171 = vmatprep.subr.mxu0 0.0
      %2172 = vmatpush2.msra.mxu0 0.0
      %2173 = vmatprep.subr.mxu0 0.0
      %2174 = vmatpush2.msra.mxu0 0.0
      %2175 = vmatprep.subr.mxu0 0.0
      %2176 = vmatpush2.msra.mxu0 0.0
      %2177 = vmatprep.subr.mxu0 0.0
      %2178 = vmatpush2.msra.mxu0 0.0
      %2179 = vmatprep.subr.mxu0 0.0
      %2180 = vmatpush2.msra.mxu0 0.0
      %2181 = vmatprep.subr.mxu0 0.0
      %2182 = vmatpush2.msra.mxu0 0.0
      %2183 = vmatprep.subr.mxu0 0.0
      %2184 = vmatpush2.msra.mxu0 0.0
      %2185 = vmatprep.subr.mxu0 0.0
      %2186 = vmatpush2.msra.mxu0 0.0
      %2187 = vmatprep.subr.mxu0 0.0
      %2188 = vmatpush2.msra.mxu0 0.0
      %2189 = vmatprep.subr.mxu0 0.0
      %2190 = vmatpush2.msra.mxu0 0.0
      %2191 = vmatprep.mubr.f32.mxu0 0.0
      %2192 = vmatmul.mubr.f32.gmra.mxu0 %v2102
      %v2193 = vpop.f32.mrf.mxu0
      %v2194 = vadd.f32 0.0, %v2193
      %v2195 = vpop.f32.mrf.mxu0
      %2196 = vmatprep.mubr.f32.mxu0 0.0
      %2197 = vmatmul.mubr.f32.gmra.mxu0 %v2103
      %v2198 = vpop.f32.mrf.mxu0
      %v2199 = vadd.f32 0.0, %v2198
      %v2200 = vpop.f32.mrf.mxu0
      %2201 = vmatprep.mubr.f32.mxu0 0.0
      %2202 = vmatmul.mubr.f32.gmra.mxu0 %v2104
      %v2203 = vpop.f32.mrf.mxu0
      %v2204 = vadd.f32 0.0, %v2203
      %v2205 = vpop.f32.mrf.mxu0
      %2206 = vmatprep.mubr.f32.mxu0 0.0
      %2207 = vmatmul.mubr.f32.gmra.mxu0 %v2105
      %v2208 = vpop.f32.mrf.mxu0
      %v2209 = vadd.f32 0.0, %v2208
      %v2210 = vpop.f32.mrf.mxu0
      %2211 = vmatprep.mubr.f32.mxu0 0.0
      %2212 = vmatmul.mubr.f32.gmra.mxu0 %v2106
      %v2213 = vpop.f32.mrf.mxu0
      %v2214 = vadd.f32 0.0, %v2213
      %v2215 = vpop.f32.mrf.mxu0
      %2216 = vmatprep.mubr.f32.mxu0 0.0
      %2217 = vmatmul.mubr.f32.gmra.mxu0 %v2107
      %v2218 = vpop.f32.mrf.mxu0
      %v2219 = vadd.f32 0.0, %v2218
      %v2220 = vpop.f32.mrf.mxu0
      %2221 = vmatprep.mubr.f32.mxu0 0.0
      %2222 = vmatmul.mubr.f32.gmra.mxu0 %v2108
      %v2223 = vpop.f32.mrf.mxu0
      %v2224 = vadd.f32 0.0, %v2223
      %v2225 = vpop.f32.mrf.mxu0
      %2226 = vmatprep.mubr.f32.mxu0 0.0
      %2227 = vmatmul.mubr.f32.gmra.mxu0 %v2109
      %v2228 = vpop.f32.mrf.mxu0
      %v2229 = vadd.f32 0.0, %v2228
      %v2230 = vpop.f32.mrf.mxu0
      %2231 = vdwg.mxu0
      %v2232 = vadd.f32 %v2094, %v2194
      %v2233 = vadd.f32 %v2095, %v2199
      %v2234 = vadd.f32 %v2096, %v2204
      %v2235 = vadd.f32 %v2097, %v2209
      %v2236 = vadd.f32 %v2098, %v2214
      %v2237 = vadd.f32 %v2099, %v2219
      %v2238 = vadd.f32 %v2100, %v2224
      %v2239 = vadd.f32 %v2101, %v2229
      %v2240 = vld [vmem:[%s312 + $0x1] sm:$0xff]
      %v2241 = vld [vmem:[%s312 + $0x11] sm:$0xff]
      %v2242 = vld [vmem:[%s312 + $0x21] sm:$0xff]
      %v2243 = vld [vmem:[%s312 + $0x31] sm:$0xff]
      %v2244 = vld [vmem:[%s312 + $0x41] sm:$0xff]
      %v2245 = vld [vmem:[%s312 + $0x51] sm:$0xff]
      %v2246 = vld [vmem:[%s312 + $0x61] sm:$0xff]
      %v2247 = vld [vmem:[%s312 + $0x71] sm:$0xff]
      %s2248 = scalar_lea.vmem %s4, 512
      %v2249 = vld [vmem:[%s2248] sm:$0xff]
      %v2250 = vld [vmem:[%s2248 + $0x8] sm:$0xff]
      %v2251 = vld [vmem:[%s2248 + $0x10] sm:$0xff]
      %v2252 = vld [vmem:[%s2248 + $0x18] sm:$0xff]
      %v2253 = vld [vmem:[%s2248 + $0x20] sm:$0xff]
      %v2254 = vld [vmem:[%s2248 + $0x28] sm:$0xff]
      %v2255 = vld [vmem:[%s2248 + $0x30] sm:$0xff]
      %v2256 = vld [vmem:[%s2248 + $0x38] sm:$0xff]
      %v2257 = vld [vmem:[%s2248 + $0x40] sm:$0xff]
      %v2258 = vld [vmem:[%s2248 + $0x48] sm:$0xff]
      %v2259 = vld [vmem:[%s2248 + $0x50] sm:$0xff]
      %v2260 = vld [vmem:[%s2248 + $0x58] sm:$0xff]
      %v2261 = vld [vmem:[%s2248 + $0x60] sm:$0xff]
      %v2262 = vld [vmem:[%s2248 + $0x68] sm:$0xff]
      %v2263 = vld [vmem:[%s2248 + $0x70] sm:$0xff]
      %v2264 = vld [vmem:[%s2248 + $0x78] sm:$0xff]
      %2265 = vmatprep.subr.mxu0 0.0
      %2266 = vmatpush1.msra.mxu0 %v2264
      %2267 = vmatprep.subr.mxu0 0.0
      %2268 = vmatpush1.msra.mxu0 %v2263
      %2269 = vmatprep.subr.mxu0 0.0
      %2270 = vmatpush1.msra.mxu0 %v2262
      %2271 = vmatprep.subr.mxu0 0.0
      %2272 = vmatpush1.msra.mxu0 %v2261
      %2273 = vmatprep.subr.mxu0 0.0
      %2274 = vmatpush1.msra.mxu0 %v2260
      %2275 = vmatprep.subr.mxu0 0.0
      %2276 = vmatpush1.msra.mxu0 %v2259
      %2277 = vmatprep.subr.mxu0 0.0
      %2278 = vmatpush1.msra.mxu0 %v2258
      %2279 = vmatprep.subr.mxu0 0.0
      %2280 = vmatpush1.msra.mxu0 %v2257
      %2281 = vmatprep.subr.mxu0 0.0
      %2282 = vmatpush1.msra.mxu0 %v2256
      %2283 = vmatprep.subr.mxu0 0.0
      %2284 = vmatpush1.msra.mxu0 %v2255
      %2285 = vmatprep.subr.mxu0 0.0
      %2286 = vmatpush1.msra.mxu0 %v2254
      %2287 = vmatprep.subr.mxu0 0.0
      %2288 = vmatpush1.msra.mxu0 %v2253
      %2289 = vmatprep.subr.mxu0 0.0
      %2290 = vmatpush1.msra.mxu0 %v2252
      %2291 = vmatprep.subr.mxu0 0.0
      %2292 = vmatpush1.msra.mxu0 %v2251
      %2293 = vmatprep.subr.mxu0 0.0
      %2294 = vmatpush1.msra.mxu0 %v2250
      %2295 = vmatprep.subr.mxu0 0.0
      %2296 = vmatpush1.msra.mxu0 %v2249
      %2297 = vmatprep.subr.mxu0 0.0
      %2298 = vmatpush2.msra.mxu0 0.0
      %2299 = vmatprep.subr.mxu0 0.0
      %2300 = vmatpush2.msra.mxu0 0.0
      %2301 = vmatprep.subr.mxu0 0.0
      %2302 = vmatpush2.msra.mxu0 0.0
      %2303 = vmatprep.subr.mxu0 0.0
      %2304 = vmatpush2.msra.mxu0 0.0
      %2305 = vmatprep.subr.mxu0 0.0
      %2306 = vmatpush2.msra.mxu0 0.0
      %2307 = vmatprep.subr.mxu0 0.0
      %2308 = vmatpush2.msra.mxu0 0.0
      %2309 = vmatprep.subr.mxu0 0.0
      %2310 = vmatpush2.msra.mxu0 0.0
      %2311 = vmatprep.subr.mxu0 0.0
      %2312 = vmatpush2.msra.mxu0 0.0
      %2313 = vmatprep.subr.mxu0 0.0
      %2314 = vmatpush2.msra.mxu0 0.0
      %2315 = vmatprep.subr.mxu0 0.0
      %2316 = vmatpush2.msra.mxu0 0.0
      %2317 = vmatprep.subr.mxu0 0.0
      %2318 = vmatpush2.msra.mxu0 0.0
      %2319 = vmatprep.subr.mxu0 0.0
      %2320 = vmatpush2.msra.mxu0 0.0
      %2321 = vmatprep.subr.mxu0 0.0
      %2322 = vmatpush2.msra.mxu0 0.0
      %2323 = vmatprep.subr.mxu0 0.0
      %2324 = vmatpush2.msra.mxu0 0.0
      %2325 = vmatprep.subr.mxu0 0.0
      %2326 = vmatpush2.msra.mxu0 0.0
      %2327 = vmatprep.subr.mxu0 0.0
      %2328 = vmatpush2.msra.mxu0 0.0
      %2329 = vmatprep.mubr.f32.mxu0 0.0
      %2330 = vmatmul.mubr.f32.gmra.mxu0 %v2240
      %v2331 = vpop.f32.mrf.mxu0
      %v2332 = vadd.f32 0.0, %v2331
      %v2333 = vpop.f32.mrf.mxu0
      %2334 = vmatprep.mubr.f32.mxu0 0.0
      %2335 = vmatmul.mubr.f32.gmra.mxu0 %v2241
      %v2336 = vpop.f32.mrf.mxu0
      %v2337 = vadd.f32 0.0, %v2336
      %v2338 = vpop.f32.mrf.mxu0
      %2339 = vmatprep.mubr.f32.mxu0 0.0
      %2340 = vmatmul.mubr.f32.gmra.mxu0 %v2242
      %v2341 = vpop.f32.mrf.mxu0
      %v2342 = vadd.f32 0.0, %v2341
      %v2343 = vpop.f32.mrf.mxu0
      %2344 = vmatprep.mubr.f32.mxu0 0.0
      %2345 = vmatmul.mubr.f32.gmra.mxu0 %v2243
      %v2346 = vpop.f32.mrf.mxu0
      %v2347 = vadd.f32 0.0, %v2346
      %v2348 = vpop.f32.mrf.mxu0
      %2349 = vmatprep.mubr.f32.mxu0 0.0
      %2350 = vmatmul.mubr.f32.gmra.mxu0 %v2244
      %v2351 = vpop.f32.mrf.mxu0
      %v2352 = vadd.f32 0.0, %v2351
      %v2353 = vpop.f32.mrf.mxu0
      %2354 = vmatprep.mubr.f32.mxu0 0.0
      %2355 = vmatmul.mubr.f32.gmra.mxu0 %v2245
      %v2356 = vpop.f32.mrf.mxu0
      %v2357 = vadd.f32 0.0, %v2356
      %v2358 = vpop.f32.mrf.mxu0
      %2359 = vmatprep.mubr.f32.mxu0 0.0
      %2360 = vmatmul.mubr.f32.gmra.mxu0 %v2246
      %v2361 = vpop.f32.mrf.mxu0
      %v2362 = vadd.f32 0.0, %v2361
      %v2363 = vpop.f32.mrf.mxu0
      %2364 = vmatprep.mubr.f32.mxu0 0.0
      %2365 = vmatmul.mubr.f32.gmra.mxu0 %v2247
      %v2366 = vpop.f32.mrf.mxu0
      %v2367 = vadd.f32 0.0, %v2366
      %v2368 = vpop.f32.mrf.mxu0
      %2369 = vdwg.mxu0
      %v2370 = vadd.f32 %v2232, %v2332
      %v2371 = vadd.f32 %v2233, %v2337
      %v2372 = vadd.f32 %v2234, %v2342
      %v2373 = vadd.f32 %v2235, %v2347
      %v2374 = vadd.f32 %v2236, %v2352
      %v2375 = vadd.f32 %v2237, %v2357
      %v2376 = vadd.f32 %v2238, %v2362
      %v2377 = vadd.f32 %v2239, %v2367
      %v2378 = vld [vmem:[%s312 + $0x2] sm:$0xff]
      %v2379 = vld [vmem:[%s312 + $0x12] sm:$0xff]
      %v2380 = vld [vmem:[%s312 + $0x22] sm:$0xff]
      %v2381 = vld [vmem:[%s312 + $0x32] sm:$0xff]
      %v2382 = vld [vmem:[%s312 + $0x42] sm:$0xff]
      %v2383 = vld [vmem:[%s312 + $0x52] sm:$0xff]
      %v2384 = vld [vmem:[%s312 + $0x62] sm:$0xff]
      %v2385 = vld [vmem:[%s312 + $0x72] sm:$0xff]
      %s2386 = scalar_lea.vmem %s4, 640
      %v2387 = vld [vmem:[%s2386] sm:$0xff]
      %v2388 = vld [vmem:[%s2386 + $0x8] sm:$0xff]
      %v2389 = vld [vmem:[%s2386 + $0x10] sm:$0xff]
      %v2390 = vld [vmem:[%s2386 + $0x18] sm:$0xff]
      %v2391 = vld [vmem:[%s2386 + $0x20] sm:$0xff]
      %v2392 = vld [vmem:[%s2386 + $0x28] sm:$0xff]
      %v2393 = vld [vmem:[%s2386 + $0x30] sm:$0xff]
      %v2394 = vld [vmem:[%s2386 + $0x38] sm:$0xff]
      %v2395 = vld [vmem:[%s2386 + $0x40] sm:$0xff]
      %v2396 = vld [vmem:[%s2386 + $0x48] sm:$0xff]
      %v2397 = vld [vmem:[%s2386 + $0x50] sm:$0xff]
      %v2398 = vld [vmem:[%s2386 + $0x58] sm:$0xff]
      %v2399 = vld [vmem:[%s2386 + $0x60] sm:$0xff]
      %v2400 = vld [vmem:[%s2386 + $0x68] sm:$0xff]
      %v2401 = vld [vmem:[%s2386 + $0x70] sm:$0xff]
      %v2402 = vld [vmem:[%s2386 + $0x78] sm:$0xff]
      %2403 = vmatprep.subr.mxu0 0.0
      %2404 = vmatpush1.msra.mxu0 %v2402
      %2405 = vmatprep.subr.mxu0 0.0
      %2406 = vmatpush1.msra.mxu0 %v2401
      %2407 = vmatprep.subr.mxu0 0.0
      %2408 = vmatpush1.msra.mxu0 %v2400
      %2409 = vmatprep.subr.mxu0 0.0
      %2410 = vmatpush1.msra.mxu0 %v2399
      %2411 = vmatprep.subr.mxu0 0.0
      %2412 = vmatpush1.msra.mxu0 %v2398
      %2413 = vmatprep.subr.mxu0 0.0
      %2414 = vmatpush1.msra.mxu0 %v2397
      %2415 = vmatprep.subr.mxu0 0.0
      %2416 = vmatpush1.msra.mxu0 %v2396
      %2417 = vmatprep.subr.mxu0 0.0
      %2418 = vmatpush1.msra.mxu0 %v2395
      %2419 = vmatprep.subr.mxu0 0.0
      %2420 = vmatpush1.msra.mxu0 %v2394
      %2421 = vmatprep.subr.mxu0 0.0
      %2422 = vmatpush1.msra.mxu0 %v2393
      %2423 = vmatprep.subr.mxu0 0.0
      %2424 = vmatpush1.msra.mxu0 %v2392
      %2425 = vmatprep.subr.mxu0 0.0
      %2426 = vmatpush1.msra.mxu0 %v2391
      %2427 = vmatprep.subr.mxu0 0.0
      %2428 = vmatpush1.msra.mxu0 %v2390
      %2429 = vmatprep.subr.mxu0 0.0
      %2430 = vmatpush1.msra.mxu0 %v2389
      %2431 = vmatprep.subr.mxu0 0.0
      %2432 = vmatpush1.msra.mxu0 %v2388
      %2433 = vmatprep.subr.mxu0 0.0
      %2434 = vmatpush1.msra.mxu0 %v2387
      %2435 = vmatprep.subr.mxu0 0.0
      %2436 = vmatpush2.msra.mxu0 0.0
      %2437 = vmatprep.subr.mxu0 0.0
      %2438 = vmatpush2.msra.mxu0 0.0
      %2439 = vmatprep.subr.mxu0 0.0
      %2440 = vmatpush2.msra.mxu0 0.0
      %2441 = vmatprep.subr.mxu0 0.0
      %2442 = vmatpush2.msra.mxu0 0.0
      %2443 = vmatprep.subr.mxu0 0.0
      %2444 = vmatpush2.msra.mxu0 0.0
      %2445 = vmatprep.subr.mxu0 0.0
      %2446 = vmatpush2.msra.mxu0 0.0
      %2447 = vmatprep.subr.mxu0 0.0
      %2448 = vmatpush2.msra.mxu0 0.0
      %2449 = vmatprep.subr.mxu0 0.0
      %2450 = vmatpush2.msra.mxu0 0.0
      %2451 = vmatprep.subr.mxu0 0.0
      %2452 = vmatpush2.msra.mxu0 0.0
      %2453 = vmatprep.subr.mxu0 0.0
      %2454 = vmatpush2.msra.mxu0 0.0
      %2455 = vmatprep.subr.mxu0 0.0
      %2456 = vmatpush2.msra.mxu0 0.0
      %2457 = vmatprep.subr.mxu0 0.0
      %2458 = vmatpush2.msra.mxu0 0.0
      %2459 = vmatprep.subr.mxu0 0.0
      %2460 = vmatpush2.msra.mxu0 0.0
      %2461 = vmatprep.subr.mxu0 0.0
      %2462 = vmatpush2.msra.mxu0 0.0
      %2463 = vmatprep.subr.mxu0 0.0
      %2464 = vmatpush2.msra.mxu0 0.0
      %2465 = vmatprep.subr.mxu0 0.0
      %2466 = vmatpush2.msra.mxu0 0.0
      %2467 = vmatprep.mubr.f32.mxu0 0.0
      %2468 = vmatmul.mubr.f32.gmra.mxu0 %v2378
      %v2469 = vpop.f32.mrf.mxu0
      %v2470 = vadd.f32 0.0, %v2469
      %v2471 = vpop.f32.mrf.mxu0
      %2472 = vmatprep.mubr.f32.mxu0 0.0
      %2473 = vmatmul.mubr.f32.gmra.mxu0 %v2379
      %v2474 = vpop.f32.mrf.mxu0
      %v2475 = vadd.f32 0.0, %v2474
      %v2476 = vpop.f32.mrf.mxu0
      %2477 = vmatprep.mubr.f32.mxu0 0.0
      %2478 = vmatmul.mubr.f32.gmra.mxu0 %v2380
      %v2479 = vpop.f32.mrf.mxu0
      %v2480 = vadd.f32 0.0, %v2479
      %v2481 = vpop.f32.mrf.mxu0
      %2482 = vmatprep.mubr.f32.mxu0 0.0
      %2483 = vmatmul.mubr.f32.gmra.mxu0 %v2381
      %v2484 = vpop.f32.mrf.mxu0
      %v2485 = vadd.f32 0.0, %v2484
      %v2486 = vpop.f32.mrf.mxu0
      %2487 = vmatprep.mubr.f32.mxu0 0.0
      %2488 = vmatmul.mubr.f32.gmra.mxu0 %v2382
      %v2489 = vpop.f32.mrf.mxu0
      %v2490 = vadd.f32 0.0, %v2489
      %v2491 = vpop.f32.mrf.mxu0
      %2492 = vmatprep.mubr.f32.mxu0 0.0
      %2493 = vmatmul.mubr.f32.gmra.mxu0 %v2383
      %v2494 = vpop.f32.mrf.mxu0
      %v2495 = vadd.f32 0.0, %v2494
      %v2496 = vpop.f32.mrf.mxu0
      %2497 = vmatprep.mubr.f32.mxu0 0.0
      %2498 = vmatmul.mubr.f32.gmra.mxu0 %v2384
      %v2499 = vpop.f32.mrf.mxu0
      %v2500 = vadd.f32 0.0, %v2499
      %v2501 = vpop.f32.mrf.mxu0
      %2502 = vmatprep.mubr.f32.mxu0 0.0
      %2503 = vmatmul.mubr.f32.gmra.mxu0 %v2385
      %v2504 = vpop.f32.mrf.mxu0
      %v2505 = vadd.f32 0.0, %v2504
      %v2506 = vpop.f32.mrf.mxu0
      %2507 = vdwg.mxu0
      %v2508 = vadd.f32 %v2370, %v2470
      %v2509 = vadd.f32 %v2371, %v2475
      %v2510 = vadd.f32 %v2372, %v2480
      %v2511 = vadd.f32 %v2373, %v2485
      %v2512 = vadd.f32 %v2374, %v2490
      %v2513 = vadd.f32 %v2375, %v2495
      %v2514 = vadd.f32 %v2376, %v2500
      %v2515 = vadd.f32 %v2377, %v2505
      %v2516 = vld [vmem:[%s1132] sm:$0xff]
      %v2517 = vld [vmem:[%s1132 + $0x10] sm:$0xff]
      %v2518 = vld [vmem:[%s1132 + $0x20] sm:$0xff]
      %v2519 = vld [vmem:[%s1132 + $0x30] sm:$0xff]
      %v2520 = vld [vmem:[%s1132 + $0x40] sm:$0xff]
      %v2521 = vld [vmem:[%s1132 + $0x50] sm:$0xff]
      %v2522 = vld [vmem:[%s1132 + $0x60] sm:$0xff]
      %v2523 = vld [vmem:[%s1132 + $0x70] sm:$0xff]
      %s2524 = scalar_lea.vmem %s4, 768
      %v2525 = vld [vmem:[%s2524] sm:$0xff]
      %v2526 = vld [vmem:[%s2524 + $0x8] sm:$0xff]
      %v2527 = vld [vmem:[%s2524 + $0x10] sm:$0xff]
      %v2528 = vld [vmem:[%s2524 + $0x18] sm:$0xff]
      %v2529 = vld [vmem:[%s2524 + $0x20] sm:$0xff]
      %v2530 = vld [vmem:[%s2524 + $0x28] sm:$0xff]
      %v2531 = vld [vmem:[%s2524 + $0x30] sm:$0xff]
      %v2532 = vld [vmem:[%s2524 + $0x38] sm:$0xff]
      %v2533 = vld [vmem:[%s2524 + $0x40] sm:$0xff]
      %v2534 = vld [vmem:[%s2524 + $0x48] sm:$0xff]
      %v2535 = vld [vmem:[%s2524 + $0x50] sm:$0xff]
      %v2536 = vld [vmem:[%s2524 + $0x58] sm:$0xff]
      %v2537 = vld [vmem:[%s2524 + $0x60] sm:$0xff]
      %v2538 = vld [vmem:[%s2524 + $0x68] sm:$0xff]
      %v2539 = vld [vmem:[%s2524 + $0x70] sm:$0xff]
      %v2540 = vld [vmem:[%s2524 + $0x78] sm:$0xff]
      %2541 = vmatprep.subr.mxu0 0.0
      %2542 = vmatpush1.msra.mxu0 %v2540
      %2543 = vmatprep.subr.mxu0 0.0
      %2544 = vmatpush1.msra.mxu0 %v2539
      %2545 = vmatprep.subr.mxu0 0.0
      %2546 = vmatpush1.msra.mxu0 %v2538
      %2547 = vmatprep.subr.mxu0 0.0
      %2548 = vmatpush1.msra.mxu0 %v2537
      %2549 = vmatprep.subr.mxu0 0.0
      %2550 = vmatpush1.msra.mxu0 %v2536
      %2551 = vmatprep.subr.mxu0 0.0
      %2552 = vmatpush1.msra.mxu0 %v2535
      %2553 = vmatprep.subr.mxu0 0.0
      %2554 = vmatpush1.msra.mxu0 %v2534
      %2555 = vmatprep.subr.mxu0 0.0
      %2556 = vmatpush1.msra.mxu0 %v2533
      %2557 = vmatprep.subr.mxu0 0.0
      %2558 = vmatpush1.msra.mxu0 %v2532
      %2559 = vmatprep.subr.mxu0 0.0
      %2560 = vmatpush1.msra.mxu0 %v2531
      %2561 = vmatprep.subr.mxu0 0.0
      %2562 = vmatpush1.msra.mxu0 %v2530
      %2563 = vmatprep.subr.mxu0 0.0
      %2564 = vmatpush1.msra.mxu0 %v2529
      %2565 = vmatprep.subr.mxu0 0.0
      %2566 = vmatpush1.msra.mxu0 %v2528
      %2567 = vmatprep.subr.mxu0 0.0
      %2568 = vmatpush1.msra.mxu0 %v2527
      %2569 = vmatprep.subr.mxu0 0.0
      %2570 = vmatpush1.msra.mxu0 %v2526
      %2571 = vmatprep.subr.mxu0 0.0
      %2572 = vmatpush1.msra.mxu0 %v2525
      %2573 = vmatprep.subr.mxu0 0.0
      %2574 = vmatpush2.msra.mxu0 0.0
      %2575 = vmatprep.subr.mxu0 0.0
      %2576 = vmatpush2.msra.mxu0 0.0
      %2577 = vmatprep.subr.mxu0 0.0
      %2578 = vmatpush2.msra.mxu0 0.0
      %2579 = vmatprep.subr.mxu0 0.0
      %2580 = vmatpush2.msra.mxu0 0.0
      %2581 = vmatprep.subr.mxu0 0.0
      %2582 = vmatpush2.msra.mxu0 0.0
      %2583 = vmatprep.subr.mxu0 0.0
      %2584 = vmatpush2.msra.mxu0 0.0
      %2585 = vmatprep.subr.mxu0 0.0
      %2586 = vmatpush2.msra.mxu0 0.0
      %2587 = vmatprep.subr.mxu0 0.0
      %2588 = vmatpush2.msra.mxu0 0.0
      %2589 = vmatprep.subr.mxu0 0.0
      %2590 = vmatpush2.msra.mxu0 0.0
      %2591 = vmatprep.subr.mxu0 0.0
      %2592 = vmatpush2.msra.mxu0 0.0
      %2593 = vmatprep.subr.mxu0 0.0
      %2594 = vmatpush2.msra.mxu0 0.0
      %2595 = vmatprep.subr.mxu0 0.0
      %2596 = vmatpush2.msra.mxu0 0.0
      %2597 = vmatprep.subr.mxu0 0.0
      %2598 = vmatpush2.msra.mxu0 0.0
      %2599 = vmatprep.subr.mxu0 0.0
      %2600 = vmatpush2.msra.mxu0 0.0
      %2601 = vmatprep.subr.mxu0 0.0
      %2602 = vmatpush2.msra.mxu0 0.0
      %2603 = vmatprep.subr.mxu0 0.0
      %2604 = vmatpush2.msra.mxu0 0.0
      %2605 = vmatprep.mubr.f32.mxu0 0.0
      %2606 = vmatmul.mubr.f32.gmra.mxu0 %v2516
      %v2607 = vpop.f32.mrf.mxu0
      %v2608 = vadd.f32 0.0, %v2607
      %v2609 = vpop.f32.mrf.mxu0
      %2610 = vmatprep.mubr.f32.mxu0 0.0
      %2611 = vmatmul.mubr.f32.gmra.mxu0 %v2517
      %v2612 = vpop.f32.mrf.mxu0
      %v2613 = vadd.f32 0.0, %v2612
      %v2614 = vpop.f32.mrf.mxu0
      %2615 = vmatprep.mubr.f32.mxu0 0.0
      %2616 = vmatmul.mubr.f32.gmra.mxu0 %v2518
      %v2617 = vpop.f32.mrf.mxu0
      %v2618 = vadd.f32 0.0, %v2617
      %v2619 = vpop.f32.mrf.mxu0
      %2620 = vmatprep.mubr.f32.mxu0 0.0
      %2621 = vmatmul.mubr.f32.gmra.mxu0 %v2519
      %v2622 = vpop.f32.mrf.mxu0
      %v2623 = vadd.f32 0.0, %v2622
      %v2624 = vpop.f32.mrf.mxu0
      %2625 = vmatprep.mubr.f32.mxu0 0.0
      %2626 = vmatmul.mubr.f32.gmra.mxu0 %v2520
      %v2627 = vpop.f32.mrf.mxu0
      %v2628 = vadd.f32 0.0, %v2627
      %v2629 = vpop.f32.mrf.mxu0
      %2630 = vmatprep.mubr.f32.mxu0 0.0
      %2631 = vmatmul.mubr.f32.gmra.mxu0 %v2521
      %v2632 = vpop.f32.mrf.mxu0
      %v2633 = vadd.f32 0.0, %v2632
      %v2634 = vpop.f32.mrf.mxu0
      %2635 = vmatprep.mubr.f32.mxu0 0.0
      %2636 = vmatmul.mubr.f32.gmra.mxu0 %v2522
      %v2637 = vpop.f32.mrf.mxu0
      %v2638 = vadd.f32 0.0, %v2637
      %v2639 = vpop.f32.mrf.mxu0
      %2640 = vmatprep.mubr.f32.mxu0 0.0
      %2641 = vmatmul.mubr.f32.gmra.mxu0 %v2523
      %v2642 = vpop.f32.mrf.mxu0
      %v2643 = vadd.f32 0.0, %v2642
      %v2644 = vpop.f32.mrf.mxu0
      %2645 = vdwg.mxu0
      %v2646 = vadd.f32 %v2508, %v2608
      %v2647 = vadd.f32 %v2509, %v2613
      %v2648 = vadd.f32 %v2510, %v2618
      %v2649 = vadd.f32 %v2511, %v2623
      %v2650 = vadd.f32 %v2512, %v2628
      %v2651 = vadd.f32 %v2513, %v2633
      %v2652 = vadd.f32 %v2514, %v2638
      %v2653 = vadd.f32 %v2515, %v2643
      %v2654 = vld [vmem:[%s1132 + $0x1] sm:$0xff]
      %v2655 = vld [vmem:[%s1132 + $0x11] sm:$0xff]
      %v2656 = vld [vmem:[%s1132 + $0x21] sm:$0xff]
      %v2657 = vld [vmem:[%s1132 + $0x31] sm:$0xff]
      %v2658 = vld [vmem:[%s1132 + $0x41] sm:$0xff]
      %v2659 = vld [vmem:[%s1132 + $0x51] sm:$0xff]
      %v2660 = vld [vmem:[%s1132 + $0x61] sm:$0xff]
      %v2661 = vld [vmem:[%s1132 + $0x71] sm:$0xff]
      %s2662 = scalar_lea.vmem %s4, 896
      %v2663 = vld [vmem:[%s2662] sm:$0xff]
      %v2664 = vld [vmem:[%s2662 + $0x8] sm:$0xff]
      %v2665 = vld [vmem:[%s2662 + $0x10] sm:$0xff]
      %v2666 = vld [vmem:[%s2662 + $0x18] sm:$0xff]
      %v2667 = vld [vmem:[%s2662 + $0x20] sm:$0xff]
      %v2668 = vld [vmem:[%s2662 + $0x28] sm:$0xff]
      %v2669 = vld [vmem:[%s2662 + $0x30] sm:$0xff]
      %v2670 = vld [vmem:[%s2662 + $0x38] sm:$0xff]
      %v2671 = vld [vmem:[%s2662 + $0x40] sm:$0xff]
      %v2672 = vld [vmem:[%s2662 + $0x48] sm:$0xff]
      %v2673 = vld [vmem:[%s2662 + $0x50] sm:$0xff]
      %v2674 = vld [vmem:[%s2662 + $0x58] sm:$0xff]
      %v2675 = vld [vmem:[%s2662 + $0x60] sm:$0xff]
      %v2676 = vld [vmem:[%s2662 + $0x68] sm:$0xff]
      %v2677 = vld [vmem:[%s2662 + $0x70] sm:$0xff]
      %v2678 = vld [vmem:[%s2662 + $0x78] sm:$0xff]
      %2679 = vmatprep.subr.mxu0 0.0
      %2680 = vmatpush1.msra.mxu0 %v2678
      %2681 = vmatprep.subr.mxu0 0.0
      %2682 = vmatpush1.msra.mxu0 %v2677
      %2683 = vmatprep.subr.mxu0 0.0
      %2684 = vmatpush1.msra.mxu0 %v2676
      %2685 = vmatprep.subr.mxu0 0.0
      %2686 = vmatpush1.msra.mxu0 %v2675
      %2687 = vmatprep.subr.mxu0 0.0
      %2688 = vmatpush1.msra.mxu0 %v2674
      %2689 = vmatprep.subr.mxu0 0.0
      %2690 = vmatpush1.msra.mxu0 %v2673
      %2691 = vmatprep.subr.mxu0 0.0
      %2692 = vmatpush1.msra.mxu0 %v2672
      %2693 = vmatprep.subr.mxu0 0.0
      %2694 = vmatpush1.msra.mxu0 %v2671
      %2695 = vmatprep.subr.mxu0 0.0
      %2696 = vmatpush1.msra.mxu0 %v2670
      %2697 = vmatprep.subr.mxu0 0.0
      %2698 = vmatpush1.msra.mxu0 %v2669
      %2699 = vmatprep.subr.mxu0 0.0
      %2700 = vmatpush1.msra.mxu0 %v2668
      %2701 = vmatprep.subr.mxu0 0.0
      %2702 = vmatpush1.msra.mxu0 %v2667
      %2703 = vmatprep.subr.mxu0 0.0
      %2704 = vmatpush1.msra.mxu0 %v2666
      %2705 = vmatprep.subr.mxu0 0.0
      %2706 = vmatpush1.msra.mxu0 %v2665
      %2707 = vmatprep.subr.mxu0 0.0
      %2708 = vmatpush1.msra.mxu0 %v2664
      %2709 = vmatprep.subr.mxu0 0.0
      %2710 = vmatpush1.msra.mxu0 %v2663
      %2711 = vmatprep.subr.mxu0 0.0
      %2712 = vmatpush2.msra.mxu0 0.0
      %2713 = vmatprep.subr.mxu0 0.0
      %2714 = vmatpush2.msra.mxu0 0.0
      %2715 = vmatprep.subr.mxu0 0.0
      %2716 = vmatpush2.msra.mxu0 0.0
      %2717 = vmatprep.subr.mxu0 0.0
      %2718 = vmatpush2.msra.mxu0 0.0
      %2719 = vmatprep.subr.mxu0 0.0
      %2720 = vmatpush2.msra.mxu0 0.0
      %2721 = vmatprep.subr.mxu0 0.0
      %2722 = vmatpush2.msra.mxu0 0.0
      %2723 = vmatprep.subr.mxu0 0.0
      %2724 = vmatpush2.msra.mxu0 0.0
      %2725 = vmatprep.subr.mxu0 0.0
      %2726 = vmatpush2.msra.mxu0 0.0
      %2727 = vmatprep.subr.mxu0 0.0
      %2728 = vmatpush2.msra.mxu0 0.0
      %2729 = vmatprep.subr.mxu0 0.0
      %2730 = vmatpush2.msra.mxu0 0.0
      %2731 = vmatprep.subr.mxu0 0.0
      %2732 = vmatpush2.msra.mxu0 0.0
      %2733 = vmatprep.subr.mxu0 0.0
      %2734 = vmatpush2.msra.mxu0 0.0
      %2735 = vmatprep.subr.mxu0 0.0
      %2736 = vmatpush2.msra.mxu0 0.0
      %2737 = vmatprep.subr.mxu0 0.0
      %2738 = vmatpush2.msra.mxu0 0.0
      %2739 = vmatprep.subr.mxu0 0.0
      %2740 = vmatpush2.msra.mxu0 0.0
      %2741 = vmatprep.subr.mxu0 0.0
      %2742 = vmatpush2.msra.mxu0 0.0
      %2743 = vmatprep.mubr.f32.mxu0 0.0
      %2744 = vmatmul.mubr.f32.gmra.mxu0 %v2654
      %v2745 = vpop.f32.mrf.mxu0
      %v2746 = vadd.f32 0.0, %v2745
      %v2747 = vpop.f32.mrf.mxu0
      %2748 = vmatprep.mubr.f32.mxu0 0.0
      %2749 = vmatmul.mubr.f32.gmra.mxu0 %v2655
      %v2750 = vpop.f32.mrf.mxu0
      %v2751 = vadd.f32 0.0, %v2750
      %v2752 = vpop.f32.mrf.mxu0
      %2753 = vmatprep.mubr.f32.mxu0 0.0
      %2754 = vmatmul.mubr.f32.gmra.mxu0 %v2656
      %v2755 = vpop.f32.mrf.mxu0
      %v2756 = vadd.f32 0.0, %v2755
      %v2757 = vpop.f32.mrf.mxu0
      %2758 = vmatprep.mubr.f32.mxu0 0.0
      %2759 = vmatmul.mubr.f32.gmra.mxu0 %v2657
      %v2760 = vpop.f32.mrf.mxu0
      %v2761 = vadd.f32 0.0, %v2760
      %v2762 = vpop.f32.mrf.mxu0
      %2763 = vmatprep.mubr.f32.mxu0 0.0
      %2764 = vmatmul.mubr.f32.gmra.mxu0 %v2658
      %v2765 = vpop.f32.mrf.mxu0
      %v2766 = vadd.f32 0.0, %v2765
      %v2767 = vpop.f32.mrf.mxu0
      %2768 = vmatprep.mubr.f32.mxu0 0.0
      %2769 = vmatmul.mubr.f32.gmra.mxu0 %v2659
      %v2770 = vpop.f32.mrf.mxu0
      %v2771 = vadd.f32 0.0, %v2770
      %v2772 = vpop.f32.mrf.mxu0
      %2773 = vmatprep.mubr.f32.mxu0 0.0
      %2774 = vmatmul.mubr.f32.gmra.mxu0 %v2660
      %v2775 = vpop.f32.mrf.mxu0
      %v2776 = vadd.f32 0.0, %v2775
      %v2777 = vpop.f32.mrf.mxu0
      %2778 = vmatprep.mubr.f32.mxu0 0.0
      %2779 = vmatmul.mubr.f32.gmra.mxu0 %v2661
      %v2780 = vpop.f32.mrf.mxu0
      %v2781 = vadd.f32 0.0, %v2780
      %v2782 = vpop.f32.mrf.mxu0
      %2783 = vdwg.mxu0
      %v2784 = vadd.f32 %v2646, %v2746
      %v2785 = vadd.f32 %v2647, %v2751
      %v2786 = vadd.f32 %v2648, %v2756
      %v2787 = vadd.f32 %v2649, %v2761
      %v2788 = vadd.f32 %v2650, %v2766
      %v2789 = vadd.f32 %v2651, %v2771
      %v2790 = vadd.f32 %v2652, %v2776
      %v2791 = vadd.f32 %v2653, %v2781
      %v2792 = vld [vmem:[%s1132 + $0x2] sm:$0xff]
      %v2793 = vld [vmem:[%s1132 + $0x12] sm:$0xff]
      %v2794 = vld [vmem:[%s1132 + $0x22] sm:$0xff]
      %v2795 = vld [vmem:[%s1132 + $0x32] sm:$0xff]
      %v2796 = vld [vmem:[%s1132 + $0x42] sm:$0xff]
      %v2797 = vld [vmem:[%s1132 + $0x52] sm:$0xff]
      %v2798 = vld [vmem:[%s1132 + $0x62] sm:$0xff]
      %v2799 = vld [vmem:[%s1132 + $0x72] sm:$0xff]
      %s2800 = scalar_lea.vmem %s4, 1024
      %v2801 = vld [vmem:[%s2800] sm:$0xff]
      %v2802 = vld [vmem:[%s2800 + $0x8] sm:$0xff]
      %v2803 = vld [vmem:[%s2800 + $0x10] sm:$0xff]
      %v2804 = vld [vmem:[%s2800 + $0x18] sm:$0xff]
      %v2805 = vld [vmem:[%s2800 + $0x20] sm:$0xff]
      %v2806 = vld [vmem:[%s2800 + $0x28] sm:$0xff]
      %v2807 = vld [vmem:[%s2800 + $0x30] sm:$0xff]
      %v2808 = vld [vmem:[%s2800 + $0x38] sm:$0xff]
      %v2809 = vld [vmem:[%s2800 + $0x40] sm:$0xff]
      %v2810 = vld [vmem:[%s2800 + $0x48] sm:$0xff]
      %v2811 = vld [vmem:[%s2800 + $0x50] sm:$0xff]
      %v2812 = vld [vmem:[%s2800 + $0x58] sm:$0xff]
      %v2813 = vld [vmem:[%s2800 + $0x60] sm:$0xff]
      %v2814 = vld [vmem:[%s2800 + $0x68] sm:$0xff]
      %v2815 = vld [vmem:[%s2800 + $0x70] sm:$0xff]
      %v2816 = vld [vmem:[%s2800 + $0x78] sm:$0xff]
      %2817 = vmatprep.subr.mxu0 0.0
      %2818 = vmatpush1.msra.mxu0 %v2816
      %2819 = vmatprep.subr.mxu0 0.0
      %2820 = vmatpush1.msra.mxu0 %v2815
      %2821 = vmatprep.subr.mxu0 0.0
      %2822 = vmatpush1.msra.mxu0 %v2814
      %2823 = vmatprep.subr.mxu0 0.0
      %2824 = vmatpush1.msra.mxu0 %v2813
      %2825 = vmatprep.subr.mxu0 0.0
      %2826 = vmatpush1.msra.mxu0 %v2812
      %2827 = vmatprep.subr.mxu0 0.0
      %2828 = vmatpush1.msra.mxu0 %v2811
      %2829 = vmatprep.subr.mxu0 0.0
      %2830 = vmatpush1.msra.mxu0 %v2810
      %2831 = vmatprep.subr.mxu0 0.0
      %2832 = vmatpush1.msra.mxu0 %v2809
      %2833 = vmatprep.subr.mxu0 0.0
      %2834 = vmatpush1.msra.mxu0 %v2808
      %2835 = vmatprep.subr.mxu0 0.0
      %2836 = vmatpush1.msra.mxu0 %v2807
      %2837 = vmatprep.subr.mxu0 0.0
      %2838 = vmatpush1.msra.mxu0 %v2806
      %2839 = vmatprep.subr.mxu0 0.0
      %2840 = vmatpush1.msra.mxu0 %v2805
      %2841 = vmatprep.subr.mxu0 0.0
      %2842 = vmatpush1.msra.mxu0 %v2804
      %2843 = vmatprep.subr.mxu0 0.0
      %2844 = vmatpush1.msra.mxu0 %v2803
      %2845 = vmatprep.subr.mxu0 0.0
      %2846 = vmatpush1.msra.mxu0 %v2802
      %2847 = vmatprep.subr.mxu0 0.0
      %2848 = vmatpush1.msra.mxu0 %v2801
      %2849 = vmatprep.subr.mxu0 0.0
      %2850 = vmatpush2.msra.mxu0 0.0
      %2851 = vmatprep.subr.mxu0 0.0
      %2852 = vmatpush2.msra.mxu0 0.0
      %2853 = vmatprep.subr.mxu0 0.0
      %2854 = vmatpush2.msra.mxu0 0.0
      %2855 = vmatprep.subr.mxu0 0.0
      %2856 = vmatpush2.msra.mxu0 0.0
      %2857 = vmatprep.subr.mxu0 0.0
      %2858 = vmatpush2.msra.mxu0 0.0
      %2859 = vmatprep.subr.mxu0 0.0
      %2860 = vmatpush2.msra.mxu0 0.0
      %2861 = vmatprep.subr.mxu0 0.0
      %2862 = vmatpush2.msra.mxu0 0.0
      %2863 = vmatprep.subr.mxu0 0.0
      %2864 = vmatpush2.msra.mxu0 0.0
      %2865 = vmatprep.subr.mxu0 0.0
      %2866 = vmatpush2.msra.mxu0 0.0
      %2867 = vmatprep.subr.mxu0 0.0
      %2868 = vmatpush2.msra.mxu0 0.0
      %2869 = vmatprep.subr.mxu0 0.0
      %2870 = vmatpush2.msra.mxu0 0.0
      %2871 = vmatprep.subr.mxu0 0.0
      %2872 = vmatpush2.msra.mxu0 0.0
      %2873 = vmatprep.subr.mxu0 0.0
      %2874 = vmatpush2.msra.mxu0 0.0
      %2875 = vmatprep.subr.mxu0 0.0
      %2876 = vmatpush2.msra.mxu0 0.0
      %2877 = vmatprep.subr.mxu0 0.0
      %2878 = vmatpush2.msra.mxu0 0.0
      %2879 = vmatprep.subr.mxu0 0.0
      %2880 = vmatpush2.msra.mxu0 0.0
      %2881 = vmatprep.mubr.f32.mxu0 0.0
      %2882 = vmatmul.mubr.f32.gmra.mxu0 %v2792
      %v2883 = vpop.f32.mrf.mxu0
      %v2884 = vadd.f32 0.0, %v2883
      %v2885 = vpop.f32.mrf.mxu0
      %2886 = vmatprep.mubr.f32.mxu0 0.0
      %2887 = vmatmul.mubr.f32.gmra.mxu0 %v2793
      %v2888 = vpop.f32.mrf.mxu0
      %v2889 = vadd.f32 0.0, %v2888
      %v2890 = vpop.f32.mrf.mxu0
      %2891 = vmatprep.mubr.f32.mxu0 0.0
      %2892 = vmatmul.mubr.f32.gmra.mxu0 %v2794
      %v2893 = vpop.f32.mrf.mxu0
      %v2894 = vadd.f32 0.0, %v2893
      %v2895 = vpop.f32.mrf.mxu0
      %2896 = vmatprep.mubr.f32.mxu0 0.0
      %2897 = vmatmul.mubr.f32.gmra.mxu0 %v2795
      %v2898 = vpop.f32.mrf.mxu0
      %v2899 = vadd.f32 0.0, %v2898
      %v2900 = vpop.f32.mrf.mxu0
      %2901 = vmatprep.mubr.f32.mxu0 0.0
      %2902 = vmatmul.mubr.f32.gmra.mxu0 %v2796
      %v2903 = vpop.f32.mrf.mxu0
      %v2904 = vadd.f32 0.0, %v2903
      %v2905 = vpop.f32.mrf.mxu0
      %2906 = vmatprep.mubr.f32.mxu0 0.0
      %2907 = vmatmul.mubr.f32.gmra.mxu0 %v2797
      %v2908 = vpop.f32.mrf.mxu0
      %v2909 = vadd.f32 0.0, %v2908
      %v2910 = vpop.f32.mrf.mxu0
      %2911 = vmatprep.mubr.f32.mxu0 0.0
      %2912 = vmatmul.mubr.f32.gmra.mxu0 %v2798
      %v2913 = vpop.f32.mrf.mxu0
      %v2914 = vadd.f32 0.0, %v2913
      %v2915 = vpop.f32.mrf.mxu0
      %2916 = vmatprep.mubr.f32.mxu0 0.0
      %2917 = vmatmul.mubr.f32.gmra.mxu0 %v2799
      %v2918 = vpop.f32.mrf.mxu0
      %v2919 = vadd.f32 0.0, %v2918
      %v2920 = vpop.f32.mrf.mxu0
      %2921 = vdwg.mxu0
      %v2922 = vadd.f32 %v2784, %v2884
      %v2923 = vadd.f32 %v2785, %v2889
      %v2924 = vadd.f32 %v2786, %v2894
      %v2925 = vadd.f32 %v2787, %v2899
      %v2926 = vadd.f32 %v2788, %v2904
      %v2927 = vadd.f32 %v2789, %v2909
      %v2928 = vadd.f32 %v2790, %v2914
      %v2929 = vadd.f32 %v2791, %v2919
      %2930 = vadd.xlane.f32.xlu0 %v2922
      %v2931 = vpop.xlane.xlu0 %2930
      %2932 = vadd.xlane.f32.xlu0 %v2923
      %v2933 = vpop.xlane.xlu0 %2932
      %2934 = vadd.xlane.f32.xlu0 %v2924
      %v2935 = vpop.xlane.xlu0 %2934
      %2936 = vadd.xlane.f32.xlu0 %v2925
      %v2937 = vpop.xlane.xlu0 %2936
      %2938 = vadd.xlane.f32.xlu0 %v2926
      %v2939 = vpop.xlane.xlu0 %2938
      %2940 = vadd.xlane.f32.xlu0 %v2927
      %v2941 = vpop.xlane.xlu0 %2940
      %2942 = vadd.xlane.f32.xlu0 %v2928
      %v2943 = vpop.xlane.xlu0 %2942
      %2944 = vadd.xlane.f32.xlu0 %v2929
      %v2945 = vpop.xlane.xlu0 %2944
      %v2946 = vmul.f32 %v2922, %v2922
      %v2947 = vmul.f32 %v2923, %v2923
      %v2948 = vmul.f32 %v2924, %v2924
      %v2949 = vmul.f32 %v2925, %v2925
      %v2950 = vmul.f32 %v2926, %v2926
      %v2951 = vmul.f32 %v2927, %v2927
      %v2952 = vmul.f32 %v2928, %v2928
      %v2953 = vmul.f32 %v2929, %v2929
      %2954 = vadd.xlane.f32.xlu0 %v2946
      %v2955 = vpop.xlane.xlu0 %2954
      %2956 = vadd.xlane.f32.xlu0 %v2947
      %v2957 = vpop.xlane.xlu0 %2956
      %2958 = vadd.xlane.f32.xlu0 %v2948
      %v2959 = vpop.xlane.xlu0 %2958
      %2960 = vadd.xlane.f32.xlu0 %v2949
      %v2961 = vpop.xlane.xlu0 %2960
      %2962 = vadd.xlane.f32.xlu0 %v2950
      %v2963 = vpop.xlane.xlu0 %2962
      %2964 = vadd.xlane.f32.xlu0 %v2951
      %v2965 = vpop.xlane.xlu0 %2964
      %2966 = vadd.xlane.f32.xlu0 %v2952
      %v2967 = vpop.xlane.xlu0 %2966
      %2968 = vadd.xlane.f32.xlu0 %v2953
      %v2969 = vpop.xlane.xlu0 %2968
      %v2970 = vmul.f32 %v2931, 0.125
      %v2971 = vmul.f32 %v2933, 0.125
      %v2972 = vmul.f32 %v2935, 0.125
      %v2973 = vmul.f32 %v2937, 0.125
      %v2974 = vmul.f32 %v2939, 0.125
      %v2975 = vmul.f32 %v2941, 0.125
      %v2976 = vmul.f32 %v2943, 0.125
      %v2977 = vmul.f32 %v2945, 0.125
      %v2978 = vmul.f32 %v2955, 0.125
      %v2979 = vmul.f32 %v2957, 0.125
      %v2980 = vmul.f32 %v2959, 0.125
      %v2981 = vmul.f32 %v2961, 0.125
      %v2982 = vmul.f32 %v2963, 0.125
      %v2983 = vmul.f32 %v2965, 0.125
      %v2984 = vmul.f32 %v2967, 0.125
      %v2985 = vmul.f32 %v2969, 0.125
      %v2986 = vmul.f32 %v2970, %v2970
      %v2987 = vmul.f32 %v2971, %v2971
      %v2988 = vmul.f32 %v2972, %v2972
      %v2989 = vmul.f32 %v2973, %v2973
      %v2990 = vmul.f32 %v2974, %v2974
      %v2991 = vmul.f32 %v2975, %v2975
      %v2992 = vmul.f32 %v2976, %v2976
      %v2993 = vmul.f32 %v2977, %v2977
      %v2994 = vsub.f32 %v2978, %v2986
      %v2995 = vsub.f32 %v2979, %v2987
      %v2996 = vsub.f32 %v2980, %v2988
      %v2997 = vsub.f32 %v2981, %v2989
      %v2998 = vsub.f32 %v2982, %v2990
      %v2999 = vsub.f32 %v2983, %v2991
      %v3000 = vsub.f32 %v2984, %v2992
      %v3001 = vsub.f32 %v2985, %v2993
      %v3002 = vmax.f32 %v2994, 0.0
      %v3003 = vmax.f32 %v2995, 0.0
      %v3004 = vmax.f32 %v2996, 0.0
      %v3005 = vmax.f32 %v2997, 0.0
      %v3006 = vmax.f32 %v2998, 0.0
      %v3007 = vmax.f32 %v2999, 0.0
      %v3008 = vmax.f32 %v3000, 0.0
      %v3009 = vmax.f32 %v3001, 0.0
      %v3010 = vsub.f32 %v2922, %v2970
      %v3011 = vsub.f32 %v2923, %v2971
      %v3012 = vsub.f32 %v2924, %v2972
      %v3013 = vsub.f32 %v2925, %v2973
      %v3014 = vsub.f32 %v2926, %v2974
      %v3015 = vsub.f32 %v2927, %v2975
      %v3016 = vsub.f32 %v2928, %v2976
      %v3017 = vsub.f32 %v2929, %v2977
      %v3018 = vadd.f32 %v3002, 1e-06
      %v3019 = vadd.f32 %v3003, 1e-06
      %v3020 = vadd.f32 %v3004, 1e-06
      %v3021 = vadd.f32 %v3005, 1e-06
      %v3022 = vadd.f32 %v3006, 1e-06
      %v3023 = vadd.f32 %v3007, 1e-06
      %v3024 = vadd.f32 %v3008, 1e-06
      %v3025 = vadd.f32 %v3009, 1e-06
      %v3026 = vrsqrt.pop %v3018
      %v3027 = vrsqrt.pop %v3019
      %v3028 = vrsqrt.pop %v3020
      %v3029 = vrsqrt.pop %v3021
      %v3030 = vrsqrt.pop %v3022
      %v3031 = vrsqrt.pop %v3023
      %v3032 = vrsqrt.pop %v3024
      %v3033 = vrsqrt.pop %v3025
      %v3034 = vmul.f32 %v3010, %v3026
      %v3035 = vmul.f32 %v3011, %v3027
      %v3036 = vmul.f32 %v3012, %v3028
      %v3037 = vmul.f32 %v3013, %v3029
      %v3038 = vmul.f32 %v3014, %v3030
      %v3039 = vmul.f32 %v3015, %v3031
      %v3040 = vmul.f32 %v3016, %v3032
      %v3041 = vmul.f32 %v3017, %v3033
      %v3042 = vld [vmem:[%s5] sm:$0x1]
      %v3044 = vlaneseq
      %v3045 = vshrl.u32 %v3044, 7
      %v3046 = vsub.s32 0, %v3045
      %v3047 = vrot.slane %v3042, %v3046
      %v3049 = vmul.f32 %v3034, %v3047
      %v3050 = vmul.f32 %v3035, %v3047
      %v3051 = vmul.f32 %v3036, %v3047
      %v3052 = vmul.f32 %v3037, %v3047
      %v3053 = vmul.f32 %v3038, %v3047
      %v3054 = vmul.f32 %v3039, %v3047
      %v3055 = vmul.f32 %v3040, %v3047
      %v3056 = vmul.f32 %v3041, %v3047
      %v3057 = vld [vmem:[%s6] sm:$0x1]
      %v3059 = vlaneseq
      %v3060 = vshrl.u32 %v3059, 7
      %v3061 = vsub.s32 0, %v3060
      %v3062 = vrot.slane %v3057, %v3061
      %v3064 = vadd.f32 %v3049, %v3062
      %v3065 = vadd.f32 %v3050, %v3062
      %v3066 = vadd.f32 %v3051, %v3062
      %v3067 = vadd.f32 %v3052, %v3062
      %v3068 = vadd.f32 %v3053, %v3062
      %v3069 = vadd.f32 %v3054, %v3062
      %v3070 = vadd.f32 %v3055, %v3062
      %v3071 = vadd.f32 %v3056, %v3062
      %v3072 = vmax.f32 %v3064, 0.0
      %v3073 = vmax.f32 %v3065, 0.0
      %v3074 = vmax.f32 %v3066, 0.0
      %v3075 = vmax.f32 %v3067, 0.0
      %v3076 = vmax.f32 %v3068, 0.0
      %v3077 = vmax.f32 %v3069, 0.0
      %v3078 = vmax.f32 %v3070, 0.0
      %v3079 = vmax.f32 %v3071, 0.0
      %3080 = vst [vmem:[%s278] sm:$0xff] %v3072
      %3081 = vst [vmem:[%s278 + $0x8] sm:$0xff] %v3073
      %3082 = vst [vmem:[%s278 + $0x10] sm:$0xff] %v3074
      %3083 = vst [vmem:[%s278 + $0x18] sm:$0xff] %v3075
      %3084 = vst [vmem:[%s278 + $0x20] sm:$0xff] %v3076
      %3085 = vst [vmem:[%s278 + $0x28] sm:$0xff] %v3077
      %3086 = vst [vmem:[%s278 + $0x30] sm:$0xff] %v3078
      %3087 = vst [vmem:[%s278 + $0x38] sm:$0xff] %v3079
      %p3088 = scmp.lt.s32.totalorder %s18, 1
      %s3089 = scalar_select %p3088, %s18, 1
      %s3090 = smul.addr %s3089, 8
      %s3091 = smul.addr %s3090, 8
      %s3092 = scalar_lea.vmem %s7, %s3091
      // Predicated region
      $region49: #{down_ln.1} parent=47 // pred_check
        %p3093 = pneg %p188
      $region50: #{down_ln.1} parent=47 // pred_check_branch
        %3095 = sbr.rel (%p3093) target = $region52
      $region51: #{down_ln.1} parent=47 // pred_region
        _
      $region52: #{down_ln.1} parent=47 // pred_fallthru
        _
    $region48: #{down_ln.1} parent=5 // pred_fallthru
      _
    %p3096 = scmp.le.s32.totalorder 2, %s13
    // Predicated region
    $region53: #{down_ln.1} parent=5 // pred_check
      %p3097 = pneg %p3096
    $region54: #{down_ln.1} parent=5 // pred_check_branch
      %3099 = sbr.rel (%p3097) target = $region56
    $region55: #{down_ln.1} parent=5 // pred_region
      %s3100 = ssub.s32 %s13, 2
      // Predicated region
      $region57: #{down_ln.1} parent=55 // pred_check
        %p3101 = pneg %p194
      $region58: #{down_ln.1} parent=55 // pred_check_branch
        %3103 = sbr.rel (%p3101) target = $region60
      $region59: #{down_ln.1} parent=55 // pred_region
        %p3104 = scmp.lt.s32.totalorder %s19, 1
        %s3105 = scalar_select %p3104, %s19, 1
        %s3106 = smul.addr %s3105, 8
        %s3107 = smul.addr %s3106, 8
        %s3108 = scalar_lea.vmem %s7, %s3107
      $region60: #{down_ln.1} parent=55 // pred_fallthru
        _
    $region56: #{down_ln.1} parent=5 // pred_fallthru
      _
  $region6: #{down_ln.1} parent=0 // loop_footer
    %s17 = sadd.s32 1, %s13
  $region7: #{down_ln.1} parent=0 // loop_footer_branch
    %12 = sbr.rel target = $region3
  $region8: #{down_ln.1} parent=0 // loop_exit
    _

</llo_original>
